<compile_context>
chip_gen: v5e
topology: v5e:2x2
jax: 0.10.0
libtpu: 0.0.40
codegen_flags: <defaults>
</compile_context>

<pallas_src>
import math
import numpy as np
import jax
import jax.numpy as jnp
from jax.experimental import pallas as pl
from jax.experimental.pallas import tpu as pltpu

_VMEM_LIMIT = 40 * 1024 * 1024   # actual per-kernel need ~20 MiB; leaves margin on v7x
CP = 8                           # point-channel dim padded 3 -> 8 for clean tiling


def _relu(x):
    return jnp.maximum(x, 0.0)


def _const_spec(arr):
    nd = arr.ndim
    # Constant (grid-invariant) operand.  pipeline_mode=pl.Buffered(1) could be
    # added here to drop the second buffer (~1-2 MiB) if VMEM ever gets tight.
    return pl.BlockSpec(arr.shape, lambda *_, nd=nd: (0,) * nd)


def _choose_tn(n_points, tn):
    """Point-tile size: multiple of 128 (lane-dense pf stores), <= round_down(N,128)."""
    if n_points <= 128:
        return n_points                          # tiny: single full-extent tile
    tn = max(128, (tn // 128) * 128)
    return min(tn, max(128, (n_points // 128) * 128))


def _choose_splits(nt_total, want):
    """N-axis parallel split count (megacore); engage only when it divides evenly."""
    return want if (want > 1 and nt_total % want == 0) else 1


# ---------------------------------------------------------------------------
# Kernel A: input_transform_net
#   3 x (pointwise conv + folded BN + ReLU) + AdaptiveMaxPool1d(1), channel-first.
#   grid = (B, S, NT/S); running max kept in a (1024,1) f32 VMEM scratch and
#   written per split on its last N step.  Layer-3 bias + ReLU are hoisted to
#   the wrapper (commute with the max).  Tail points are masked with -inf.
# ---------------------------------------------------------------------------
def _make_tnet_kernel(n_total, tn, nts):
    def kernel(x_ref, w1t, b1, w2t, b2, w3t, out_ref, acc_ref):
        sp = pl.program_id(1)
        nt = pl.program_id(2)
        x = x_ref[0]                                                  # (8, tn) bf16
        h = _relu(jnp.dot(w1t[...], x, preferred_element_type=jnp.float32) + b1[...])
        h = _relu(jnp.dot(w2t[...], h.astype(jnp.bfloat16),
                          preferred_element_type=jnp.float32) + b2[...])
        h = jnp.dot(w3t[...], h.astype(jnp.bfloat16),
                    preferred_element_type=jnp.float32)               # (1024, tn) f32
        # bias-3 + ReLU applied once in the wrapper after the split-combine.
        lane = jax.lax.broadcasted_iota(jnp.int32, (1, tn), 1)
        mask = ((sp * nts + nt) * tn + lane) < n_total
        tile_max = jnp.max(jnp.where(mask, h, -jnp.inf), axis=1, keepdims=True)

        @pl.when(nt == 0)
        def _():
            acc_ref[...] = tile_max

        @pl.when(nt > 0)
        def _():
            acc_ref[...] = jnp.maximum(acc_ref[...], tile_max)

        @pl.when(nt == pl.num_programs(2) - 1)
        def _():
            out_ref[0, 0] = acc_ref[...]

    return kernel


def run_transform_net(x_pad, tnet_params, tn, n_splits):
    B, cp, N = x_pad.shape
    (w1, b1), (w2, b2), (w3, b3) = tnet_params
    bf = jnp.bfloat16
    oct_ = w3.shape[1]
    w1t = jnp.pad(w1.T, ((0, 0), (0, cp - w1.shape[0]))).astype(bf)   # (64, 8)
    args = (w1t,
            b1.reshape(-1, 1).astype(jnp.float32),
            w2.T.astype(bf),
            b2.reshape(-1, 1).astype(jnp.float32),
            w3.T.astype(bf))

    nt_total = pl.cdiv(N, tn)
    s = _choose_splits(nt_total, n_splits)
    nts = nt_total // s

    raw = pl.pallas_call(
        _make_tnet_kernel(N, tn, nts),
        out_shape=jax.ShapeDtypeStruct((B, s, oct_, 1), jnp.float32),
        grid=(B, s, nts),
        in_specs=[pl.BlockSpec((1, cp, tn), lambda b, sp, n: (b, 0, sp * nts + n))]
                 + [_const_spec(a) for a in args],
        out_specs=pl.BlockSpec((1, 1, oct_, 1), lambda b, sp, n: (b, sp, 0, 0)),
        scratch_shapes=[pltpu.VMEM((oct_, 1), jnp.float32)],
        compiler_params=pltpu.CompilerParams(
            dimension_semantics=("parallel", "parallel", "arbitrary"),
            vmem_limit_bytes=_VMEM_LIMIT),
    )(x_pad, *args)
    # Combine per-split partial maxes, then apply the hoisted bias + ReLU.
    trans_feat = jax.nn.relu(jnp.max(raw[..., 0], axis=1) + b3.reshape(1, -1))
    return trans_feat                                                  # (B, 1024) f32


# ---------------------------------------------------------------------------
# Kernel C: feature_extraction (transform folded into layer 1) + global max.
#   4 x (pointwise conv + folded BN + ReLU); Dropout layers identity (eval).
#   Channel-first: point_features (B, OC, N) is stored directly (lane dim = tn,
#   multiple of 128 -> unmasked stores), no transpose anywhere.
# ---------------------------------------------------------------------------
def _make_feature_kernel(n_total, tn, nts):
    def kernel(x_ref, tw1_ref, b1, w2t, b2, w3t, b3, w4t, b4,
               pf_ref, gf_ref, acc_ref):
        sp = pl.program_id(1)
        nt = pl.program_id(2)
        x = x_ref[0]                                                  # (8, tn) bf16
        tw1 = tw1_ref[0]                                              # (64, 8) bf16 = (T@W1)^T
        h = _relu(jnp.dot(tw1, x, preferred_element_type=jnp.float32) + b1[...])
        # Dropout(0.2): identity in eval mode.
        h = _relu(jnp.dot(w2t[...], h.astype(jnp.bfloat16),
                          preferred_element_type=jnp.float32) + b2[...])
        h = _relu(jnp.dot(w3t[...], h.astype(jnp.bfloat16),
                          preferred_element_type=jnp.float32) + b3[...])
        h = _relu(jnp.dot(w4t[...], h.astype(jnp.bfloat16),
                          preferred_element_type=jnp.float32) + b4[...])   # (OC, tn) f32
        # Channel-first tile: direct store; ragged tail columns are clipped by
        # Pallas at writeback (only the last natural N-block is partial).
        pf_ref[0] = h.astype(pf_ref.dtype)

        lane = jax.lax.broadcasted_iota(jnp.int32, (1, tn), 1)
        mask = ((sp * nts + nt) * tn + lane) < n_total
        tile_max = jnp.max(jnp.where(mask, h, -jnp.inf), axis=1, keepdims=True)

        @pl.when(nt == 0)
        def _():
            acc_ref[...] = tile_max

        @pl.when(nt > 0)
        def _():
            acc_ref[...] = jnp.maximum(acc_ref[...], tile_max)

        @pl.when(nt == pl.num_programs(2) - 1)
        def _():
            gf_ref[0, 0] = acc_ref[...]

    return kernel


def run_feature(x_pad, tw1t, feat_params, tn, n_splits, pf_dtype=jnp.bfloat16):
    B, cp, N = x_pad.shape
    (_, b1), (w2, b2), (w3, b3), (w4, b4) = feat_params
    OC = w4.shape[1]
    H1 = tw1t.shape[1]
    bf = jnp.bfloat16
    args = (b1.reshape(-1, 1).astype(jnp.float32),
            w2.T.astype(bf), b2.reshape(-1, 1).astype(jnp.float32),
            w3.T.astype(bf), b3.reshape(-1, 1).astype(jnp.float32),
            w4.T.astype(bf), b4.reshape(-1, 1).astype(jnp.float32))

    nt_total = pl.cdiv(N, tn)
    s = _choose_splits(nt_total, n_splits)
    nts = nt_total // s

    pf, gf_raw = pl.pallas_call(
        _make_feature_kernel(N, tn, nts),
        out_shape=(jax.ShapeDtypeStruct((B, OC, N), pf_dtype),
                   jax.ShapeDtypeStruct((B, s, OC, 1), jnp.float32)),
        grid=(B, s, nts),
        in_specs=[pl.BlockSpec((1, cp, tn), lambda b, sp, n: (b, 0, sp * nts + n)),
                  pl.BlockSpec((1, H1, cp), lambda b, sp, n: (b, 0, 0))]
                 + [_const_spec(a) for a in args],
        out_specs=(pl.BlockSpec((1, OC, tn), lambda b, sp, n: (b, 0, sp * nts + n)),
                   pl.BlockSpec((1, 1, OC, 1), lambda b, sp, n: (b, sp, 0, 0))),
        scratch_shapes=[pltpu.VMEM((OC, 1), jnp.float32)],
        compiler_params=pltpu.CompilerParams(
            dimension_semantics=("parallel", "parallel", "arbitrary"),
            vmem_limit_bytes=_VMEM_LIMIT),
    )(x_pad, tw1t, *args)
    gf = jnp.max(gf_raw[..., 0], axis=1)                              # (B, OC) f32
    return pf, gf


# ---------------------------------------------------------------------------
# Parameters (deterministic, synthetic; BN folded, eval mode)
# ---------------------------------------------------------------------------
def _fold_bn(w, b, gamma, beta, mean, var, eps=1e-5):
    # With real trained weights, pass the actual running stats here.
    scale = gamma / jnp.sqrt(var + eps)
    return w * scale[None, :], (b - mean) * scale + beta


def make_params(key, input_channels=3, output_channels=1024):
    ks = jax.random.split(key, 10)

    def lin(k, cin, cout):
        kw, kb = jax.random.split(k)
        w = jax.random.normal(kw, (cin, cout), jnp.float32) / math.sqrt(cin)
        b = 0.01 * jax.random.normal(kb, (cout,), jnp.float32)
        return w, b

    def bn(c):  # fresh PyTorch BatchNorm init, eval-mode running stats
        return (jnp.ones((c,)), jnp.zeros((c,)), jnp.zeros((c,)), jnp.ones((c,)))

    tnet = []
    for i, (a, b_) in enumerate([(input_channels, 64), (64, 128), (128, 1024)]):
        w, bb = lin(ks[i], a, b_)
        tnet.append(_fold_bn(w, bb, *bn(b_)))

    fc = []
    fdims = [(1024, 512), (512, 256), (256, input_channels * input_channels)]
    for i, (a, b_) in enumerate(fdims):
        w, bb = lin(ks[3 + i], a, b_)
        if i < 2:
            w, bb = _fold_bn(w, bb, *bn(b_))
        fc.append((w, bb))

    feat = []
    edims = [(input_channels, 64), (64, 128),
             (128, output_channels // 2), (output_channels // 2, output_channels)]
    for i, (a, b_) in enumerate(edims):
        w, bb = lin(ks[6 + i], a, b_)
        feat.append(_fold_bn(w, bb, *bn(b_)))

    return {"tnet": tnet, "fc": fc, "feat": feat}


# ---------------------------------------------------------------------------
# Full forward (glue in plain JAX, hot paths in the Pallas kernels above)
# ---------------------------------------------------------------------------
def resample_points(x_ncl, num_points, key):
    # Mirrors the torch randperm / randint resampling branch (glue, jax RNG).
    B, C, N = x_ncl.shape
    if N > num_points:
        idx = jax.random.permutation(key, N)[:num_points]
        x_ncl = x_ncl[:, :, idx]
    elif N < num_points:
        idx = jax.random.randint(key, (num_points - N,), 0, N)
        x_ncl = jnp.concatenate([x_ncl, x_ncl[:, :, idx]], axis=2)
    return x_ncl


def pointnet_encoder_forward(x_ncl, params, tn_feat=1024, tn_tnet=2048,
                             n_splits=2, pf_dtype=jnp.bfloat16):
    B, C, N = x_ncl.shape
    # Channel-first already (PyTorch NCL); only pad C: 3 -> 8 and cast to bf16.
    x_pad = jnp.pad(x_ncl, ((0, 0), (0, CP - C), (0, 0))).astype(jnp.bfloat16)

    trans_feat = run_transform_net(x_pad, params["tnet"],
                                   _choose_tn(N, tn_tnet), n_splits)   # (B, 1024) f32

    # input_fc: tiny M=B matmul chain -> plain XLA (not worth a kernel launch).
    (fw1, fb1), (fw2, fb2), (fw3, fb3) = params["fc"]
    g = jax.nn.relu(trans_feat @ fw1 + fb1)
    g = jax.nn.relu(g @ fw2 + fb2)
    trans_mat = (g @ fw3 + fb3).reshape(B, C, C)

    # Fold bmm(x^T, T) into the first feature weight (channel-first):
    #   relu(W1^T (T^T x_cf) + b1) == relu((T @ W1)^T x_cf + b1)
    w1 = params["feat"][0][0]                                          # (C, 64)
    tw1t = jnp.einsum("bij,jk->bki", trans_mat, w1)                    # (B, 64, C)
    tw1t = jnp.pad(tw1t, ((0, 0), (0, 0), (0, CP - C))).astype(jnp.bfloat16)

    pf, gf = run_feature(x_pad, tw1t, params["feat"],
                         _choose_tn(N, tn_feat), n_splits, pf_dtype)
    # pf is already (B, OC, N) channel-first -- no glue transpose needed.
    return gf, pf


# ---------------------------------------------------------------------------
# Pure-JAX f32 reference for correctness checking
# ---------------------------------------------------------------------------
def reference_forward(x_ncl, params):
    with jax.default_matmul_precision("float32"):
        x = jnp.transpose(x_ncl, (0, 2, 1))
        (tw1, tb1), (tw2, tb2), (tw3, tb3) = params["tnet"]
        h = jax.nn.relu(x @ tw1 + tb1)
        h = jax.nn.relu(h @ tw2 + tb2)
        h = jax.nn.relu(h @ tw3 + tb3)
        trans_feat = jnp.max(h, axis=1)
        (fw1, fb1), (fw2, fb2), (fw3, fb3) = params["fc"]
        g = jax.nn.relu(trans_feat @ fw1 + fb1)
        g = jax.nn.relu(g @ fw2 + fb2)
        tmat = (g @ fw3 + fb3).reshape(x.shape[0], 3, 3)
        xt = jnp.einsum("bnc,bcd->bnd", x, tmat)
        (ew1, eb1), (ew2, eb2), (ew3, eb3), (ew4, eb4) = params["feat"]
        h = jax.nn.relu(xt @ ew1 + eb1)
        h = jax.nn.relu(h @ ew2 + eb2)
        h = jax.nn.relu(h @ ew3 + eb3)
        h = jax.nn.relu(h @ ew4 + eb4)
        gf = jnp.max(h, axis=1)
        pf = jnp.transpose(h, (0, 2, 1))
    return gf, pf


if __name__ == "__main__":
    key = jax.random.PRNGKey(0)
    kx, kp, kr = jax.random.split(key, 3)

    B, C_in, N = 2, 3, 448   # 448 = 3.5 * 128: exercises tail masking + partial blocks
    OC = 128                 # small output_channels for the test; module default is 1024
    NUM_POINTS = 448         # == N so the resampling branch is a no-op

    x = jax.random.normal(kx, (B, C_in, N), jnp.float32)   # PyTorch layout (B, C, N)
    params = make_params(kp, input_channels=C_in, output_channels=OC)
    x = resample_points(x, NUM_POINTS, kr)

    gf_ref, pf_ref = reference_forward(x, params)

    # Run 1: small tiles -> 4 N-blocks, 2-way split (S=2), multi-step accumulation.
    gf, pf = pointnet_encoder_forward(x, params, tn_feat=128, tn_tnet=128, n_splits=2)
    jax.block_until_ready((gf, pf))
    assert gf.shape == (B, OC) and gf.dtype == jnp.float32
    assert pf.shape == (B, OC, NUM_POINTS)
    np.testing.assert_allclose(np.asarray(gf), np.asarray(gf_ref), rtol=3e-2, atol=3e-2)
    np.testing.assert_allclose(np.asarray(pf.astype(jnp.float32)), np.asarray(pf_ref),
                               rtol=3e-2, atol=3e-2)

    # Run 2: default tiles (clamped to 384 for N=448) -> 2 N-blocks, S=2, tail mask.
    gf2, pf2 = pointnet_encoder_forward(x, params)
    jax.block_until_ready((gf2, pf2))
    np.testing.assert_allclose(np.asarray(gf2), np.asarray(gf_ref), rtol=3e-2, atol=3e-2)
    np.testing.assert_allclose(np.asarray(pf2.astype(jnp.float32)), np.asarray(pf_ref),
                               rtol=3e-2, atol=3e-2)

    print("KERNEL_OK")
</pallas_src>

<mosaic_0001>
module attributes {stable_mosaic.version = 11 : i64} {
  func.func @kernel(%arg0: i32, %arg1: i32, %arg2: i32, %arg3: memref<1x8x128xbf16, #tpu.memory_space<vmem>>, %arg4: memref<64x8xbf16, #tpu.memory_space<vmem>>, %arg5: memref<64x1xf32, #tpu.memory_space<vmem>>, %arg6: memref<128x64xbf16, #tpu.memory_space<vmem>>, %arg7: memref<128x1xf32, #tpu.memory_space<vmem>>, %arg8: memref<1024x128xbf16, #tpu.memory_space<vmem>>, %arg9: memref<1x1x1024x1xf32, #tpu.memory_space<vmem>>, %arg10: memref<1024x1xf32, #tpu.memory_space<vmem>>) attributes {dimension_semantics = [#tpu.dimension_semantics<parallel>, #tpu.dimension_semantics<parallel>, #tpu.dimension_semantics<arbitrary>], iteration_bounds = array<i64: 2, 2, 2>, scalar_prefetch = 0 : i64, scratch_operands = 1 : i64, tpu.core_type = #tpu.core_type<tc>, window_params = [{transform_indices = @transform_0, window_bounds = array<i64: 1, 8, 128>}, {pipeline_mode = #tpu.pipeline_mode<synchronous>, transform_indices = @transform_1, window_bounds = array<i64: 64, 8>}, {pipeline_mode = #tpu.pipeline_mode<synchronous>, transform_indices = @transform_2, window_bounds = array<i64: 64, 1>}, {pipeline_mode = #tpu.pipeline_mode<synchronous>, transform_indices = @transform_3, window_bounds = array<i64: 128, 64>}, {pipeline_mode = #tpu.pipeline_mode<synchronous>, transform_indices = @transform_4, window_bounds = array<i64: 128, 1>}, {pipeline_mode = #tpu.pipeline_mode<synchronous>, transform_indices = @transform_5, window_bounds = array<i64: 1024, 128>}, {transform_indices = @transform_6, window_bounds = array<i64: 1, 1, 1024, 1>}]} {
    %c0 = arith.constant 0 : index
    %c0_0 = arith.constant 0 : index
    %c0_1 = arith.constant 0 : index
    %0 = vector.load %arg3[%c0, %c0_0, %c0_1] : memref<1x8x128xbf16, #tpu.memory_space<vmem>>, vector<1x8x128xbf16>
    %1 = vector.shape_cast %0 : vector<1x8x128xbf16> to vector<8x128xbf16>
    %c0_2 = arith.constant 0 : index
    %c0_3 = arith.constant 0 : index
    %2 = vector.load %arg4[%c0_2, %c0_3] : memref<64x8xbf16, #tpu.memory_space<vmem>>, vector<64x8xbf16>
    %cst = arith.constant dense<0.000000e+00> : vector<64x128xf32>
    %3 = tpu.matmul %2, %1, %cst {dimension_numbers = #tpu.dot_dimension_numbers<[1], [0], [0], [1], [0, 0, 1, 1], [], []>} : vector<64x8xbf16>, vector<8x128xbf16>, vector<64x128xf32> -> vector<64x128xf32>
    %c0_4 = arith.constant 0 : index
    %c0_5 = arith.constant 0 : index
    %4 = vector.load %arg5[%c0_4, %c0_5] : memref<64x1xf32, #tpu.memory_space<vmem>>, vector<64x1xf32>
    %5 = vector.broadcast %4 : vector<64x1xf32> to vector<64x128xf32>
    %6 = arith.addf %3, %5 : vector<64x128xf32>
    %cst_6 = arith.constant 0.000000e+00 : f32
    %7 = vector.broadcast %cst_6 : f32 to vector<64x128xf32>
    %8 = arith.maximumf %6, %7 : vector<64x128xf32>
    %c0_7 = arith.constant 0 : index
    %c0_8 = arith.constant 0 : index
    %9 = vector.load %arg6[%c0_7, %c0_8] : memref<128x64xbf16, #tpu.memory_space<vmem>>, vector<128x64xbf16>
    %10 = arith.truncf %8 : vector<64x128xf32> to vector<64x128xbf16>
    %cst_9 = arith.constant dense<0.000000e+00> : vector<128x128xf32>
    %11 = tpu.matmul %9, %10, %cst_9 {dimension_numbers = #tpu.dot_dimension_numbers<[1], [0], [0], [1], [0, 0, 1, 1], [], []>} : vector<128x64xbf16>, vector<64x128xbf16>, vector<128x128xf32> -> vector<128x128xf32>
    %c0_10 = arith.constant 0 : index
    %c0_11 = arith.constant 0 : index
    %12 = vector.load %arg7[%c0_10, %c0_11] : memref<128x1xf32, #tpu.memory_space<vmem>>, vector<128x1xf32>
    %13 = vector.broadcast %12 : vector<128x1xf32> to vector<128x128xf32>
    %14 = arith.addf %11, %13 : vector<128x128xf32>
    %cst_12 = arith.constant 0.000000e+00 : f32
    %15 = vector.broadcast %cst_12 : f32 to vector<128x128xf32>
    %16 = arith.maximumf %14, %15 : vector<128x128xf32>
    %c0_13 = arith.constant 0 : index
    %c0_14 = arith.constant 0 : index
    %17 = vector.load %arg8[%c0_13, %c0_14] : memref<1024x128xbf16, #tpu.memory_space<vmem>>, vector<1024x128xbf16>
    %18 = arith.truncf %16 : vector<128x128xf32> to vector<128x128xbf16>
    %cst_15 = arith.constant dense<0.000000e+00> : vector<1024x128xf32>
    %19 = tpu.matmul %17, %18, %cst_15 {dimension_numbers = #tpu.dot_dimension_numbers<[1], [0], [0], [1], [0, 0, 1, 1], [], []>} : vector<1024x128xbf16>, vector<128x128xbf16>, vector<1024x128xf32> -> vector<1024x128xf32>
    %20 = tpu.iota {dimensions = array<i32: 1>} : vector<1x128xi32>
    %c2_i32 = arith.constant 2 : i32
    %21 = arith.muli %arg1, %c2_i32 : i32
    %22 = arith.addi %21, %arg2 : i32
    %c128_i32 = arith.constant 128 : i32
    %23 = arith.muli %22, %c128_i32 : i32
    %24 = vector.broadcast %23 : i32 to vector<1x128xi32>
    %25 = arith.addi %24, %20 : vector<1x128xi32>
    %c448_i32 = arith.constant 448 : i32
    %26 = vector.broadcast %c448_i32 : i32 to vector<1x128xi32>
    %27 = arith.cmpi slt, %25, %26 : vector<1x128xi32>
    %cst_16 = arith.constant 0xFF800000 : f32
    %28 = vector.shape_cast %27 : vector<1x128xi1> to vector<1x128xi1>
    %29 = vector.broadcast %28 : vector<1x128xi1> to vector<1024x128xi1>
    %30 = vector.broadcast %cst_16 : f32 to vector<1024x128xf32>
    %31 = arith.select %29, %19, %30 : vector<1024x128xi1>, vector<1024x128xf32>
    %cst_17 = arith.constant dense<0xFF800000> : vector<1024xf32>
    %32 = vector.multi_reduction <maximumf>, %31, %cst_17 [1] : vector<1024x128xf32> to vector<1024xf32>
    %33 = vector.shape_cast %32 : vector<1024xf32> to vector<1024x1xf32>
    %c0_i32 = arith.constant 0 : i32
    %34 = arith.cmpi eq, %arg2, %c0_i32 : i32
    %35 = arith.extui %34 : i1 to i32
    %c0_i32_18 = arith.constant 0 : i32
    %36 = arith.cmpi ne, %35, %c0_i32_18 : i32
    scf.if %36 {
      %c0_22 = arith.constant 0 : index
      %c0_23 = arith.constant 0 : index
      %43 = vector.load %arg10[%c0_22, %c0_23] : memref<1024x1xf32, #tpu.memory_space<vmem>>, vector<1024x1xf32>
      tpu.vector_store %arg10[%c0_22, %c0_23], %33 {strides = array<i32>} : memref<1024x1xf32, #tpu.memory_space<vmem>>, vector<1024x1xf32>,
    } else {
    }
    %c0_i32_19 = arith.constant 0 : i32
    %37 = arith.cmpi sgt, %arg2, %c0_i32_19 : i32
    %38 = arith.extui %37 : i1 to i32
    %c0_i32_20 = arith.constant 0 : i32
    %39 = arith.cmpi ne, %38, %c0_i32_20 : i32
    scf.if %39 {
      %c0_22 = arith.constant 0 : index
      %c0_23 = arith.constant 0 : index
      %43 = vector.load %arg10[%c0_22, %c0_23] : memref<1024x1xf32, #tpu.memory_space<vmem>>, vector<1024x1xf32>
      %44 = arith.maximumf %43, %33 : vector<1024x1xf32>
      %c0_24 = arith.constant 0 : index
      %c0_25 = arith.constant 0 : index
      %45 = vector.load %arg10[%c0_24, %c0_25] : memref<1024x1xf32, #tpu.memory_space<vmem>>, vector<1024x1xf32>
      tpu.vector_store %arg10[%c0_24, %c0_25], %44 {strides = array<i32>} : memref<1024x1xf32, #tpu.memory_space<vmem>>, vector<1024x1xf32>,
    } else {
    }
    %c1_i32 = arith.constant 1 : i32
    %40 = arith.cmpi eq, %arg2, %c1_i32 : i32
    %41 = arith.extui %40 : i1 to i32
    %c0_i32_21 = arith.constant 0 : i32
    %42 = arith.cmpi ne, %41, %c0_i32_21 : i32
    scf.if %42 {
      %c0_22 = arith.constant 0 : index
      %c0_23 = arith.constant 0 : index
      %43 = vector.load %arg10[%c0_22, %c0_23] : memref<1024x1xf32, #tpu.memory_space<vmem>>, vector<1024x1xf32>
      %c0_24 = arith.constant 0 : index
      %c0_25 = arith.constant 0 : index
      %c0_26 = arith.constant 0 : index
      %c0_27 = arith.constant 0 : index
      %44 = vector.load %arg9[%c0_24, %c0_25, %c0_26, %c0_27] : memref<1x1x1024x1xf32, #tpu.memory_space<vmem>>, vector<1x1x1024x1xf32>
      %45 = vector.shape_cast %44 : vector<1x1x1024x1xf32> to vector<1024x1xf32>
      %46 = vector.shape_cast %43 : vector<1024x1xf32> to vector<1x1x1024x1xf32>
      tpu.vector_store %arg9[%c0_24, %c0_25, %c0_26, %c0_27], %46 {strides = array<i32>} : memref<1x1x1024x1xf32, #tpu.memory_space<vmem>>, vector<1x1x1024x1xf32>,
    } else {
    }
    return
  }
  func.func @transform_0(%arg0: i32, %arg1: i32, %arg2: i32) -> (i32, i32, i32) {
    %c2_i32 = arith.constant 2 : i32
    %0 = arith.muli %arg1, %c2_i32 : i32
    %1 = arith.addi %0, %arg2 : i32
    %c0_i32 = arith.constant 0 : i32
    %c0_i32_0 = arith.constant 0 : i32
    return %arg0, %c0_i32, %1 : i32, i32, i32
  }
  func.func @transform_1(%arg0: i32, %arg1: i32, %arg2: i32) -> (i32, i32) {
    %c0_i32 = arith.constant 0 : i32
    %c0_i32_0 = arith.constant 0 : i32
    %c0_i32_1 = arith.constant 0 : i32
    return %c0_i32, %c0_i32_0 : i32, i32
  }
  func.func @transform_2(%arg0: i32, %arg1: i32, %arg2: i32) -> (i32, i32) {
    %c0_i32 = arith.constant 0 : i32
    %c0_i32_0 = arith.constant 0 : i32
    %c0_i32_1 = arith.constant 0 : i32
    return %c0_i32, %c0_i32_0 : i32, i32
  }
  func.func @transform_3(%arg0: i32, %arg1: i32, %arg2: i32) -> (i32, i32) {
    %c0_i32 = arith.constant 0 : i32
    %c0_i32_0 = arith.constant 0 : i32
    %c0_i32_1 = arith.constant 0 : i32
    return %c0_i32, %c0_i32_0 : i32, i32
  }
  func.func @transform_4(%arg0: i32, %arg1: i32, %arg2: i32) -> (i32, i32) {
    %c0_i32 = arith.constant 0 : i32
    %c0_i32_0 = arith.constant 0 : i32
    %c0_i32_1 = arith.constant 0 : i32
    return %c0_i32, %c0_i32_0 : i32, i32
  }
  func.func @transform_5(%arg0: i32, %arg1: i32, %arg2: i32) -> (i32, i32) {
    %c0_i32 = arith.constant 0 : i32
    %c0_i32_0 = arith.constant 0 : i32
    %c0_i32_1 = arith.constant 0 : i32
    return %c0_i32, %c0_i32_0 : i32, i32
  }
  func.func @transform_6(%arg0: i32, %arg1: i32, %arg2: i32) -> (i32, i32, i32, i32) {
    %c0_i32 = arith.constant 0 : i32
    %c0_i32_0 = arith.constant 0 : i32
    %c0_i32_1 = arith.constant 0 : i32
    return %arg0, %arg1, %c0_i32, %c0_i32_0 : i32, i32, i32, i32
  }
}

</mosaic_0001>

<llo_original>
// kernel: tpu_custom_call.1
$region0: #{tpu_custom_call.1}
  #allocation0 [shape = 'u32[]', space=smem, size = 0x4, offset = 0x4, fixed_abs, tag = 'smem constant byte address 0x4 - core index']
  #allocation1 [shape = 'u32[72,128]{1,0:T(1,128)}', space=vmem, size = 0x9000, scoped, tag = 'internal scratch']
  #allocation2 [shape = 'f32[1024,1]{1,0:T(8,128)}', space=vmem, size = 0x80000, scoped, tag = 'scratch operand']
  %s0 = inlined_call_operand.hbm [shape: bf16[2,8,448], index: 0, kind: input, shape index: {}]
  %s1 = inlined_call_operand.vmem [shape: bf16[64,8], index: 1, kind: input, shape index: {}]
  %s2 = inlined_call_operand.vmem [shape: f32[64,1], index: 2, kind: input, shape index: {}]
  %s3 = inlined_call_operand.vmem [shape: bf16[128,64], index: 3, kind: input, shape index: {}]
  %s4 = inlined_call_operand.vmem [shape: f32[128,1], index: 4, kind: input, shape index: {}]
  %s5 = inlined_call_operand.hbm [shape: bf16[1024,128], index: 5, kind: input, shape index: {}]
  %s6 = inlined_call_operand.vmem [shape: f32[2,2,1024,1], index: 6, kind: output, shape index: {}]
  %s7 = sld [smem:[#allocation0]]
  $region77: #{tpu_custom_call.1} parent=0
    _
  %s9 = ssub.s32 1, %s7
  %s10 = scalar_select 0, %s9, %s7
  $region1: #{tpu_custom_call.1} parent=0
    #allocation3 [shape = 'u8[4096]{0}', space=vmem, size = 0x1000, scoped, tag = 'input window, operand 0']
    #allocation4 [shape = 's32[2]{0}', space=sflag, size = 0x8, scoped, tag = 'scoped memory for tpu_custom_call.1']
    #allocation5 [shape = 'u8[262144]{0}', space=vmem, size = 0x40000, scoped, tag = 'input window, operand 5, single buffered']
    #allocation6 [shape = 's32[1]{0}', space=sflag, size = 0x4, scoped, tag = 'scoped memory for tpu_custom_call.1']
    %11 = vsyncpa [#allocation4], 0
    %s12 = scalar_lea.sflag [#allocation4], 1
    %13 = vsyncpa %s12, 0
    %14 = vsyncpa [#allocation6], 0
    loop: start=0, step=1, limit=10
    $region2: #{tpu_custom_call.1} parent=1 // loop_pre_header
      _
    $region3: #{tpu_custom_call.1} parent=1 // loop_header
      %s16 = sphi 0, %s20
      %p17 = scmp.ge.s32.totalorder %s16, 10
      %s23 = sphi 0, %s42
      %s24 = sphi 0, %s38
      %s25 = sphi 0, %s34
      %s26 = sphi 0, %s23
      %s27 = sphi 0, %s24
      %s28 = sphi 0, %s25
      %s29 = sphi 0, %s26
      %s30 = sphi 0, %s27
      %s31 = sphi 0, %s28
      %s51 = sphi 0, %s53
      %s54 = sphi 0, %s51
      %s55 = sphi 0, %s54
      %s71 = sphi 0, %s55
      %s75 = sphi 0, %s75
      %s77 = sphi 0, %s75
      %s78 = sphi 0, %s77
      %s92 = sphi 0, %s78
      %s96 = sphi 0, %s96
      %s98 = sphi 0, %s96
      %s99 = sphi 0, %s98
      %s113 = sphi 0, %s99
      %s117 = sphi 0, %s117
      %s119 = sphi 0, %s117
      %s120 = sphi 0, %s119
      %s134 = sphi 0, %s120
      %s138 = sphi 0, %s138
      %s140 = sphi 0, %s138
      %s141 = sphi 0, %s140
      %s155 = sphi 0, %s141
      %s159 = sphi 0, %s159
      %s161 = sphi 0, %s159
      %s162 = sphi 0, %s161
      %s176 = sphi 0, %s162
      %s184 = sphi 0, %s186
      %s187 = sphi 0, %s184
      %s188 = sphi 0, %s187
      %s204 = sphi 0, %s188
    $region4: #{tpu_custom_call.1} parent=1 // loop_header_branch
      %19 = sbr.rel (%p17) target = $region8
    $region5: #{tpu_custom_call.1} parent=1 // loop_body
      %s21 = ssub.s32 %s16, 1
      %s22 = ssub.s32 %s16, 2
      %s32 = sadd.s32 1, %s25
      %p33 = scmp.ge.s32.totalorder %s32, 2
      %s34 = scalar_select %p33, 0, %s32
      %s35 = sadd.s32 1, %s24
      %s36 = scalar_select %p33, %s35, %s24
      %p37 = scmp.ge.s32.totalorder %s36, 2
      %s38 = scalar_select %p37, 0, %s36
      %s39 = sadd.s32 1, %s23
      %s40 = scalar_select %p37, %s39, %s23
      %p41 = scmp.ge.s32.totalorder %s40, 2
      %s42 = scalar_select %p41, 0, %s40
      %s43 = smul.u32 %s24, 2
      %s44 = sadd.s32 %s43, %s25
      %s45 = smul.u32 %s38, 2
      %s46 = sadd.s32 %s45, %s34
      %s47 = ssub.s32 %s23, %s42
      %s48 = ssub.s32 %s44, %s46
      %s49 = sor.u32 %s47, %s48
      %p50 = scmp.eq.s32.totalorder %s49, 0
      %s52 = sadd.s32 %s51, 1
      %s53 = scalar_select %p50, %s51, %s52
      %p56 = pneg %p50
      %p57 = scmp.eq.s32.totalorder %s16, 7
      %p58 = por %p56, %p57
      %p59 = scmp.ne.s32.totalorder %s51, %s54
      %p60 = scmp.eq.s32.totalorder %s16, 0
      %p61 = por %p59, %p60
      %p62 = scmp.ne.s32.totalorder %s51, %s54
      %p63 = scmp.eq.s32.totalorder %s21, 7
      %p64 = por %p62, %p63
      %p65 = scmp.ne.s32.totalorder %s54, %s55
      %p66 = scmp.eq.s32.totalorder %s21, 0
      %p67 = por %p65, %p66
      %p68 = scmp.ne.s32.totalorder %s54, %s55
      %p69 = scmp.eq.s32.totalorder %s22, 7
      %p70 = por %p68, %p69
      %p72 = scmp.ne.s32.totalorder %s55, %s71
      %p73 = scmp.eq.s32.totalorder %s22, 0
      %p74 = por %p72, %p73
      %s76 = sadd.s32 %s75, 1
      %p79 = scmp.eq.s32.totalorder %s16, 7
      %p80 = scmp.ne.s32.totalorder %s75, %s77
      %p81 = scmp.eq.s32.totalorder %s16, 0
      %p82 = por %p80, %p81
      %p83 = scmp.ne.s32.totalorder %s75, %s77
      %p84 = scmp.eq.s32.totalorder %s21, 7
      %p85 = por %p83, %p84
      %p86 = scmp.ne.s32.totalorder %s77, %s78
      %p87 = scmp.eq.s32.totalorder %s21, 0
      %p88 = por %p86, %p87
      %p89 = scmp.ne.s32.totalorder %s77, %s78
      %p90 = scmp.eq.s32.totalorder %s22, 7
      %p91 = por %p89, %p90
      %p93 = scmp.ne.s32.totalorder %s78, %s92
      %p94 = scmp.eq.s32.totalorder %s22, 0
      %p95 = por %p93, %p94
      %s97 = sadd.s32 %s96, 1
      %p100 = scmp.eq.s32.totalorder %s16, 7
      %p101 = scmp.ne.s32.totalorder %s96, %s98
      %p102 = scmp.eq.s32.totalorder %s16, 0
      %p103 = por %p101, %p102
      %p104 = scmp.ne.s32.totalorder %s96, %s98
      %p105 = scmp.eq.s32.totalorder %s21, 7
      %p106 = por %p104, %p105
      %p107 = scmp.ne.s32.totalorder %s98, %s99
      %p108 = scmp.eq.s32.totalorder %s21, 0
      %p109 = por %p107, %p108
      %p110 = scmp.ne.s32.totalorder %s98, %s99
      %p111 = scmp.eq.s32.totalorder %s22, 7
      %p112 = por %p110, %p111
      %p114 = scmp.ne.s32.totalorder %s99, %s113
      %p115 = scmp.eq.s32.totalorder %s22, 0
      %p116 = por %p114, %p115
      %s118 = sadd.s32 %s117, 1
      %p121 = scmp.eq.s32.totalorder %s16, 7
      %p122 = scmp.ne.s32.totalorder %s117, %s119
      %p123 = scmp.eq.s32.totalorder %s16, 0
      %p124 = por %p122, %p123
      %p125 = scmp.ne.s32.totalorder %s117, %s119
      %p126 = scmp.eq.s32.totalorder %s21, 7
      %p127 = por %p125, %p126
      %p128 = scmp.ne.s32.totalorder %s119, %s120
      %p129 = scmp.eq.s32.totalorder %s21, 0
      %p130 = por %p128, %p129
      %p131 = scmp.ne.s32.totalorder %s119, %s120
      %p132 = scmp.eq.s32.totalorder %s22, 7
      %p133 = por %p131, %p132
      %p135 = scmp.ne.s32.totalorder %s120, %s134
      %p136 = scmp.eq.s32.totalorder %s22, 0
      %p137 = por %p135, %p136
      %s139 = sadd.s32 %s138, 1
      %p142 = scmp.eq.s32.totalorder %s16, 7
      %p143 = scmp.ne.s32.totalorder %s138, %s140
      %p144 = scmp.eq.s32.totalorder %s16, 0
      %p145 = por %p143, %p144
      %p146 = scmp.ne.s32.totalorder %s138, %s140
      %p147 = scmp.eq.s32.totalorder %s21, 7
      %p148 = por %p146, %p147
      %p149 = scmp.ne.s32.totalorder %s140, %s141
      %p150 = scmp.eq.s32.totalorder %s21, 0
      %p151 = por %p149, %p150
      %p152 = scmp.ne.s32.totalorder %s140, %s141
      %p153 = scmp.eq.s32.totalorder %s22, 7
      %p154 = por %p152, %p153
      %p156 = scmp.ne.s32.totalorder %s141, %s155
      %p157 = scmp.eq.s32.totalorder %s22, 0
      %p158 = por %p156, %p157
      %s160 = sadd.s32 %s159, 1
      %p163 = scmp.eq.s32.totalorder %s16, 7
      %p164 = scmp.ne.s32.totalorder %s159, %s161
      %p165 = scmp.eq.s32.totalorder %s16, 0
      %p166 = por %p164, %p165
      %p167 = scmp.ne.s32.totalorder %s159, %s161
      %p168 = scmp.eq.s32.totalorder %s21, 7
      %p169 = por %p167, %p168
      %p170 = scmp.ne.s32.totalorder %s161, %s162
      %p171 = scmp.eq.s32.totalorder %s21, 0
      %p172 = por %p170, %p171
      %p173 = scmp.ne.s32.totalorder %s161, %s162
      %p174 = scmp.eq.s32.totalorder %s22, 7
      %p175 = por %p173, %p174
      %p177 = scmp.ne.s32.totalorder %s162, %s176
      %p178 = scmp.eq.s32.totalorder %s22, 0
      %p179 = por %p177, %p178
      %s180 = ssub.s32 %s23, %s42
      %s181 = ssub.s32 %s24, %s38
      %s182 = sor.u32 %s180, %s181
      %p183 = scmp.eq.s32.totalorder %s182, 0
      %s185 = sadd.s32 %s184, 1
      %s186 = scalar_select %p183, %s184, %s185
      %p189 = pneg %p183
      %p190 = scmp.eq.s32.totalorder %s16, 7
      %p191 = por %p189, %p190
      %p192 = scmp.ne.s32.totalorder %s184, %s187
      %p193 = scmp.eq.s32.totalorder %s16, 0
      %p194 = por %p192, %p193
      %p195 = scmp.ne.s32.totalorder %s184, %s187
      %p196 = scmp.eq.s32.totalorder %s21, 7
      %p197 = por %p195, %p196
      %p198 = scmp.ne.s32.totalorder %s187, %s188
      %p199 = scmp.eq.s32.totalorder %s21, 0
      %p200 = por %p198, %p199
      %p201 = scmp.ne.s32.totalorder %s187, %s188
      %p202 = scmp.eq.s32.totalorder %s22, 7
      %p203 = por %p201, %p202
      %p205 = scmp.ne.s32.totalorder %s188, %s204
      %p206 = scmp.eq.s32.totalorder %s22, 0
      %p207 = por %p205, %p206
      %p208 = scmp.le.s32.totalorder 1, %s16
      %p209 = scmp.lt.s32.totalorder %s16, 9
      %p210 = pnand %p208, %p209
      %p211 = pneg %p210
      // Predicated region
      $region9: #{tpu_custom_call.1} parent=5 // pred_check
        _
      $region10: #{tpu_custom_call.1} parent=5 // pred_check_branch
        %213 = sbr.rel (%p210) target = $region12
      $region11: #{tpu_custom_call.1} parent=5 // pred_region
        %s214 = ssub.s32 %s16, 1
        // Predicated region
        $region13: #{tpu_custom_call.1} parent=11 // pred_check
          %p215 = pneg %p88
        $region14: #{tpu_custom_call.1} parent=11 // pred_check_branch
          %217 = sbr.rel (%p215) target = $region16
        $region15: #{tpu_custom_call.1} parent=11 // pred_region
          _
        $region16: #{tpu_custom_call.1} parent=11 // pred_fallthru
          _
        // Predicated region
        $region17: #{tpu_custom_call.1} parent=11 // pred_check
          %p218 = pneg %p109
        $region18: #{tpu_custom_call.1} parent=11 // pred_check_branch
          %220 = sbr.rel (%p218) target = $region20
        $region19: #{tpu_custom_call.1} parent=11 // pred_region
          _
        $region20: #{tpu_custom_call.1} parent=11 // pred_fallthru
          _
        // Predicated region
        $region21: #{tpu_custom_call.1} parent=11 // pred_check
          %p221 = pneg %p130
        $region22: #{tpu_custom_call.1} parent=11 // pred_check_branch
          %223 = sbr.rel (%p221) target = $region24
        $region23: #{tpu_custom_call.1} parent=11 // pred_region
          _
        $region24: #{tpu_custom_call.1} parent=11 // pred_fallthru
          _
        // Predicated region
        $region25: #{tpu_custom_call.1} parent=11 // pred_check
          %p224 = pneg %p151
        $region26: #{tpu_custom_call.1} parent=11 // pred_check_branch
          %226 = sbr.rel (%p224) target = $region28
        $region27: #{tpu_custom_call.1} parent=11 // pred_region
          _
        $region28: #{tpu_custom_call.1} parent=11 // pred_fallthru
          _
        // Predicated region
        $region29: #{tpu_custom_call.1} parent=11 // pred_check
          %p227 = pneg %p172
        $region30: #{tpu_custom_call.1} parent=11 // pred_check_branch
          %229 = sbr.rel (%p227) target = $region32
        $region31: #{tpu_custom_call.1} parent=11 // pred_region
          %231 = vsyncadd [#allocation6], 0
          %s232 = sshll.u32 %s5, 4
          %s233 = int_to_ptr.hbm [resolvable:$true] %s232
          %s234 = sshll.u32 [#allocation5], 4
          %s235 = int_to_ptr.vmem [resolvable:$true] %s234
          %240 = dma.hbm_to_vmem [thread:$0]  %s233, 8192, %s235, [#allocation6], 64, 64, 4
        $region32: #{tpu_custom_call.1} parent=11 // pred_fallthru
          _
      $region12: #{tpu_custom_call.1} parent=5 // pred_fallthru
        _
      %p241 = scmp.lt.s32.totalorder %s16, 8
      // Predicated region
      $region33: #{tpu_custom_call.1} parent=5 // pred_check
        %p242 = pneg %p241
      $region34: #{tpu_custom_call.1} parent=5 // pred_check_branch
        %244 = sbr.rel (%p242) target = $region36
      $region35: #{tpu_custom_call.1} parent=5 // pred_region
        // Predicated region
        $region37: #{tpu_custom_call.1} parent=35 // pred_check
          %p245 = pneg %p61
        $region38: #{tpu_custom_call.1} parent=35 // pred_check_branch
          %247 = sbr.rel (%p245) target = $region40
        $region39: #{tpu_custom_call.1} parent=35 // pred_region
          %s248 = sand.u32 %s51, 1
          %s249 = scalar_lea.sflag [#allocation4], %s248
          %s250 = sand.u32 %s51, 1
          %s251 = smul.addr %s250, 4
          %s252 = scalar_lea.vmem [#allocation3], %s251
          %s253 = smul.u32 %s24, 2
          %s254 = sadd.s32 %s253, %s25
          %256 = vsyncadd %s249, 0
          %s257 = smul.addr %s23, 4
          %s258 = sadd.s32 %s254, %s257
          %s259 = smul.addr %s258, 4
          %s260 = scalar_lea.hbm %s0, %s259
          %s262 = sshll.u32 %s260, 4
          %s263 = int_to_ptr.hbm [resolvable:$true] %s262
          %s264 = sshll.u32 %s252, 4
          %s265 = int_to_ptr.vmem [resolvable:$true] %s264
          %267 = dma.hbm_to_vmem [thread:$0]  %s263, 64, %s265, %s249
        $region40: #{tpu_custom_call.1} parent=35 // pred_fallthru
          _
      $region36: #{tpu_custom_call.1} parent=5 // pred_fallthru
        _
      %p268 = scmp.le.s32.totalorder 1, %s16
      %p269 = scmp.lt.s32.totalorder %s16, 9
      %p270 = pnand %p268, %p269
      %p271 = pneg %p270
      // Predicated region
      $region41: #{tpu_custom_call.1} parent=5 // pred_check
        _
      $region42: #{tpu_custom_call.1} parent=5 // pred_check_branch
        %273 = sbr.rel (%p270) target = $region44
      $region43: #{tpu_custom_call.1} parent=5 // pred_region
        %s274 = ssub.s32 %s16, 1
        %s275 = sand.u32 %s54, 1
        %s276 = scalar_lea.sflag [#allocation4], %s275
        %s277 = sand.u32 %s54, 1
        %s278 = smul.addr %s277, 4
        %s279 = scalar_lea.vmem [#allocation3], %s278
        // Predicated region
        $region45: #{tpu_custom_call.1} parent=43 // pred_check
          %p280 = pneg %p67
        $region46: #{tpu_custom_call.1} parent=43 // pred_check_branch
          %282 = sbr.rel (%p280) target = $region48
        $region47: #{tpu_custom_call.1} parent=43 // pred_region
          %284 = dma.done %s276, 64
        $region48: #{tpu_custom_call.1} parent=43 // pred_fallthru
          _
        // Predicated region
        $region49: #{tpu_custom_call.1} parent=43 // pred_check
          %p285 = pneg %p172
        $region50: #{tpu_custom_call.1} parent=43 // pred_check_branch
          %287 = sbr.rel (%p285) target = $region52
        $region51: #{tpu_custom_call.1} parent=43 // pred_region
          %289 = dma.done [#allocation6], 8192
        $region52: #{tpu_custom_call.1} parent=43 // pred_fallthru
          _
        %s290 = sand.u32 %s54, 1
        %s291 = scalar_lea.sflag [#allocation4], %s290
        %s292 = sand.u32 %s54, 1
        %s293 = smul.addr %s292, 4
        %s294 = scalar_lea.vmem [#allocation3], %s293
        %p295 = pneg %p67
        %p296 = pneg %p64
        %p297 = pneg %p88
        %p298 = pneg %p85
        %p299 = pneg %p109
        %p300 = pneg %p106
        %p301 = pneg %p130
        %p302 = pneg %p127
        %p303 = pneg %p151
        %p304 = pneg %p148
        %p305 = pneg %p172
        %p306 = pneg %p169
        %p307 = pneg %p200
        %p308 = pneg %p197
        %p309 = scmp.lt.s32.totalorder %s26, 1
        %s310 = scalar_select %p309, %s26, 1
        %p311 = scmp.lt.s32.totalorder %s27, 1
        %s312 = scalar_select %p311, %s27, 1
        %s313 = smul.addr %s312, 128
        %s314 = smul.addr %s310, 256
        %s315 = sadd.s32 %s313, %s314
        %s316 = smul.addr %s315, 8
        %s317 = scalar_lea.vmem %s6, %s316
        %s318 = smul.u32 %s27, 2
        %s319 = sadd.s32 %s318, %s28
        %p320 = scmp.lt.s32.totalorder %s26, 1
        %s321 = scalar_select %p320, %s26, 1
        %p322 = scmp.lt.s32.totalorder %s27, 1
        %s323 = scalar_select %p322, %s27, 1
        %s324 = smul.addr %s323, 128
        %s325 = smul.addr %s321, 256
        %s326 = sadd.s32 %s324, %s325
        %s327 = smul.addr %s326, 8
        %s328 = scalar_lea.vmem %s6, %s327
        %v330 = vld [vmem:[%s279] sm:$0xf]
        %v331 = vld [vmem:[%s1] sm:$0xf]
        %v332 = vld [vmem:[%s1 + $0x4] sm:$0xf]
        %v333 = vld [vmem:[%s1 + $0x8] sm:$0xf]
        %v334 = vld [vmem:[%s1 + $0xc] sm:$0xf]
        %v335 = vld [vmem:[%s1 + $0x10] sm:$0xf]
        %v336 = vld [vmem:[%s1 + $0x14] sm:$0xf]
        %v337 = vld [vmem:[%s1 + $0x18] sm:$0xf]
        %v338 = vld [vmem:[%s1 + $0x1c] sm:$0xf]
        %v339 = vld [vmem:[%s2] sm:$0xff]
        %v340 = vld [vmem:[%s2 + $0x8] sm:$0xff]
        %v341 = vld [vmem:[%s2 + $0x10] sm:$0xff]
        %v342 = vld [vmem:[%s2 + $0x18] sm:$0xff]
        %v343 = vld [vmem:[%s2 + $0x20] sm:$0xff]
        %v344 = vld [vmem:[%s2 + $0x28] sm:$0xff]
        %v345 = vld [vmem:[%s2 + $0x30] sm:$0xff]
        %v346 = vld [vmem:[%s2 + $0x38] sm:$0xff]
        %348 = vset.pattern.permute.xlu0 0
        %349 = vperm.xlu0 %348, %v339
        %v350 = vpop.permute.xlu0 %349
        %353 = vset.pattern.permute.xlu0 0
        %354 = vperm.xlu0 %353, %v340
        %v355 = vpop.permute.xlu0 %354
        %358 = vset.pattern.permute.xlu0 0
        %359 = vperm.xlu0 %358, %v341
        %v360 = vpop.permute.xlu0 %359
        %363 = vset.pattern.permute.xlu0 0
        %364 = vperm.xlu0 %363, %v342
        %v365 = vpop.permute.xlu0 %364
        %368 = vset.pattern.permute.xlu0 0
        %369 = vperm.xlu0 %368, %v343
        %v370 = vpop.permute.xlu0 %369
        %373 = vset.pattern.permute.xlu0 0
        %374 = vperm.xlu0 %373, %v344
        %v375 = vpop.permute.xlu0 %374
        %378 = vset.pattern.permute.xlu0 0
        %379 = vperm.xlu0 %378, %v345
        %v380 = vpop.permute.xlu0 %379
        %383 = vset.pattern.permute.xlu0 0
        %384 = vperm.xlu0 %383, %v346
        %v385 = vpop.permute.xlu0 %384
        %v395 = vunpack.c.l.b16 %v331
        %v396 = vunpack.c.l.b16 %v332
        %v397 = vunpack.c.l.b16 %v333
        %v398 = vunpack.c.l.b16 %v334
        %v399 = vunpack.c.l.b16 %v335
        %v400 = vunpack.c.l.b16 %v336
        %v401 = vunpack.c.l.b16 %v337
        %v402 = vunpack.c.l.b16 %v338
        %v403 = vpack.c.b16 %v396, %v395
        %v404 = vpack.c.b16 %v398, %v397
        %v405 = vpack.c.b16 %v400, %v399
        %v406 = vpack.c.b16 %v402, %v401
        %vm407 = vcmask 64512
        %v409 = vsel %vm407, %v403, 0
        %v412 = vsel %vm407, %v404, 0
        %v415 = vsel %vm407, %v405, 0
        %v418 = vsel %vm407, %v406, 0
        %vm420 = vcmask 1043456
        %v422 = vsel %vm420, %v330, 0
        %424 = vmatpush.bf16.msra.mxu0 0
        %425 = vmatpush.bf16.msra.mxu0 0
        %426 = vmatpush.bf16.msra.mxu0 0
        %427 = vmatpush.bf16.msra.mxu0 0
        %428 = vmatpush.bf16.msra.mxu0 0
        %429 = vmatpush.bf16.msra.mxu0 0
        %430 = vmatpush.bf16.msra.mxu0 0
        %431 = vmatpush.bf16.msra.mxu0 %v422
        %432 = vmatmul.bf16.gmra.mxu0 %v409
        %v433 = vpop.f32.mrf.mxu0
        %v434 = vadd.f32 %v350, %v433
        %v435 = vpop.f32.mrf.mxu0
        %v436 = vadd.f32 %v355, %v435
        %437 = vmatmul.bf16.gmra.mxu0 %v412
        %v438 = vpop.f32.mrf.mxu0
        %v439 = vadd.f32 %v360, %v438
        %v440 = vpop.f32.mrf.mxu0
        %v441 = vadd.f32 %v365, %v440
        %442 = vmatmul.bf16.gmra.mxu0 %v415
        %v443 = vpop.f32.mrf.mxu0
        %v444 = vadd.f32 %v370, %v443
        %v445 = vpop.f32.mrf.mxu0
        %v446 = vadd.f32 %v375, %v445
        %447 = vmatmul.bf16.gmra.mxu0 %v418
        %v448 = vpop.f32.mrf.mxu0
        %v449 = vadd.f32 %v380, %v448
        %v450 = vpop.f32.mrf.mxu0
        %v451 = vadd.f32 %v385, %v450
        %452 = vdwg.mxu0
        %v453 = vmax.f32 %v434, 0.0
        %v454 = vmax.f32 %v436, 0.0
        %v455 = vmax.f32 %v439, 0.0
        %v456 = vmax.f32 %v441, 0.0
        %v457 = vmax.f32 %v444, 0.0
        %v458 = vmax.f32 %v446, 0.0
        %v459 = vmax.f32 %v449, 0.0
        %v460 = vmax.f32 %v451, 0.0
        %v461 = vld [vmem:[%s3] sm:$0xf]
        %v462 = vld [vmem:[%s3 + $0x4] sm:$0xf]
        %v463 = vld [vmem:[%s3 + $0x8] sm:$0xf]
        %v464 = vld [vmem:[%s3 + $0xc] sm:$0xf]
        %v465 = vld [vmem:[%s3 + $0x10] sm:$0xf]
        %v466 = vld [vmem:[%s3 + $0x14] sm:$0xf]
        %v467 = vld [vmem:[%s3 + $0x18] sm:$0xf]
        %v468 = vld [vmem:[%s3 + $0x1c] sm:$0xf]
        %v469 = vld [vmem:[%s3 + $0x20] sm:$0xf]
        %v470 = vld [vmem:[%s3 + $0x24] sm:$0xf]
        %v471 = vld [vmem:[%s3 + $0x28] sm:$0xf]
        %v472 = vld [vmem:[%s3 + $0x2c] sm:$0xf]
        %v473 = vld [vmem:[%s3 + $0x30] sm:$0xf]
        %v474 = vld [vmem:[%s3 + $0x34] sm:$0xf]
        %v475 = vld [vmem:[%s3 + $0x38] sm:$0xf]
        %v476 = vld [vmem:[%s3 + $0x3c] sm:$0xf]
        %v477 = vpack.c.bf16 %v454, %v453
        %v478 = vpack.c.bf16 %v456, %v455
        %v479 = vpack.c.bf16 %v458, %v457
        %v480 = vpack.c.bf16 %v460, %v459
        %v481 = vld [vmem:[%s4] sm:$0xff]
        %v482 = vld [vmem:[%s4 + $0x8] sm:$0xff]
        %v483 = vld [vmem:[%s4 + $0x10] sm:$0xff]
        %v484 = vld [vmem:[%s4 + $0x18] sm:$0xff]
        %v485 = vld [vmem:[%s4 + $0x20] sm:$0xff]
        %v486 = vld [vmem:[%s4 + $0x28] sm:$0xff]
        %v487 = vld [vmem:[%s4 + $0x30] sm:$0xff]
        %v488 = vld [vmem:[%s4 + $0x38] sm:$0xff]
        %v489 = vld [vmem:[%s4 + $0x40] sm:$0xff]
        %v490 = vld [vmem:[%s4 + $0x48] sm:$0xff]
        %v491 = vld [vmem:[%s4 + $0x50] sm:$0xff]
        %v492 = vld [vmem:[%s4 + $0x58] sm:$0xff]
        %v493 = vld [vmem:[%s4 + $0x60] sm:$0xff]
        %v494 = vld [vmem:[%s4 + $0x68] sm:$0xff]
        %v495 = vld [vmem:[%s4 + $0x70] sm:$0xff]
        %v496 = vld [vmem:[%s4 + $0x78] sm:$0xff]
        %498 = vset.pattern.permute.xlu0 0
        %499 = vperm.xlu0 %498, %v481
        %v500 = vpop.permute.xlu0 %499
        %503 = vset.pattern.permute.xlu0 0
        %504 = vperm.xlu0 %503, %v482
        %v505 = vpop.permute.xlu0 %504
        %508 = vset.pattern.permute.xlu0 0
        %509 = vperm.xlu0 %508, %v483
        %v510 = vpop.permute.xlu0 %509
        %513 = vset.pattern.permute.xlu0 0
        %514 = vperm.xlu0 %513, %v484
        %v515 = vpop.permute.xlu0 %514
        %518 = vset.pattern.permute.xlu0 0
        %519 = vperm.xlu0 %518, %v485
        %v520 = vpop.permute.xlu0 %519
        %523 = vset.pattern.permute.xlu0 0
        %524 = vperm.xlu0 %523, %v486
        %v525 = vpop.permute.xlu0 %524
        %528 = vset.pattern.permute.xlu0 0
        %529 = vperm.xlu0 %528, %v487
        %v530 = vpop.permute.xlu0 %529
        %533 = vset.pattern.permute.xlu0 0
        %534 = vperm.xlu0 %533, %v488
        %v535 = vpop.permute.xlu0 %534
        %538 = vset.pattern.permute.xlu0 0
        %539 = vperm.xlu0 %538, %v489
        %v540 = vpop.permute.xlu0 %539
        %543 = vset.pattern.permute.xlu0 0
        %544 = vperm.xlu0 %543, %v490
        %v545 = vpop.permute.xlu0 %544
        %548 = vset.pattern.permute.xlu0 0
        %549 = vperm.xlu0 %548, %v491
        %v550 = vpop.permute.xlu0 %549
        %553 = vset.pattern.permute.xlu0 0
        %554 = vperm.xlu0 %553, %v492
        %v555 = vpop.permute.xlu0 %554
        %558 = vset.pattern.permute.xlu0 0
        %559 = vperm.xlu0 %558, %v493
        %v560 = vpop.permute.xlu0 %559
        %563 = vset.pattern.permute.xlu0 0
        %564 = vperm.xlu0 %563, %v494
        %v565 = vpop.permute.xlu0 %564
        %568 = vset.pattern.permute.xlu0 0
        %569 = vperm.xlu0 %568, %v495
        %v570 = vpop.permute.xlu0 %569
        %573 = vset.pattern.permute.xlu0 0
        %574 = vperm.xlu0 %573, %v496
        %v575 = vpop.permute.xlu0 %574
        %v593 = vunpack.c.l.b16 %v461
        %v594 = vunpack.c.l.b16 %v462
        %v595 = vunpack.c.l.b16 %v463
        %v596 = vunpack.c.l.b16 %v464
        %v597 = vunpack.c.l.b16 %v465
        %v598 = vunpack.c.l.b16 %v466
        %v599 = vunpack.c.l.b16 %v467
        %v600 = vunpack.c.l.b16 %v468
        %v601 = vunpack.c.l.b16 %v469
        %v602 = vunpack.c.l.b16 %v470
        %v603 = vunpack.c.l.b16 %v471
        %v604 = vunpack.c.l.b16 %v472
        %v605 = vunpack.c.l.b16 %v473
        %v606 = vunpack.c.l.b16 %v474
        %v607 = vunpack.c.l.b16 %v475
        %v608 = vunpack.c.l.b16 %v476
        %v609 = vpack.c.b16 %v594, %v593
        %v610 = vpack.c.b16 %v596, %v595
        %v611 = vpack.c.b16 %v598, %v597
        %v612 = vpack.c.b16 %v600, %v599
        %v613 = vpack.c.b16 %v602, %v601
        %v614 = vpack.c.b16 %v604, %v603
        %v615 = vpack.c.b16 %v606, %v605
        %v616 = vpack.c.b16 %v608, %v607
        %vm617 = vcmask 523264
        %v619 = vsel %vm617, %v609, 0
        %v622 = vsel %vm617, %v610, 0
        %v625 = vsel %vm617, %v611, 0
        %v628 = vsel %vm617, %v612, 0
        %v631 = vsel %vm617, %v613, 0
        %v634 = vsel %vm617, %v614, 0
        %v637 = vsel %vm617, %v615, 0
        %v640 = vsel %vm617, %v616, 0
        %642 = vmatpush.bf16.msra.mxu0 0
        %643 = vmatpush.bf16.msra.mxu0 0
        %644 = vmatpush.bf16.msra.mxu0 0
        %645 = vmatpush.bf16.msra.mxu0 0
        %646 = vmatpush.bf16.msra.mxu0 %v480
        %647 = vmatpush.bf16.msra.mxu0 %v479
        %648 = vmatpush.bf16.msra.mxu0 %v478
        %649 = vmatpush.bf16.msra.mxu0 %v477
        %650 = vmatmul.bf16.gmra.mxu0 %v619
        %v651 = vpop.f32.mrf.mxu0
        %v652 = vadd.f32 %v500, %v651
        %v653 = vpop.f32.mrf.mxu0
        %v654 = vadd.f32 %v505, %v653
        %655 = vmatmul.bf16.gmra.mxu0 %v622
        %v656 = vpop.f32.mrf.mxu0
        %v657 = vadd.f32 %v510, %v656
        %v658 = vpop.f32.mrf.mxu0
        %v659 = vadd.f32 %v515, %v658
        %660 = vmatmul.bf16.gmra.mxu0 %v625
        %v661 = vpop.f32.mrf.mxu0
        %v662 = vadd.f32 %v520, %v661
        %v663 = vpop.f32.mrf.mxu0
        %v664 = vadd.f32 %v525, %v663
        %665 = vmatmul.bf16.gmra.mxu0 %v628
        %v666 = vpop.f32.mrf.mxu0
        %v667 = vadd.f32 %v530, %v666
        %v668 = vpop.f32.mrf.mxu0
        %v669 = vadd.f32 %v535, %v668
        %670 = vmatmul.bf16.gmra.mxu0 %v631
        %v671 = vpop.f32.mrf.mxu0
        %v672 = vadd.f32 %v540, %v671
        %v673 = vpop.f32.mrf.mxu0
        %v674 = vadd.f32 %v545, %v673
        %675 = vmatmul.bf16.gmra.mxu0 %v634
        %v676 = vpop.f32.mrf.mxu0
        %v677 = vadd.f32 %v550, %v676
        %v678 = vpop.f32.mrf.mxu0
        %v679 = vadd.f32 %v555, %v678
        %680 = vmatmul.bf16.gmra.mxu0 %v637
        %v681 = vpop.f32.mrf.mxu0
        %v682 = vadd.f32 %v560, %v681
        %v683 = vpop.f32.mrf.mxu0
        %v684 = vadd.f32 %v565, %v683
        %685 = vmatmul.bf16.gmra.mxu0 %v640
        %v686 = vpop.f32.mrf.mxu0
        %v687 = vadd.f32 %v570, %v686
        %v688 = vpop.f32.mrf.mxu0
        %v689 = vadd.f32 %v575, %v688
        %690 = vdwg.mxu0
        %v691 = vmax.f32 %v652, 0.0
        %v692 = vmax.f32 %v654, 0.0
        %v693 = vmax.f32 %v657, 0.0
        %v694 = vmax.f32 %v659, 0.0
        %v695 = vmax.f32 %v662, 0.0
        %v696 = vmax.f32 %v664, 0.0
        %v697 = vmax.f32 %v667, 0.0
        %v698 = vmax.f32 %v669, 0.0
        %v699 = vmax.f32 %v672, 0.0
        %v700 = vmax.f32 %v674, 0.0
        %v701 = vmax.f32 %v677, 0.0
        %v702 = vmax.f32 %v679, 0.0
        %v703 = vmax.f32 %v682, 0.0
        %v704 = vmax.f32 %v684, 0.0
        %v705 = vmax.f32 %v687, 0.0
        %v706 = vmax.f32 %v689, 0.0
        %v707 = vld [vmem:[#allocation5] sm:$0xf]
        %v708 = vld [vmem:[#allocation5 + $0x4] sm:$0xf]
        %v709 = vld [vmem:[#allocation5 + $0x8] sm:$0xf]
        %v710 = vld [vmem:[#allocation5 + $0xc] sm:$0xf]
        %v711 = vld [vmem:[#allocation5 + $0x10] sm:$0xf]
        %v712 = vld [vmem:[#allocation5 + $0x14] sm:$0xf]
        %v713 = vld [vmem:[#allocation5 + $0x18] sm:$0xf]
        %v714 = vld [vmem:[#allocation5 + $0x1c] sm:$0xf]
        %v715 = vld [vmem:[#allocation5 + $0x20] sm:$0xf]
        %v716 = vld [vmem:[#allocation5 + $0x24] sm:$0xf]
        %v717 = vld [vmem:[#allocation5 + $0x28] sm:$0xf]
        %v718 = vld [vmem:[#allocation5 + $0x2c] sm:$0xf]
        %v719 = vld [vmem:[#allocation5 + $0x30] sm:$0xf]
        %v720 = vld [vmem:[#allocation5 + $0x34] sm:$0xf]
        %v721 = vld [vmem:[#allocation5 + $0x38] sm:$0xf]
        %v722 = vld [vmem:[#allocation5 + $0x3c] sm:$0xf]
        %v723 = vld [vmem:[#allocation5 + $0x40] sm:$0xf]
        %v724 = vld [vmem:[#allocation5 + $0x44] sm:$0xf]
        %v725 = vld [vmem:[#allocation5 + $0x48] sm:$0xf]
        %v726 = vld [vmem:[#allocation5 + $0x4c] sm:$0xf]
        %v727 = vld [vmem:[#allocation5 + $0x50] sm:$0xf]
        %v728 = vld [vmem:[#allocation5 + $0x54] sm:$0xf]
        %v729 = vld [vmem:[#allocation5 + $0x58] sm:$0xf]
        %v730 = vld [vmem:[#allocation5 + $0x5c] sm:$0xf]
        %v731 = vld [vmem:[#allocation5 + $0x60] sm:$0xf]
        %v732 = vld [vmem:[#allocation5 + $0x64] sm:$0xf]
        %v733 = vld [vmem:[#allocation5 + $0x68] sm:$0xf]
        %v734 = vld [vmem:[#allocation5 + $0x6c] sm:$0xf]
        %v735 = vld [vmem:[#allocation5 + $0x70] sm:$0xf]
        %v736 = vld [vmem:[#allocation5 + $0x74] sm:$0xf]
        %v737 = vld [vmem:[#allocation5 + $0x78] sm:$0xf]
        %v738 = vld [vmem:[#allocation5 + $0x7c] sm:$0xf]
        %v739 = vld [vmem:[#allocation5 + $0x80] sm:$0xf]
        %v740 = vld [vmem:[#allocation5 + $0x84] sm:$0xf]
        %v741 = vld [vmem:[#allocation5 + $0x88] sm:$0xf]
        %v742 = vld [vmem:[#allocation5 + $0x8c] sm:$0xf]
        %v743 = vld [vmem:[#allocation5 + $0x90] sm:$0xf]
        %v744 = vld [vmem:[#allocation5 + $0x94] sm:$0xf]
        %v745 = vld [vmem:[#allocation5 + $0x98] sm:$0xf]
        %v746 = vld [vmem:[#allocation5 + $0x9c] sm:$0xf]
        %v747 = vld [vmem:[#allocation5 + $0xa0] sm:$0xf]
        %v748 = vld [vmem:[#allocation5 + $0xa4] sm:$0xf]
        %v749 = vld [vmem:[#allocation5 + $0xa8] sm:$0xf]
        %v750 = vld [vmem:[#allocation5 + $0xac] sm:$0xf]
        %v751 = vld [vmem:[#allocation5 + $0xb0] sm:$0xf]
        %v752 = vld [vmem:[#allocation5 + $0xb4] sm:$0xf]
        %v753 = vld [vmem:[#allocation5 + $0xb8] sm:$0xf]
        %v754 = vld [vmem:[#allocation5 + $0xbc] sm:$0xf]
        %v755 = vld [vmem:[#allocation5 + $0xc0] sm:$0xf]
        %v756 = vld [vmem:[#allocation5 + $0xc4] sm:$0xf]
        %v757 = vld [vmem:[#allocation5 + $0xc8] sm:$0xf]
        %v758 = vld [vmem:[#allocation5 + $0xcc] sm:$0xf]
        %v759 = vld [vmem:[#allocation5 + $0xd0] sm:$0xf]
        %v760 = vld [vmem:[#allocation5 + $0xd4] sm:$0xf]
        %v761 = vld [vmem:[#allocation5 + $0xd8] sm:$0xf]
        %v762 = vld [vmem:[#allocation5 + $0xdc] sm:$0xf]
        %v763 = vld [vmem:[#allocation5 + $0xe0] sm:$0xf]
        %v764 = vld [vmem:[#allocation5 + $0xe4] sm:$0xf]
        %v765 = vld [vmem:[#allocation5 + $0xe8] sm:$0xf]
        %v766 = vld [vmem:[#allocation5 + $0xec] sm:$0xf]
        %v767 = vld [vmem:[#allocation5 + $0xf0] sm:$0xf]
        %v768 = vld [vmem:[#allocation5 + $0xf4] sm:$0xf]
        %v769 = vld [vmem:[#allocation5 + $0xf8] sm:$0xf]
        %v770 = vld [vmem:[#allocation5 + $0xfc] sm:$0xf]
        %v771 = vld [vmem:[#allocation5 + $0x100] sm:$0xf]
        %v772 = vld [vmem:[#allocation5 + $0x104] sm:$0xf]
        %v773 = vld [vmem:[#allocation5 + $0x108] sm:$0xf]
        %v774 = vld [vmem:[#allocation5 + $0x10c] sm:$0xf]
        %v775 = vld [vmem:[#allocation5 + $0x110] sm:$0xf]
        %v776 = vld [vmem:[#allocation5 + $0x114] sm:$0xf]
        %v777 = vld [vmem:[#allocation5 + $0x118] sm:$0xf]
        %v778 = vld [vmem:[#allocation5 + $0x11c] sm:$0xf]
        %v779 = vld [vmem:[#allocation5 + $0x120] sm:$0xf]
        %v780 = vld [vmem:[#allocation5 + $0x124] sm:$0xf]
        %v781 = vld [vmem:[#allocation5 + $0x128] sm:$0xf]
        %v782 = vld [vmem:[#allocation5 + $0x12c] sm:$0xf]
        %v783 = vld [vmem:[#allocation5 + $0x130] sm:$0xf]
        %v784 = vld [vmem:[#allocation5 + $0x134] sm:$0xf]
        %v785 = vld [vmem:[#allocation5 + $0x138] sm:$0xf]
        %v786 = vld [vmem:[#allocation5 + $0x13c] sm:$0xf]
        %v787 = vld [vmem:[#allocation5 + $0x140] sm:$0xf]
        %v788 = vld [vmem:[#allocation5 + $0x144] sm:$0xf]
        %v789 = vld [vmem:[#allocation5 + $0x148] sm:$0xf]
        %v790 = vld [vmem:[#allocation5 + $0x14c] sm:$0xf]
        %v791 = vld [vmem:[#allocation5 + $0x150] sm:$0xf]
        %v792 = vld [vmem:[#allocation5 + $0x154] sm:$0xf]
        %v793 = vld [vmem:[#allocation5 + $0x158] sm:$0xf]
        %v794 = vld [vmem:[#allocation5 + $0x15c] sm:$0xf]
        %v795 = vld [vmem:[#allocation5 + $0x160] sm:$0xf]
        %v796 = vld [vmem:[#allocation5 + $0x164] sm:$0xf]
        %v797 = vld [vmem:[#allocation5 + $0x168] sm:$0xf]
        %v798 = vld [vmem:[#allocation5 + $0x16c] sm:$0xf]
        %v799 = vld [vmem:[#allocation5 + $0x170] sm:$0xf]
        %v800 = vld [vmem:[#allocation5 + $0x174] sm:$0xf]
        %v801 = vld [vmem:[#allocation5 + $0x178] sm:$0xf]
        %v802 = vld [vmem:[#allocation5 + $0x17c] sm:$0xf]
        %v803 = vld [vmem:[#allocation5 + $0x180] sm:$0xf]
        %v804 = vld [vmem:[#allocation5 + $0x184] sm:$0xf]
        %v805 = vld [vmem:[#allocation5 + $0x188] sm:$0xf]
        %v806 = vld [vmem:[#allocation5 + $0x18c] sm:$0xf]
        %v807 = vld [vmem:[#allocation5 + $0x190] sm:$0xf]
        %v808 = vld [vmem:[#allocation5 + $0x194] sm:$0xf]
        %v809 = vld [vmem:[#allocation5 + $0x198] sm:$0xf]
        %v810 = vld [vmem:[#allocation5 + $0x19c] sm:$0xf]
        %v811 = vld [vmem:[#allocation5 + $0x1a0] sm:$0xf]
        %v812 = vld [vmem:[#allocation5 + $0x1a4] sm:$0xf]
        %v813 = vld [vmem:[#allocation5 + $0x1a8] sm:$0xf]
        %v814 = vld [vmem:[#allocation5 + $0x1ac] sm:$0xf]
        %v815 = vld [vmem:[#allocation5 + $0x1b0] sm:$0xf]
        %v816 = vld [vmem:[#allocation5 + $0x1b4] sm:$0xf]
        %v817 = vld [vmem:[#allocation5 + $0x1b8] sm:$0xf]
        %v818 = vld [vmem:[#allocation5 + $0x1bc] sm:$0xf]
        %v819 = vld [vmem:[#allocation5 + $0x1c0] sm:$0xf]
        %v820 = vld [vmem:[#allocation5 + $0x1c4] sm:$0xf]
        %v821 = vld [vmem:[#allocation5 + $0x1c8] sm:$0xf]
        %v822 = vld [vmem:[#allocation5 + $0x1cc] sm:$0xf]
        %v823 = vld [vmem:[#allocation5 + $0x1d0] sm:$0xf]
        %v824 = vld [vmem:[#allocation5 + $0x1d4] sm:$0xf]
        %v825 = vld [vmem:[#allocation5 + $0x1d8] sm:$0xf]
        %v826 = vld [vmem:[#allocation5 + $0x1dc] sm:$0xf]
        %v827 = vld [vmem:[#allocation5 + $0x1e0] sm:$0xf]
        %v828 = vld [vmem:[#allocation5 + $0x1e4] sm:$0xf]
        %v829 = vld [vmem:[#allocation5 + $0x1e8] sm:$0xf]
        %v830 = vld [vmem:[#allocation5 + $0x1ec] sm:$0xf]
        %v831 = vld [vmem:[#allocation5 + $0x1f0] sm:$0xf]
        %v832 = vld [vmem:[#allocation5 + $0x1f4] sm:$0xf]
        %v833 = vld [vmem:[#allocation5 + $0x1f8] sm:$0xf]
        %v834 = vld [vmem:[#allocation5 + $0x1fc] sm:$0xf]
        %v835 = vpack.c.bf16 %v692, %v691
        %v836 = vpack.c.bf16 %v694, %v693
        %v837 = vpack.c.bf16 %v696, %v695
        %v838 = vpack.c.bf16 %v698, %v697
        %v839 = vpack.c.bf16 %v700, %v699
        %v840 = vpack.c.bf16 %v702, %v701
        %v841 = vpack.c.bf16 %v704, %v703
        %v842 = vpack.c.bf16 %v706, %v705
        %v971 = vunpack.c.l.b16 %v707
        %v972 = vunpack.c.l.b16 %v708
        %v973 = vunpack.c.l.b16 %v709
        %v974 = vunpack.c.l.b16 %v710
        %v975 = vunpack.c.l.b16 %v711
        %v976 = vunpack.c.l.b16 %v712
        %v977 = vunpack.c.l.b16 %v713
        %v978 = vunpack.c.l.b16 %v714
        %v979 = vunpack.c.l.b16 %v715
        %v980 = vunpack.c.l.b16 %v716
        %v981 = vunpack.c.l.b16 %v717
        %v982 = vunpack.c.l.b16 %v718
        %v983 = vunpack.c.l.b16 %v719
        %v984 = vunpack.c.l.b16 %v720
        %v985 = vunpack.c.l.b16 %v721
        %v986 = vunpack.c.l.b16 %v722
        %v987 = vunpack.c.l.b16 %v723
        %v988 = vunpack.c.l.b16 %v724
        %v989 = vunpack.c.l.b16 %v725
        %v990 = vunpack.c.l.b16 %v726
        %v991 = vunpack.c.l.b16 %v727
        %v992 = vunpack.c.l.b16 %v728
        %v993 = vunpack.c.l.b16 %v729
        %v994 = vunpack.c.l.b16 %v730
        %v995 = vunpack.c.l.b16 %v731
        %v996 = vunpack.c.l.b16 %v732
        %v997 = vunpack.c.l.b16 %v733
        %v998 = vunpack.c.l.b16 %v734
        %v999 = vunpack.c.l.b16 %v735
        %v1000 = vunpack.c.l.b16 %v736
        %v1001 = vunpack.c.l.b16 %v737
        %v1002 = vunpack.c.l.b16 %v738
        %v1003 = vunpack.c.l.b16 %v739
        %v1004 = vunpack.c.l.b16 %v740
        %v1005 = vunpack.c.l.b16 %v741
        %v1006 = vunpack.c.l.b16 %v742
        %v1007 = vunpack.c.l.b16 %v743
        %v1008 = vunpack.c.l.b16 %v744
        %v1009 = vunpack.c.l.b16 %v745
        %v1010 = vunpack.c.l.b16 %v746
        %v1011 = vunpack.c.l.b16 %v747
        %v1012 = vunpack.c.l.b16 %v748
        %v1013 = vunpack.c.l.b16 %v749
        %v1014 = vunpack.c.l.b16 %v750
        %v1015 = vunpack.c.l.b16 %v751
        %v1016 = vunpack.c.l.b16 %v752
        %v1017 = vunpack.c.l.b16 %v753
        %v1018 = vunpack.c.l.b16 %v754
        %v1019 = vunpack.c.l.b16 %v755
        %v1020 = vunpack.c.l.b16 %v756
        %v1021 = vunpack.c.l.b16 %v757
        %v1022 = vunpack.c.l.b16 %v758
        %v1023 = vunpack.c.l.b16 %v759
        %v1024 = vunpack.c.l.b16 %v760
        %v1025 = vunpack.c.l.b16 %v761
        %v1026 = vunpack.c.l.b16 %v762
        %v1027 = vunpack.c.l.b16 %v763
        %v1028 = vunpack.c.l.b16 %v764
        %v1029 = vunpack.c.l.b16 %v765
        %v1030 = vunpack.c.l.b16 %v766
        %v1031 = vunpack.c.l.b16 %v767
        %v1032 = vunpack.c.l.b16 %v768
        %v1033 = vunpack.c.l.b16 %v769
        %v1034 = vunpack.c.l.b16 %v770
        %v1035 = vunpack.c.l.b16 %v771
        %v1036 = vunpack.c.l.b16 %v772
        %v1037 = vunpack.c.l.b16 %v773
        %v1038 = vunpack.c.l.b16 %v774
        %v1039 = vunpack.c.l.b16 %v775
        %v1040 = vunpack.c.l.b16 %v776
        %v1041 = vunpack.c.l.b16 %v777
        %v1042 = vunpack.c.l.b16 %v778
        %v1043 = vunpack.c.l.b16 %v779
        %v1044 = vunpack.c.l.b16 %v780
        %v1045 = vunpack.c.l.b16 %v781
        %v1046 = vunpack.c.l.b16 %v782
        %v1047 = vunpack.c.l.b16 %v783
        %v1048 = vunpack.c.l.b16 %v784
        %v1049 = vunpack.c.l.b16 %v785
        %v1050 = vunpack.c.l.b16 %v786
        %v1051 = vunpack.c.l.b16 %v787
        %v1052 = vunpack.c.l.b16 %v788
        %v1053 = vunpack.c.l.b16 %v789
        %v1054 = vunpack.c.l.b16 %v790
        %v1055 = vunpack.c.l.b16 %v791
        %v1056 = vunpack.c.l.b16 %v792
        %v1057 = vunpack.c.l.b16 %v793
        %v1058 = vunpack.c.l.b16 %v794
        %v1059 = vunpack.c.l.b16 %v795
        %v1060 = vunpack.c.l.b16 %v796
        %v1061 = vunpack.c.l.b16 %v797
        %v1062 = vunpack.c.l.b16 %v798
        %v1063 = vunpack.c.l.b16 %v799
        %v1064 = vunpack.c.l.b16 %v800
        %v1065 = vunpack.c.l.b16 %v801
        %v1066 = vunpack.c.l.b16 %v802
        %v1067 = vunpack.c.l.b16 %v803
        %v1068 = vunpack.c.l.b16 %v804
        %v1069 = vunpack.c.l.b16 %v805
        %v1070 = vunpack.c.l.b16 %v806
        %v1071 = vunpack.c.l.b16 %v807
        %v1072 = vunpack.c.l.b16 %v808
        %v1073 = vunpack.c.l.b16 %v809
        %v1074 = vunpack.c.l.b16 %v810
        %v1075 = vunpack.c.l.b16 %v811
        %v1076 = vunpack.c.l.b16 %v812
        %v1077 = vunpack.c.l.b16 %v813
        %v1078 = vunpack.c.l.b16 %v814
        %v1079 = vunpack.c.l.b16 %v815
        %v1080 = vunpack.c.l.b16 %v816
        %v1081 = vunpack.c.l.b16 %v817
        %v1082 = vunpack.c.l.b16 %v818
        %v1083 = vunpack.c.l.b16 %v819
        %v1084 = vunpack.c.l.b16 %v820
        %v1085 = vunpack.c.l.b16 %v821
        %v1086 = vunpack.c.l.b16 %v822
        %v1087 = vunpack.c.l.b16 %v823
        %v1088 = vunpack.c.l.b16 %v824
        %v1089 = vunpack.c.l.b16 %v825
        %v1090 = vunpack.c.l.b16 %v826
        %v1091 = vunpack.c.l.b16 %v827
        %v1092 = vunpack.c.l.b16 %v828
        %v1093 = vunpack.c.l.b16 %v829
        %v1094 = vunpack.c.l.b16 %v830
        %v1095 = vunpack.c.l.b16 %v831
        %v1096 = vunpack.c.l.b16 %v832
        %v1097 = vunpack.c.l.b16 %v833
        %v1098 = vunpack.c.l.b16 %v834
        %v1099 = vpack.c.b16 %v972, %v971
        %v1100 = vpack.c.b16 %v974, %v973
        %v1101 = vpack.c.b16 %v976, %v975
        %v1102 = vpack.c.b16 %v978, %v977
        %v1103 = vpack.c.b16 %v980, %v979
        %v1104 = vpack.c.b16 %v982, %v981
        %v1105 = vpack.c.b16 %v984, %v983
        %v1106 = vpack.c.b16 %v986, %v985
        %v1107 = vpack.c.b16 %v988, %v987
        %v1108 = vpack.c.b16 %v990, %v989
        %v1109 = vpack.c.b16 %v992, %v991
        %v1110 = vpack.c.b16 %v994, %v993
        %v1111 = vpack.c.b16 %v996, %v995
        %v1112 = vpack.c.b16 %v998, %v997
        %v1113 = vpack.c.b16 %v1000, %v999
        %v1114 = vpack.c.b16 %v1002, %v1001
        %v1115 = vpack.c.b16 %v1004, %v1003
        %v1116 = vpack.c.b16 %v1006, %v1005
        %v1117 = vpack.c.b16 %v1008, %v1007
        %v1118 = vpack.c.b16 %v1010, %v1009
        %v1119 = vpack.c.b16 %v1012, %v1011
        %v1120 = vpack.c.b16 %v1014, %v1013
        %v1121 = vpack.c.b16 %v1016, %v1015
        %v1122 = vpack.c.b16 %v1018, %v1017
        %v1123 = vpack.c.b16 %v1020, %v1019
        %v1124 = vpack.c.b16 %v1022, %v1021
        %v1125 = vpack.c.b16 %v1024, %v1023
        %v1126 = vpack.c.b16 %v1026, %v1025
        %v1127 = vpack.c.b16 %v1028, %v1027
        %v1128 = vpack.c.b16 %v1030, %v1029
        %v1129 = vpack.c.b16 %v1032, %v1031
        %v1130 = vpack.c.b16 %v1034, %v1033
        %v1131 = vpack.c.b16 %v1036, %v1035
        %v1132 = vpack.c.b16 %v1038, %v1037
        %v1133 = vpack.c.b16 %v1040, %v1039
        %v1134 = vpack.c.b16 %v1042, %v1041
        %v1135 = vpack.c.b16 %v1044, %v1043
        %v1136 = vpack.c.b16 %v1046, %v1045
        %v1137 = vpack.c.b16 %v1048, %v1047
        %v1138 = vpack.c.b16 %v1050, %v1049
        %v1139 = vpack.c.b16 %v1052, %v1051
        %v1140 = vpack.c.b16 %v1054, %v1053
        %v1141 = vpack.c.b16 %v1056, %v1055
        %v1142 = vpack.c.b16 %v1058, %v1057
        %v1143 = vpack.c.b16 %v1060, %v1059
        %v1144 = vpack.c.b16 %v1062, %v1061
        %v1145 = vpack.c.b16 %v1064, %v1063
        %v1146 = vpack.c.b16 %v1066, %v1065
        %v1147 = vpack.c.b16 %v1068, %v1067
        %v1148 = vpack.c.b16 %v1070, %v1069
        %v1149 = vpack.c.b16 %v1072, %v1071
        %v1150 = vpack.c.b16 %v1074, %v1073
        %v1151 = vpack.c.b16 %v1076, %v1075
        %v1152 = vpack.c.b16 %v1078, %v1077
        %v1153 = vpack.c.b16 %v1080, %v1079
        %v1154 = vpack.c.b16 %v1082, %v1081
        %v1155 = vpack.c.b16 %v1084, %v1083
        %v1156 = vpack.c.b16 %v1086, %v1085
        %v1157 = vpack.c.b16 %v1088, %v1087
        %v1158 = vpack.c.b16 %v1090, %v1089
        %v1159 = vpack.c.b16 %v1092, %v1091
        %v1160 = vpack.c.b16 %v1094, %v1093
        %v1161 = vpack.c.b16 %v1096, %v1095
        %v1162 = vpack.c.b16 %v1098, %v1097
        %1227 = vmatpush.bf16.msra.mxu0 %v842
        %1228 = vmatpush.bf16.msra.mxu0 %v841
        %1229 = vmatpush.bf16.msra.mxu0 %v840
        %1230 = vmatpush.bf16.msra.mxu0 %v839
        %1231 = vmatpush.bf16.msra.mxu0 %v838
        %1232 = vmatpush.bf16.msra.mxu0 %v837
        %1233 = vmatpush.bf16.msra.mxu0 %v836
        %1234 = vmatpush.bf16.msra.mxu0 %v835
        %1235 = vmatmul.bf16.gmra.mxu0 %v1099
        %v1236 = vpop.f32.mrf.mxu0
        %v1237 = vadd.f32 0.0, %v1236
        %v1238 = vpop.f32.mrf.mxu0
        %v1239 = vadd.f32 0.0, %v1238
        %1240 = vmatmul.bf16.gmra.mxu0 %v1100
        %v1241 = vpop.f32.mrf.mxu0
        %v1242 = vadd.f32 0.0, %v1241
        %v1243 = vpop.f32.mrf.mxu0
        %v1244 = vadd.f32 0.0, %v1243
        %1245 = vmatmul.bf16.gmra.mxu0 %v1101
        %v1246 = vpop.f32.mrf.mxu0
        %v1247 = vadd.f32 0.0, %v1246
        %v1248 = vpop.f32.mrf.mxu0
        %v1249 = vadd.f32 0.0, %v1248
        %1250 = vmatmul.bf16.gmra.mxu0 %v1102
        %v1251 = vpop.f32.mrf.mxu0
        %v1252 = vadd.f32 0.0, %v1251
        %v1253 = vpop.f32.mrf.mxu0
        %v1254 = vadd.f32 0.0, %v1253
        %1255 = vmatmul.bf16.gmra.mxu0 %v1103
        %v1256 = vpop.f32.mrf.mxu0
        %v1257 = vadd.f32 0.0, %v1256
        %v1258 = vpop.f32.mrf.mxu0
        %v1259 = vadd.f32 0.0, %v1258
        %1260 = vmatmul.bf16.gmra.mxu0 %v1104
        %v1261 = vpop.f32.mrf.mxu0
        %v1262 = vadd.f32 0.0, %v1261
        %v1263 = vpop.f32.mrf.mxu0
        %v1264 = vadd.f32 0.0, %v1263
        %1265 = vmatmul.bf16.gmra.mxu0 %v1105
        %v1266 = vpop.f32.mrf.mxu0
        %v1267 = vadd.f32 0.0, %v1266
        %v1268 = vpop.f32.mrf.mxu0
        %v1269 = vadd.f32 0.0, %v1268
        %1270 = vmatmul.bf16.gmra.mxu0 %v1106
        %v1271 = vpop.f32.mrf.mxu0
        %v1272 = vadd.f32 0.0, %v1271
        %v1273 = vpop.f32.mrf.mxu0
        %v1274 = vadd.f32 0.0, %v1273
        %1275 = vmatmul.bf16.gmra.mxu0 %v1107
        %v1276 = vpop.f32.mrf.mxu0
        %v1277 = vadd.f32 0.0, %v1276
        %v1278 = vpop.f32.mrf.mxu0
        %v1279 = vadd.f32 0.0, %v1278
        %1280 = vmatmul.bf16.gmra.mxu0 %v1108
        %v1281 = vpop.f32.mrf.mxu0
        %v1282 = vadd.f32 0.0, %v1281
        %v1283 = vpop.f32.mrf.mxu0
        %v1284 = vadd.f32 0.0, %v1283
        %1285 = vmatmul.bf16.gmra.mxu0 %v1109
        %v1286 = vpop.f32.mrf.mxu0
        %v1287 = vadd.f32 0.0, %v1286
        %v1288 = vpop.f32.mrf.mxu0
        %v1289 = vadd.f32 0.0, %v1288
        %1290 = vmatmul.bf16.gmra.mxu0 %v1110
        %v1291 = vpop.f32.mrf.mxu0
        %v1292 = vadd.f32 0.0, %v1291
        %v1293 = vpop.f32.mrf.mxu0
        %v1294 = vadd.f32 0.0, %v1293
        %1295 = vmatmul.bf16.gmra.mxu0 %v1111
        %v1296 = vpop.f32.mrf.mxu0
        %v1297 = vadd.f32 0.0, %v1296
        %v1298 = vpop.f32.mrf.mxu0
        %v1299 = vadd.f32 0.0, %v1298
        %1300 = vmatmul.bf16.gmra.mxu0 %v1112
        %v1301 = vpop.f32.mrf.mxu0
        %v1302 = vadd.f32 0.0, %v1301
        %v1303 = vpop.f32.mrf.mxu0
        %v1304 = vadd.f32 0.0, %v1303
        %1305 = vmatmul.bf16.gmra.mxu0 %v1113
        %v1306 = vpop.f32.mrf.mxu0
        %v1307 = vadd.f32 0.0, %v1306
        %v1308 = vpop.f32.mrf.mxu0
        %v1309 = vadd.f32 0.0, %v1308
        %1310 = vmatmul.bf16.gmra.mxu0 %v1114
        %v1311 = vpop.f32.mrf.mxu0
        %v1312 = vadd.f32 0.0, %v1311
        %v1313 = vpop.f32.mrf.mxu0
        %v1314 = vadd.f32 0.0, %v1313
        %1315 = vmatmul.bf16.gmra.mxu0 %v1115
        %v1316 = vpop.f32.mrf.mxu0
        %v1317 = vadd.f32 0.0, %v1316
        %v1318 = vpop.f32.mrf.mxu0
        %v1319 = vadd.f32 0.0, %v1318
        %1320 = vmatmul.bf16.gmra.mxu0 %v1116
        %v1321 = vpop.f32.mrf.mxu0
        %v1322 = vadd.f32 0.0, %v1321
        %v1323 = vpop.f32.mrf.mxu0
        %v1324 = vadd.f32 0.0, %v1323
        %1325 = vmatmul.bf16.gmra.mxu0 %v1117
        %v1326 = vpop.f32.mrf.mxu0
        %v1327 = vadd.f32 0.0, %v1326
        %v1328 = vpop.f32.mrf.mxu0
        %v1329 = vadd.f32 0.0, %v1328
        %1330 = vmatmul.bf16.gmra.mxu0 %v1118
        %v1331 = vpop.f32.mrf.mxu0
        %v1332 = vadd.f32 0.0, %v1331
        %v1333 = vpop.f32.mrf.mxu0
        %v1334 = vadd.f32 0.0, %v1333
        %1335 = vmatmul.bf16.gmra.mxu0 %v1119
        %v1336 = vpop.f32.mrf.mxu0
        %v1337 = vadd.f32 0.0, %v1336
        %v1338 = vpop.f32.mrf.mxu0
        %v1339 = vadd.f32 0.0, %v1338
        %1340 = vmatmul.bf16.gmra.mxu0 %v1120
        %v1341 = vpop.f32.mrf.mxu0
        %v1342 = vadd.f32 0.0, %v1341
        %v1343 = vpop.f32.mrf.mxu0
        %v1344 = vadd.f32 0.0, %v1343
        %1345 = vmatmul.bf16.gmra.mxu0 %v1121
        %v1346 = vpop.f32.mrf.mxu0
        %v1347 = vadd.f32 0.0, %v1346
        %v1348 = vpop.f32.mrf.mxu0
        %v1349 = vadd.f32 0.0, %v1348
        %1350 = vmatmul.bf16.gmra.mxu0 %v1122
        %v1351 = vpop.f32.mrf.mxu0
        %v1352 = vadd.f32 0.0, %v1351
        %v1353 = vpop.f32.mrf.mxu0
        %v1354 = vadd.f32 0.0, %v1353
        %1355 = vmatmul.bf16.gmra.mxu0 %v1123
        %v1356 = vpop.f32.mrf.mxu0
        %v1357 = vadd.f32 0.0, %v1356
        %v1358 = vpop.f32.mrf.mxu0
        %v1359 = vadd.f32 0.0, %v1358
        %1360 = vmatmul.bf16.gmra.mxu0 %v1124
        %v1361 = vpop.f32.mrf.mxu0
        %v1362 = vadd.f32 0.0, %v1361
        %v1363 = vpop.f32.mrf.mxu0
        %v1364 = vadd.f32 0.0, %v1363
        %1365 = vmatmul.bf16.gmra.mxu0 %v1125
        %v1366 = vpop.f32.mrf.mxu0
        %v1367 = vadd.f32 0.0, %v1366
        %v1368 = vpop.f32.mrf.mxu0
        %v1369 = vadd.f32 0.0, %v1368
        %1370 = vmatmul.bf16.gmra.mxu0 %v1126
        %v1371 = vpop.f32.mrf.mxu0
        %v1372 = vadd.f32 0.0, %v1371
        %v1373 = vpop.f32.mrf.mxu0
        %v1374 = vadd.f32 0.0, %v1373
        %1375 = vmatmul.bf16.gmra.mxu0 %v1127
        %v1376 = vpop.f32.mrf.mxu0
        %v1377 = vadd.f32 0.0, %v1376
        %v1378 = vpop.f32.mrf.mxu0
        %v1379 = vadd.f32 0.0, %v1378
        %1380 = vmatmul.bf16.gmra.mxu0 %v1128
        %v1381 = vpop.f32.mrf.mxu0
        %v1382 = vadd.f32 0.0, %v1381
        %v1383 = vpop.f32.mrf.mxu0
        %v1384 = vadd.f32 0.0, %v1383
        %1385 = vmatmul.bf16.gmra.mxu0 %v1129
        %v1386 = vpop.f32.mrf.mxu0
        %v1387 = vadd.f32 0.0, %v1386
        %v1388 = vpop.f32.mrf.mxu0
        %v1389 = vadd.f32 0.0, %v1388
        %1390 = vmatmul.bf16.gmra.mxu0 %v1130
        %v1391 = vpop.f32.mrf.mxu0
        %v1392 = vadd.f32 0.0, %v1391
        %v1393 = vpop.f32.mrf.mxu0
        %v1394 = vadd.f32 0.0, %v1393
        %1395 = vmatmul.bf16.gmra.mxu0 %v1131
        %v1396 = vpop.f32.mrf.mxu0
        %v1397 = vadd.f32 0.0, %v1396
        %v1398 = vpop.f32.mrf.mxu0
        %v1399 = vadd.f32 0.0, %v1398
        %1400 = vmatmul.bf16.gmra.mxu0 %v1132
        %v1401 = vpop.f32.mrf.mxu0
        %v1402 = vadd.f32 0.0, %v1401
        %v1403 = vpop.f32.mrf.mxu0
        %v1404 = vadd.f32 0.0, %v1403
        %1405 = vmatmul.bf16.gmra.mxu0 %v1133
        %v1406 = vpop.f32.mrf.mxu0
        %v1407 = vadd.f32 0.0, %v1406
        %v1408 = vpop.f32.mrf.mxu0
        %v1409 = vadd.f32 0.0, %v1408
        %1410 = vmatmul.bf16.gmra.mxu0 %v1134
        %v1411 = vpop.f32.mrf.mxu0
        %v1412 = vadd.f32 0.0, %v1411
        %v1413 = vpop.f32.mrf.mxu0
        %v1414 = vadd.f32 0.0, %v1413
        %1415 = vmatmul.bf16.gmra.mxu0 %v1135
        %v1416 = vpop.f32.mrf.mxu0
        %v1417 = vadd.f32 0.0, %v1416
        %v1418 = vpop.f32.mrf.mxu0
        %v1419 = vadd.f32 0.0, %v1418
        %1420 = vmatmul.bf16.gmra.mxu0 %v1136
        %v1421 = vpop.f32.mrf.mxu0
        %v1422 = vadd.f32 0.0, %v1421
        %v1423 = vpop.f32.mrf.mxu0
        %v1424 = vadd.f32 0.0, %v1423
        %1425 = vmatmul.bf16.gmra.mxu0 %v1137
        %v1426 = vpop.f32.mrf.mxu0
        %v1427 = vadd.f32 0.0, %v1426
        %v1428 = vpop.f32.mrf.mxu0
        %v1429 = vadd.f32 0.0, %v1428
        %1430 = vmatmul.bf16.gmra.mxu0 %v1138
        %v1431 = vpop.f32.mrf.mxu0
        %v1432 = vadd.f32 0.0, %v1431
        %v1433 = vpop.f32.mrf.mxu0
        %v1434 = vadd.f32 0.0, %v1433
        %1435 = vmatmul.bf16.gmra.mxu0 %v1139
        %v1436 = vpop.f32.mrf.mxu0
        %v1437 = vadd.f32 0.0, %v1436
        %v1438 = vpop.f32.mrf.mxu0
        %v1439 = vadd.f32 0.0, %v1438
        %1440 = vmatmul.bf16.gmra.mxu0 %v1140
        %v1441 = vpop.f32.mrf.mxu0
        %v1442 = vadd.f32 0.0, %v1441
        %v1443 = vpop.f32.mrf.mxu0
        %v1444 = vadd.f32 0.0, %v1443
        %1445 = vmatmul.bf16.gmra.mxu0 %v1141
        %v1446 = vpop.f32.mrf.mxu0
        %v1447 = vadd.f32 0.0, %v1446
        %v1448 = vpop.f32.mrf.mxu0
        %v1449 = vadd.f32 0.0, %v1448
        %1450 = vmatmul.bf16.gmra.mxu0 %v1142
        %v1451 = vpop.f32.mrf.mxu0
        %v1452 = vadd.f32 0.0, %v1451
        %v1453 = vpop.f32.mrf.mxu0
        %v1454 = vadd.f32 0.0, %v1453
        %1455 = vmatmul.bf16.gmra.mxu0 %v1143
        %v1456 = vpop.f32.mrf.mxu0
        %v1457 = vadd.f32 0.0, %v1456
        %v1458 = vpop.f32.mrf.mxu0
        %v1459 = vadd.f32 0.0, %v1458
        %1460 = vmatmul.bf16.gmra.mxu0 %v1144
        %v1461 = vpop.f32.mrf.mxu0
        %v1462 = vadd.f32 0.0, %v1461
        %v1463 = vpop.f32.mrf.mxu0
        %v1464 = vadd.f32 0.0, %v1463
        %1465 = vmatmul.bf16.gmra.mxu0 %v1145
        %v1466 = vpop.f32.mrf.mxu0
        %v1467 = vadd.f32 0.0, %v1466
        %v1468 = vpop.f32.mrf.mxu0
        %v1469 = vadd.f32 0.0, %v1468
        %1470 = vmatmul.bf16.gmra.mxu0 %v1146
        %v1471 = vpop.f32.mrf.mxu0
        %v1472 = vadd.f32 0.0, %v1471
        %v1473 = vpop.f32.mrf.mxu0
        %v1474 = vadd.f32 0.0, %v1473
        %1475 = vmatmul.bf16.gmra.mxu0 %v1147
        %v1476 = vpop.f32.mrf.mxu0
        %v1477 = vadd.f32 0.0, %v1476
        %v1478 = vpop.f32.mrf.mxu0
        %v1479 = vadd.f32 0.0, %v1478
        %1480 = vmatmul.bf16.gmra.mxu0 %v1148
        %v1481 = vpop.f32.mrf.mxu0
        %v1482 = vadd.f32 0.0, %v1481
        %v1483 = vpop.f32.mrf.mxu0
        %v1484 = vadd.f32 0.0, %v1483
        %1485 = vmatmul.bf16.gmra.mxu0 %v1149
        %v1486 = vpop.f32.mrf.mxu0
        %v1487 = vadd.f32 0.0, %v1486
        %v1488 = vpop.f32.mrf.mxu0
        %v1489 = vadd.f32 0.0, %v1488
        %1490 = vmatmul.bf16.gmra.mxu0 %v1150
        %v1491 = vpop.f32.mrf.mxu0
        %v1492 = vadd.f32 0.0, %v1491
        %v1493 = vpop.f32.mrf.mxu0
        %v1494 = vadd.f32 0.0, %v1493
        %1495 = vmatmul.bf16.gmra.mxu0 %v1151
        %v1496 = vpop.f32.mrf.mxu0
        %v1497 = vadd.f32 0.0, %v1496
        %v1498 = vpop.f32.mrf.mxu0
        %v1499 = vadd.f32 0.0, %v1498
        %1500 = vmatmul.bf16.gmra.mxu0 %v1152
        %v1501 = vpop.f32.mrf.mxu0
        %v1502 = vadd.f32 0.0, %v1501
        %v1503 = vpop.f32.mrf.mxu0
        %v1504 = vadd.f32 0.0, %v1503
        %1505 = vmatmul.bf16.gmra.mxu0 %v1153
        %v1506 = vpop.f32.mrf.mxu0
        %v1507 = vadd.f32 0.0, %v1506
        %v1508 = vpop.f32.mrf.mxu0
        %v1509 = vadd.f32 0.0, %v1508
        %1510 = vmatmul.bf16.gmra.mxu0 %v1154
        %v1511 = vpop.f32.mrf.mxu0
        %v1512 = vadd.f32 0.0, %v1511
        %v1513 = vpop.f32.mrf.mxu0
        %v1514 = vadd.f32 0.0, %v1513
        %1515 = vmatmul.bf16.gmra.mxu0 %v1155
        %v1516 = vpop.f32.mrf.mxu0
        %v1517 = vadd.f32 0.0, %v1516
        %v1518 = vpop.f32.mrf.mxu0
        %v1519 = vadd.f32 0.0, %v1518
        %1520 = vmatmul.bf16.gmra.mxu0 %v1156
        %v1521 = vpop.f32.mrf.mxu0
        %v1522 = vadd.f32 0.0, %v1521
        %v1523 = vpop.f32.mrf.mxu0
        %v1524 = vadd.f32 0.0, %v1523
        %1525 = vmatmul.bf16.gmra.mxu0 %v1157
        %v1526 = vpop.f32.mrf.mxu0
        %v1527 = vadd.f32 0.0, %v1526
        %v1528 = vpop.f32.mrf.mxu0
        %v1529 = vadd.f32 0.0, %v1528
        %1530 = vmatmul.bf16.gmra.mxu0 %v1158
        %v1531 = vpop.f32.mrf.mxu0
        %v1532 = vadd.f32 0.0, %v1531
        %v1533 = vpop.f32.mrf.mxu0
        %v1534 = vadd.f32 0.0, %v1533
        %1535 = vmatmul.bf16.gmra.mxu0 %v1159
        %v1536 = vpop.f32.mrf.mxu0
        %v1537 = vadd.f32 0.0, %v1536
        %v1538 = vpop.f32.mrf.mxu0
        %v1539 = vadd.f32 0.0, %v1538
        %1540 = vmatmul.bf16.gmra.mxu0 %v1160
        %v1541 = vpop.f32.mrf.mxu0
        %v1542 = vadd.f32 0.0, %v1541
        %v1543 = vpop.f32.mrf.mxu0
        %v1544 = vadd.f32 0.0, %v1543
        %1545 = vmatmul.bf16.gmra.mxu0 %v1161
        %v1546 = vpop.f32.mrf.mxu0
        %v1547 = vadd.f32 0.0, %v1546
        %v1548 = vpop.f32.mrf.mxu0
        %v1549 = vadd.f32 0.0, %v1548
        %1550 = vmatmul.bf16.gmra.mxu0 %v1162
        %v1551 = vpop.f32.mrf.mxu0
        %v1552 = vadd.f32 0.0, %v1551
        %v1553 = vpop.f32.mrf.mxu0
        %v1554 = vadd.f32 0.0, %v1553
        %1555 = vdwg.mxu0
        %v1556 = vlaneseq
        %v1557 = vand.u32 %v1556, 127
        %s1558 = smul.u32 %s27, 2
        %s1559 = sadd.s32 %s1558, %s28
        %s1560 = smul.u32 %s1559, 128
        %v1561 = vstv %s1560
        %v1562 = vadd.s32 %v1561, %v1557
        %vm1563 = vcmp.lt.s32.totalorder %v1562, 448
        %v1564 = vsel %vm1563, 1, 0
        %vm1565 = vcmp.eq.s32.totalorder %v1564, 1
        %v1566 = vsel %vm1565, %v1237, -inf
        %v1567 = vsel %vm1565, %v1239, -inf
        %v1568 = vsel %vm1565, %v1242, -inf
        %v1569 = vsel %vm1565, %v1244, -inf
        %v1570 = vsel %vm1565, %v1247, -inf
        %v1571 = vsel %vm1565, %v1249, -inf
        %v1572 = vsel %vm1565, %v1252, -inf
        %v1573 = vsel %vm1565, %v1254, -inf
        %v1574 = vsel %vm1565, %v1257, -inf
        %v1575 = vsel %vm1565, %v1259, -inf
        %v1576 = vsel %vm1565, %v1262, -inf
        %v1577 = vsel %vm1565, %v1264, -inf
        %v1578 = vsel %vm1565, %v1267, -inf
        %v1579 = vsel %vm1565, %v1269, -inf
        %v1580 = vsel %vm1565, %v1272, -inf
        %v1581 = vsel %vm1565, %v1274, -inf
        %v1582 = vsel %vm1565, %v1277, -inf
        %v1583 = vsel %vm1565, %v1279, -inf
        %v1584 = vsel %vm1565, %v1282, -inf
        %v1585 = vsel %vm1565, %v1284, -inf
        %v1586 = vsel %vm1565, %v1287, -inf
        %v1587 = vsel %vm1565, %v1289, -inf
        %v1588 = vsel %vm1565, %v1292, -inf
        %v1589 = vsel %vm1565, %v1294, -inf
        %v1590 = vsel %vm1565, %v1297, -inf
        %v1591 = vsel %vm1565, %v1299, -inf
        %v1592 = vsel %vm1565, %v1302, -inf
        %v1593 = vsel %vm1565, %v1304, -inf
        %v1594 = vsel %vm1565, %v1307, -inf
        %v1595 = vsel %vm1565, %v1309, -inf
        %v1596 = vsel %vm1565, %v1312, -inf
        %v1597 = vsel %vm1565, %v1314, -inf
        %v1598 = vsel %vm1565, %v1317, -inf
        %v1599 = vsel %vm1565, %v1319, -inf
        %v1600 = vsel %vm1565, %v1322, -inf
        %v1601 = vsel %vm1565, %v1324, -inf
        %v1602 = vsel %vm1565, %v1327, -inf
        %v1603 = vsel %vm1565, %v1329, -inf
        %v1604 = vsel %vm1565, %v1332, -inf
        %v1605 = vsel %vm1565, %v1334, -inf
        %v1606 = vsel %vm1565, %v1337, -inf
        %v1607 = vsel %vm1565, %v1339, -inf
        %v1608 = vsel %vm1565, %v1342, -inf
        %v1609 = vsel %vm1565, %v1344, -inf
        %v1610 = vsel %vm1565, %v1347, -inf
        %v1611 = vsel %vm1565, %v1349, -inf
        %v1612 = vsel %vm1565, %v1352, -inf
        %v1613 = vsel %vm1565, %v1354, -inf
        %v1614 = vsel %vm1565, %v1357, -inf
        %v1615 = vsel %vm1565, %v1359, -inf
        %v1616 = vsel %vm1565, %v1362, -inf
        %v1617 = vsel %vm1565, %v1364, -inf
        %v1618 = vsel %vm1565, %v1367, -inf
        %v1619 = vsel %vm1565, %v1369, -inf
        %v1620 = vsel %vm1565, %v1372, -inf
        %v1621 = vsel %vm1565, %v1374, -inf
        %v1622 = vsel %vm1565, %v1377, -inf
        %v1623 = vsel %vm1565, %v1379, -inf
        %v1624 = vsel %vm1565, %v1382, -inf
        %v1625 = vsel %vm1565, %v1384, -inf
        %v1626 = vsel %vm1565, %v1387, -inf
        %v1627 = vsel %vm1565, %v1389, -inf
        %v1628 = vsel %vm1565, %v1392, -inf
        %v1629 = vsel %vm1565, %v1394, -inf
        %v1630 = vsel %vm1565, %v1397, -inf
        %v1631 = vsel %vm1565, %v1399, -inf
        %v1632 = vsel %vm1565, %v1402, -inf
        %v1633 = vsel %vm1565, %v1404, -inf
        %v1634 = vsel %vm1565, %v1407, -inf
        %v1635 = vsel %vm1565, %v1409, -inf
        %v1636 = vsel %vm1565, %v1412, -inf
        %v1637 = vsel %vm1565, %v1414, -inf
        %v1638 = vsel %vm1565, %v1417, -inf
        %v1639 = vsel %vm1565, %v1419, -inf
        %v1640 = vsel %vm1565, %v1422, -inf
        %v1641 = vsel %vm1565, %v1424, -inf
        %v1642 = vsel %vm1565, %v1427, -inf
        %v1643 = vsel %vm1565, %v1429, -inf
        %v1644 = vsel %vm1565, %v1432, -inf
        %v1645 = vsel %vm1565, %v1434, -inf
        %v1646 = vsel %vm1565, %v1437, -inf
        %v1647 = vsel %vm1565, %v1439, -inf
        %v1648 = vsel %vm1565, %v1442, -inf
        %v1649 = vsel %vm1565, %v1444, -inf
        %v1650 = vsel %vm1565, %v1447, -inf
        %v1651 = vsel %vm1565, %v1449, -inf
        %v1652 = vsel %vm1565, %v1452, -inf
        %v1653 = vsel %vm1565, %v1454, -inf
        %v1654 = vsel %vm1565, %v1457, -inf
        %v1655 = vsel %vm1565, %v1459, -inf
        %v1656 = vsel %vm1565, %v1462, -inf
        %v1657 = vsel %vm1565, %v1464, -inf
        %v1658 = vsel %vm1565, %v1467, -inf
        %v1659 = vsel %vm1565, %v1469, -inf
        %v1660 = vsel %vm1565, %v1472, -inf
        %v1661 = vsel %vm1565, %v1474, -inf
        %v1662 = vsel %vm1565, %v1477, -inf
        %v1663 = vsel %vm1565, %v1479, -inf
        %v1664 = vsel %vm1565, %v1482, -inf
        %v1665 = vsel %vm1565, %v1484, -inf
        %v1666 = vsel %vm1565, %v1487, -inf
        %v1667 = vsel %vm1565, %v1489, -inf
        %v1668 = vsel %vm1565, %v1492, -inf
        %v1669 = vsel %vm1565, %v1494, -inf
        %v1670 = vsel %vm1565, %v1497, -inf
        %v1671 = vsel %vm1565, %v1499, -inf
        %v1672 = vsel %vm1565, %v1502, -inf
        %v1673 = vsel %vm1565, %v1504, -inf
        %v1674 = vsel %vm1565, %v1507, -inf
        %v1675 = vsel %vm1565, %v1509, -inf
        %v1676 = vsel %vm1565, %v1512, -inf
        %v1677 = vsel %vm1565, %v1514, -inf
        %v1678 = vsel %vm1565, %v1517, -inf
        %v1679 = vsel %vm1565, %v1519, -inf
        %v1680 = vsel %vm1565, %v1522, -inf
        %v1681 = vsel %vm1565, %v1524, -inf
        %v1682 = vsel %vm1565, %v1527, -inf
        %v1683 = vsel %vm1565, %v1529, -inf
        %v1684 = vsel %vm1565, %v1532, -inf
        %v1685 = vsel %vm1565, %v1534, -inf
        %v1686 = vsel %vm1565, %v1537, -inf
        %v1687 = vsel %vm1565, %v1539, -inf
        %v1688 = vsel %vm1565, %v1542, -inf
        %v1689 = vsel %vm1565, %v1544, -inf
        %v1690 = vsel %vm1565, %v1547, -inf
        %v1691 = vsel %vm1565, %v1549, -inf
        %v1692 = vsel %vm1565, %v1552, -inf
        %v1693 = vsel %vm1565, %v1554, -inf
        %1694 = vmax.xlane.f32.xlu0 %v1566
        %v1695 = vpop.xlane.xlu0 %1694
        %1696 = vmax.xlane.f32.xlu0 %v1567
        %v1697 = vpop.xlane.xlu0 %1696
        %1698 = vmax.xlane.f32.xlu0 %v1568
        %v1699 = vpop.xlane.xlu0 %1698
        %1700 = vmax.xlane.f32.xlu0 %v1569
        %v1701 = vpop.xlane.xlu0 %1700
        %1702 = vmax.xlane.f32.xlu0 %v1570
        %v1703 = vpop.xlane.xlu0 %1702
        %1704 = vmax.xlane.f32.xlu0 %v1571
        %v1705 = vpop.xlane.xlu0 %1704
        %1706 = vmax.xlane.f32.xlu0 %v1572
        %v1707 = vpop.xlane.xlu0 %1706
        %1708 = vmax.xlane.f32.xlu0 %v1573
        %v1709 = vpop.xlane.xlu0 %1708
        %1710 = vmax.xlane.f32.xlu0 %v1574
        %v1711 = vpop.xlane.xlu0 %1710
        %1712 = vmax.xlane.f32.xlu0 %v1575
        %v1713 = vpop.xlane.xlu0 %1712
        %1714 = vmax.xlane.f32.xlu0 %v1576
        %v1715 = vpop.xlane.xlu0 %1714
        %1716 = vmax.xlane.f32.xlu0 %v1577
        %v1717 = vpop.xlane.xlu0 %1716
        %1718 = vmax.xlane.f32.xlu0 %v1578
        %v1719 = vpop.xlane.xlu0 %1718
        %1720 = vmax.xlane.f32.xlu0 %v1579
        %v1721 = vpop.xlane.xlu0 %1720
        %1722 = vmax.xlane.f32.xlu0 %v1580
        %v1723 = vpop.xlane.xlu0 %1722
        %1724 = vmax.xlane.f32.xlu0 %v1581
        %v1725 = vpop.xlane.xlu0 %1724
        %1726 = vmax.xlane.f32.xlu0 %v1582
        %v1727 = vpop.xlane.xlu0 %1726
        %1728 = vmax.xlane.f32.xlu0 %v1583
        %v1729 = vpop.xlane.xlu0 %1728
        %1730 = vmax.xlane.f32.xlu0 %v1584
        %v1731 = vpop.xlane.xlu0 %1730
        %1732 = vmax.xlane.f32.xlu0 %v1585
        %v1733 = vpop.xlane.xlu0 %1732
        %1734 = vmax.xlane.f32.xlu0 %v1586
        %v1735 = vpop.xlane.xlu0 %1734
        %1736 = vmax.xlane.f32.xlu0 %v1587
        %v1737 = vpop.xlane.xlu0 %1736
        %1738 = vmax.xlane.f32.xlu0 %v1588
        %v1739 = vpop.xlane.xlu0 %1738
        %1740 = vmax.xlane.f32.xlu0 %v1589
        %v1741 = vpop.xlane.xlu0 %1740
        %1742 = vmax.xlane.f32.xlu0 %v1590
        %v1743 = vpop.xlane.xlu0 %1742
        %1744 = vmax.xlane.f32.xlu0 %v1591
        %v1745 = vpop.xlane.xlu0 %1744
        %1746 = vmax.xlane.f32.xlu0 %v1592
        %v1747 = vpop.xlane.xlu0 %1746
        %1748 = vmax.xlane.f32.xlu0 %v1593
        %v1749 = vpop.xlane.xlu0 %1748
        %1750 = vmax.xlane.f32.xlu0 %v1594
        %v1751 = vpop.xlane.xlu0 %1750
        %1752 = vmax.xlane.f32.xlu0 %v1595
        %v1753 = vpop.xlane.xlu0 %1752
        %1754 = vmax.xlane.f32.xlu0 %v1596
        %v1755 = vpop.xlane.xlu0 %1754
        %1756 = vmax.xlane.f32.xlu0 %v1597
        %v1757 = vpop.xlane.xlu0 %1756
        %1758 = vmax.xlane.f32.xlu0 %v1598
        %v1759 = vpop.xlane.xlu0 %1758
        %1760 = vmax.xlane.f32.xlu0 %v1599
        %v1761 = vpop.xlane.xlu0 %1760
        %1762 = vmax.xlane.f32.xlu0 %v1600
        %v1763 = vpop.xlane.xlu0 %1762
        %1764 = vmax.xlane.f32.xlu0 %v1601
        %v1765 = vpop.xlane.xlu0 %1764
        %1766 = vmax.xlane.f32.xlu0 %v1602
        %v1767 = vpop.xlane.xlu0 %1766
        %1768 = vmax.xlane.f32.xlu0 %v1603
        %v1769 = vpop.xlane.xlu0 %1768
        %1770 = vmax.xlane.f32.xlu0 %v1604
        %v1771 = vpop.xlane.xlu0 %1770
        %1772 = vmax.xlane.f32.xlu0 %v1605
        %v1773 = vpop.xlane.xlu0 %1772
        %1774 = vmax.xlane.f32.xlu0 %v1606
        %v1775 = vpop.xlane.xlu0 %1774
        %1776 = vmax.xlane.f32.xlu0 %v1607
        %v1777 = vpop.xlane.xlu0 %1776
        %1778 = vmax.xlane.f32.xlu0 %v1608
        %v1779 = vpop.xlane.xlu0 %1778
        %1780 = vmax.xlane.f32.xlu0 %v1609
        %v1781 = vpop.xlane.xlu0 %1780
        %1782 = vmax.xlane.f32.xlu0 %v1610
        %v1783 = vpop.xlane.xlu0 %1782
        %1784 = vmax.xlane.f32.xlu0 %v1611
        %v1785 = vpop.xlane.xlu0 %1784
        %1786 = vmax.xlane.f32.xlu0 %v1612
        %v1787 = vpop.xlane.xlu0 %1786
        %1788 = vmax.xlane.f32.xlu0 %v1613
        %v1789 = vpop.xlane.xlu0 %1788
        %1790 = vmax.xlane.f32.xlu0 %v1614
        %v1791 = vpop.xlane.xlu0 %1790
        %1792 = vmax.xlane.f32.xlu0 %v1615
        %v1793 = vpop.xlane.xlu0 %1792
        %1794 = vmax.xlane.f32.xlu0 %v1616
        %v1795 = vpop.xlane.xlu0 %1794
        %1796 = vmax.xlane.f32.xlu0 %v1617
        %v1797 = vpop.xlane.xlu0 %1796
        %1798 = vmax.xlane.f32.xlu0 %v1618
        %v1799 = vpop.xlane.xlu0 %1798
        %1800 = vmax.xlane.f32.xlu0 %v1619
        %v1801 = vpop.xlane.xlu0 %1800
        %1802 = vmax.xlane.f32.xlu0 %v1620
        %v1803 = vpop.xlane.xlu0 %1802
        %1804 = vmax.xlane.f32.xlu0 %v1621
        %v1805 = vpop.xlane.xlu0 %1804
        %1806 = vmax.xlane.f32.xlu0 %v1622
        %v1807 = vpop.xlane.xlu0 %1806
        %1808 = vmax.xlane.f32.xlu0 %v1623
        %v1809 = vpop.xlane.xlu0 %1808
        %1810 = vmax.xlane.f32.xlu0 %v1624
        %v1811 = vpop.xlane.xlu0 %1810
        %1812 = vmax.xlane.f32.xlu0 %v1625
        %v1813 = vpop.xlane.xlu0 %1812
        %1814 = vmax.xlane.f32.xlu0 %v1626
        %v1815 = vpop.xlane.xlu0 %1814
        %1816 = vmax.xlane.f32.xlu0 %v1627
        %v1817 = vpop.xlane.xlu0 %1816
        %1818 = vmax.xlane.f32.xlu0 %v1628
        %v1819 = vpop.xlane.xlu0 %1818
        %1820 = vmax.xlane.f32.xlu0 %v1629
        %v1821 = vpop.xlane.xlu0 %1820
        %1822 = vmax.xlane.f32.xlu0 %v1630
        %v1823 = vpop.xlane.xlu0 %1822
        %1824 = vmax.xlane.f32.xlu0 %v1631
        %v1825 = vpop.xlane.xlu0 %1824
        %1826 = vmax.xlane.f32.xlu0 %v1632
        %v1827 = vpop.xlane.xlu0 %1826
        %1828 = vmax.xlane.f32.xlu0 %v1633
        %v1829 = vpop.xlane.xlu0 %1828
        %1830 = vmax.xlane.f32.xlu0 %v1634
        %v1831 = vpop.xlane.xlu0 %1830
        %1832 = vmax.xlane.f32.xlu0 %v1635
        %v1833 = vpop.xlane.xlu0 %1832
        %1834 = vmax.xlane.f32.xlu0 %v1636
        %v1835 = vpop.xlane.xlu0 %1834
        %1836 = vmax.xlane.f32.xlu0 %v1637
        %v1837 = vpop.xlane.xlu0 %1836
        %1838 = vmax.xlane.f32.xlu0 %v1638
        %v1839 = vpop.xlane.xlu0 %1838
        %1840 = vmax.xlane.f32.xlu0 %v1639
        %v1841 = vpop.xlane.xlu0 %1840
        %1842 = vmax.xlane.f32.xlu0 %v1640
        %v1843 = vpop.xlane.xlu0 %1842
        %1844 = vmax.xlane.f32.xlu0 %v1641
        %v1845 = vpop.xlane.xlu0 %1844
        %1846 = vmax.xlane.f32.xlu0 %v1642
        %v1847 = vpop.xlane.xlu0 %1846
        %1848 = vmax.xlane.f32.xlu0 %v1643
        %v1849 = vpop.xlane.xlu0 %1848
        %1850 = vmax.xlane.f32.xlu0 %v1644
        %v1851 = vpop.xlane.xlu0 %1850
        %1852 = vmax.xlane.f32.xlu0 %v1645
        %v1853 = vpop.xlane.xlu0 %1852
        %1854 = vmax.xlane.f32.xlu0 %v1646
        %v1855 = vpop.xlane.xlu0 %1854
        %1856 = vmax.xlane.f32.xlu0 %v1647
        %v1857 = vpop.xlane.xlu0 %1856
        %1858 = vmax.xlane.f32.xlu0 %v1648
        %v1859 = vpop.xlane.xlu0 %1858
        %1860 = vmax.xlane.f32.xlu0 %v1649
        %v1861 = vpop.xlane.xlu0 %1860
        %1862 = vmax.xlane.f32.xlu0 %v1650
        %v1863 = vpop.xlane.xlu0 %1862
        %1864 = vmax.xlane.f32.xlu0 %v1651
        %v1865 = vpop.xlane.xlu0 %1864
        %1866 = vmax.xlane.f32.xlu0 %v1652
        %v1867 = vpop.xlane.xlu0 %1866
        %1868 = vmax.xlane.f32.xlu0 %v1653
        %v1869 = vpop.xlane.xlu0 %1868
        %1870 = vmax.xlane.f32.xlu0 %v1654
        %v1871 = vpop.xlane.xlu0 %1870
        %1872 = vmax.xlane.f32.xlu0 %v1655
        %v1873 = vpop.xlane.xlu0 %1872
        %1874 = vmax.xlane.f32.xlu0 %v1656
        %v1875 = vpop.xlane.xlu0 %1874
        %1876 = vmax.xlane.f32.xlu0 %v1657
        %v1877 = vpop.xlane.xlu0 %1876
        %1878 = vmax.xlane.f32.xlu0 %v1658
        %v1879 = vpop.xlane.xlu0 %1878
        %1880 = vmax.xlane.f32.xlu0 %v1659
        %v1881 = vpop.xlane.xlu0 %1880
        %1882 = vmax.xlane.f32.xlu0 %v1660
        %v1883 = vpop.xlane.xlu0 %1882
        %1884 = vmax.xlane.f32.xlu0 %v1661
        %v1885 = vpop.xlane.xlu0 %1884
        %1886 = vmax.xlane.f32.xlu0 %v1662
        %v1887 = vpop.xlane.xlu0 %1886
        %1888 = vmax.xlane.f32.xlu0 %v1663
        %v1889 = vpop.xlane.xlu0 %1888
        %1890 = vmax.xlane.f32.xlu0 %v1664
        %v1891 = vpop.xlane.xlu0 %1890
        %1892 = vmax.xlane.f32.xlu0 %v1665
        %v1893 = vpop.xlane.xlu0 %1892
        %1894 = vmax.xlane.f32.xlu0 %v1666
        %v1895 = vpop.xlane.xlu0 %1894
        %1896 = vmax.xlane.f32.xlu0 %v1667
        %v1897 = vpop.xlane.xlu0 %1896
        %1898 = vmax.xlane.f32.xlu0 %v1668
        %v1899 = vpop.xlane.xlu0 %1898
        %1900 = vmax.xlane.f32.xlu0 %v1669
        %v1901 = vpop.xlane.xlu0 %1900
        %1902 = vmax.xlane.f32.xlu0 %v1670
        %v1903 = vpop.xlane.xlu0 %1902
        %1904 = vmax.xlane.f32.xlu0 %v1671
        %v1905 = vpop.xlane.xlu0 %1904
        %1906 = vmax.xlane.f32.xlu0 %v1672
        %v1907 = vpop.xlane.xlu0 %1906
        %1908 = vmax.xlane.f32.xlu0 %v1673
        %v1909 = vpop.xlane.xlu0 %1908
        %1910 = vmax.xlane.f32.xlu0 %v1674
        %v1911 = vpop.xlane.xlu0 %1910
        %1912 = vmax.xlane.f32.xlu0 %v1675
        %v1913 = vpop.xlane.xlu0 %1912
        %1914 = vmax.xlane.f32.xlu0 %v1676
        %v1915 = vpop.xlane.xlu0 %1914
        %1916 = vmax.xlane.f32.xlu0 %v1677
        %v1917 = vpop.xlane.xlu0 %1916
        %1918 = vmax.xlane.f32.xlu0 %v1678
        %v1919 = vpop.xlane.xlu0 %1918
        %1920 = vmax.xlane.f32.xlu0 %v1679
        %v1921 = vpop.xlane.xlu0 %1920
        %1922 = vmax.xlane.f32.xlu0 %v1680
        %v1923 = vpop.xlane.xlu0 %1922
        %1924 = vmax.xlane.f32.xlu0 %v1681
        %v1925 = vpop.xlane.xlu0 %1924
        %1926 = vmax.xlane.f32.xlu0 %v1682
        %v1927 = vpop.xlane.xlu0 %1926
        %1928 = vmax.xlane.f32.xlu0 %v1683
        %v1929 = vpop.xlane.xlu0 %1928
        %1930 = vmax.xlane.f32.xlu0 %v1684
        %v1931 = vpop.xlane.xlu0 %1930
        %1932 = vmax.xlane.f32.xlu0 %v1685
        %v1933 = vpop.xlane.xlu0 %1932
        %1934 = vmax.xlane.f32.xlu0 %v1686
        %v1935 = vpop.xlane.xlu0 %1934
        %1936 = vmax.xlane.f32.xlu0 %v1687
        %v1937 = vpop.xlane.xlu0 %1936
        %1938 = vmax.xlane.f32.xlu0 %v1688
        %v1939 = vpop.xlane.xlu0 %1938
        %1940 = vmax.xlane.f32.xlu0 %v1689
        %v1941 = vpop.xlane.xlu0 %1940
        %1942 = vmax.xlane.f32.xlu0 %v1690
        %v1943 = vpop.xlane.xlu0 %1942
        %1944 = vmax.xlane.f32.xlu0 %v1691
        %v1945 = vpop.xlane.xlu0 %1944
        %1946 = vmax.xlane.f32.xlu0 %v1692
        %v1947 = vpop.xlane.xlu0 %1946
        %1948 = vmax.xlane.f32.xlu0 %v1693
        %v1949 = vpop.xlane.xlu0 %1948
        %p1950 = scmp.eq.s32.totalorder %s28, 0
        // Predicated region
        $region53: #{tpu_custom_call.1} parent=43 // pred_check
          %p1951 = pneg %p1950
        $region54: #{tpu_custom_call.1} parent=43 // pred_check_branch
          %1953 = sbr.rel (%p1951) target = $region56
        $region55: #{tpu_custom_call.1} parent=43 // pred_region
          %vm1954 = vcmask 7168
          %1955 = vst.msk [vmem:[#allocation2] sm:$0xff] %vm1954, %v1695
          %1956 = vst.msk [vmem:[#allocation2 + $0x8] sm:$0xff] %vm1954, %v1697
          %1957 = vst.msk [vmem:[#allocation2 + $0x10] sm:$0xff] %vm1954, %v1699
          %1958 = vst.msk [vmem:[#allocation2 + $0x18] sm:$0xff] %vm1954, %v1701
          %1959 = vst.msk [vmem:[#allocation2 + $0x20] sm:$0xff] %vm1954, %v1703
          %1960 = vst.msk [vmem:[#allocation2 + $0x28] sm:$0xff] %vm1954, %v1705
          %1961 = vst.msk [vmem:[#allocation2 + $0x30] sm:$0xff] %vm1954, %v1707
          %1962 = vst.msk [vmem:[#allocation2 + $0x38] sm:$0xff] %vm1954, %v1709
          %1963 = vst.msk [vmem:[#allocation2 + $0x40] sm:$0xff] %vm1954, %v1711
          %1964 = vst.msk [vmem:[#allocation2 + $0x48] sm:$0xff] %vm1954, %v1713
          %1965 = vst.msk [vmem:[#allocation2 + $0x50] sm:$0xff] %vm1954, %v1715
          %1966 = vst.msk [vmem:[#allocation2 + $0x58] sm:$0xff] %vm1954, %v1717
          %1967 = vst.msk [vmem:[#allocation2 + $0x60] sm:$0xff] %vm1954, %v1719
          %1968 = vst.msk [vmem:[#allocation2 + $0x68] sm:$0xff] %vm1954, %v1721
          %1969 = vst.msk [vmem:[#allocation2 + $0x70] sm:$0xff] %vm1954, %v1723
          %1970 = vst.msk [vmem:[#allocation2 + $0x78] sm:$0xff] %vm1954, %v1725
          %1971 = vst.msk [vmem:[#allocation2 + $0x80] sm:$0xff] %vm1954, %v1727
          %1972 = vst.msk [vmem:[#allocation2 + $0x88] sm:$0xff] %vm1954, %v1729
          %1973 = vst.msk [vmem:[#allocation2 + $0x90] sm:$0xff] %vm1954, %v1731
          %1974 = vst.msk [vmem:[#allocation2 + $0x98] sm:$0xff] %vm1954, %v1733
          %1975 = vst.msk [vmem:[#allocation2 + $0xa0] sm:$0xff] %vm1954, %v1735
          %1976 = vst.msk [vmem:[#allocation2 + $0xa8] sm:$0xff] %vm1954, %v1737
          %1977 = vst.msk [vmem:[#allocation2 + $0xb0] sm:$0xff] %vm1954, %v1739
          %1978 = vst.msk [vmem:[#allocation2 + $0xb8] sm:$0xff] %vm1954, %v1741
          %1979 = vst.msk [vmem:[#allocation2 + $0xc0] sm:$0xff] %vm1954, %v1743
          %1980 = vst.msk [vmem:[#allocation2 + $0xc8] sm:$0xff] %vm1954, %v1745
          %1981 = vst.msk [vmem:[#allocation2 + $0xd0] sm:$0xff] %vm1954, %v1747
          %1982 = vst.msk [vmem:[#allocation2 + $0xd8] sm:$0xff] %vm1954, %v1749
          %1983 = vst.msk [vmem:[#allocation2 + $0xe0] sm:$0xff] %vm1954, %v1751
          %1984 = vst.msk [vmem:[#allocation2 + $0xe8] sm:$0xff] %vm1954, %v1753
          %1985 = vst.msk [vmem:[#allocation2 + $0xf0] sm:$0xff] %vm1954, %v1755
          %1986 = vst.msk [vmem:[#allocation2 + $0xf8] sm:$0xff] %vm1954, %v1757
          %1987 = vst.msk [vmem:[#allocation2 + $0x100] sm:$0xff] %vm1954, %v1759
          %1988 = vst.msk [vmem:[#allocation2 + $0x108] sm:$0xff] %vm1954, %v1761
          %1989 = vst.msk [vmem:[#allocation2 + $0x110] sm:$0xff] %vm1954, %v1763
          %1990 = vst.msk [vmem:[#allocation2 + $0x118] sm:$0xff] %vm1954, %v1765
          %1991 = vst.msk [vmem:[#allocation2 + $0x120] sm:$0xff] %vm1954, %v1767
          %1992 = vst.msk [vmem:[#allocation2 + $0x128] sm:$0xff] %vm1954, %v1769
          %1993 = vst.msk [vmem:[#allocation2 + $0x130] sm:$0xff] %vm1954, %v1771
          %1994 = vst.msk [vmem:[#allocation2 + $0x138] sm:$0xff] %vm1954, %v1773
          %1995 = vst.msk [vmem:[#allocation2 + $0x140] sm:$0xff] %vm1954, %v1775
          %1996 = vst.msk [vmem:[#allocation2 + $0x148] sm:$0xff] %vm1954, %v1777
          %1997 = vst.msk [vmem:[#allocation2 + $0x150] sm:$0xff] %vm1954, %v1779
          %1998 = vst.msk [vmem:[#allocation2 + $0x158] sm:$0xff] %vm1954, %v1781
          %1999 = vst.msk [vmem:[#allocation2 + $0x160] sm:$0xff] %vm1954, %v1783
          %2000 = vst.msk [vmem:[#allocation2 + $0x168] sm:$0xff] %vm1954, %v1785
          %2001 = vst.msk [vmem:[#allocation2 + $0x170] sm:$0xff] %vm1954, %v1787
          %2002 = vst.msk [vmem:[#allocation2 + $0x178] sm:$0xff] %vm1954, %v1789
          %2003 = vst.msk [vmem:[#allocation2 + $0x180] sm:$0xff] %vm1954, %v1791
          %2004 = vst.msk [vmem:[#allocation2 + $0x188] sm:$0xff] %vm1954, %v1793
          %2005 = vst.msk [vmem:[#allocation2 + $0x190] sm:$0xff] %vm1954, %v1795
          %2006 = vst.msk [vmem:[#allocation2 + $0x198] sm:$0xff] %vm1954, %v1797
          %2007 = vst.msk [vmem:[#allocation2 + $0x1a0] sm:$0xff] %vm1954, %v1799
          %2008 = vst.msk [vmem:[#allocation2 + $0x1a8] sm:$0xff] %vm1954, %v1801
          %2009 = vst.msk [vmem:[#allocation2 + $0x1b0] sm:$0xff] %vm1954, %v1803
          %2010 = vst.msk [vmem:[#allocation2 + $0x1b8] sm:$0xff] %vm1954, %v1805
          %2011 = vst.msk [vmem:[#allocation2 + $0x1c0] sm:$0xff] %vm1954, %v1807
          %2012 = vst.msk [vmem:[#allocation2 + $0x1c8] sm:$0xff] %vm1954, %v1809
          %2013 = vst.msk [vmem:[#allocation2 + $0x1d0] sm:$0xff] %vm1954, %v1811
          %2014 = vst.msk [vmem:[#allocation2 + $0x1d8] sm:$0xff] %vm1954, %v1813
          %2015 = vst.msk [vmem:[#allocation2 + $0x1e0] sm:$0xff] %vm1954, %v1815
          %2016 = vst.msk [vmem:[#allocation2 + $0x1e8] sm:$0xff] %vm1954, %v1817
          %2017 = vst.msk [vmem:[#allocation2 + $0x1f0] sm:$0xff] %vm1954, %v1819
          %2018 = vst.msk [vmem:[#allocation2 + $0x1f8] sm:$0xff] %vm1954, %v1821
          %2019 = vst.msk [vmem:[#allocation2 + $0x200] sm:$0xff] %vm1954, %v1823
          %2020 = vst.msk [vmem:[#allocation2 + $0x208] sm:$0xff] %vm1954, %v1825
          %2021 = vst.msk [vmem:[#allocation2 + $0x210] sm:$0xff] %vm1954, %v1827
          %2022 = vst.msk [vmem:[#allocation2 + $0x218] sm:$0xff] %vm1954, %v1829
          %2023 = vst.msk [vmem:[#allocation2 + $0x220] sm:$0xff] %vm1954, %v1831
          %2024 = vst.msk [vmem:[#allocation2 + $0x228] sm:$0xff] %vm1954, %v1833
          %2025 = vst.msk [vmem:[#allocation2 + $0x230] sm:$0xff] %vm1954, %v1835
          %2026 = vst.msk [vmem:[#allocation2 + $0x238] sm:$0xff] %vm1954, %v1837
          %2027 = vst.msk [vmem:[#allocation2 + $0x240] sm:$0xff] %vm1954, %v1839
          %2028 = vst.msk [vmem:[#allocation2 + $0x248] sm:$0xff] %vm1954, %v1841
          %2029 = vst.msk [vmem:[#allocation2 + $0x250] sm:$0xff] %vm1954, %v1843
          %2030 = vst.msk [vmem:[#allocation2 + $0x258] sm:$0xff] %vm1954, %v1845
          %2031 = vst.msk [vmem:[#allocation2 + $0x260] sm:$0xff] %vm1954, %v1847
          %2032 = vst.msk [vmem:[#allocation2 + $0x268] sm:$0xff] %vm1954, %v1849
          %2033 = vst.msk [vmem:[#allocation2 + $0x270] sm:$0xff] %vm1954, %v1851
          %2034 = vst.msk [vmem:[#allocation2 + $0x278] sm:$0xff] %vm1954, %v1853
          %2035 = vst.msk [vmem:[#allocation2 + $0x280] sm:$0xff] %vm1954, %v1855
          %2036 = vst.msk [vmem:[#allocation2 + $0x288] sm:$0xff] %vm1954, %v1857
          %2037 = vst.msk [vmem:[#allocation2 + $0x290] sm:$0xff] %vm1954, %v1859
          %2038 = vst.msk [vmem:[#allocation2 + $0x298] sm:$0xff] %vm1954, %v1861
          %2039 = vst.msk [vmem:[#allocation2 + $0x2a0] sm:$0xff] %vm1954, %v1863
          %2040 = vst.msk [vmem:[#allocation2 + $0x2a8] sm:$0xff] %vm1954, %v1865
          %2041 = vst.msk [vmem:[#allocation2 + $0x2b0] sm:$0xff] %vm1954, %v1867
          %2042 = vst.msk [vmem:[#allocation2 + $0x2b8] sm:$0xff] %vm1954, %v1869
          %2043 = vst.msk [vmem:[#allocation2 + $0x2c0] sm:$0xff] %vm1954, %v1871
          %2044 = vst.msk [vmem:[#allocation2 + $0x2c8] sm:$0xff] %vm1954, %v1873
          %2045 = vst.msk [vmem:[#allocation2 + $0x2d0] sm:$0xff] %vm1954, %v1875
          %2046 = vst.msk [vmem:[#allocation2 + $0x2d8] sm:$0xff] %vm1954, %v1877
          %2047 = vst.msk [vmem:[#allocation2 + $0x2e0] sm:$0xff] %vm1954, %v1879
          %2048 = vst.msk [vmem:[#allocation2 + $0x2e8] sm:$0xff] %vm1954, %v1881
          %2049 = vst.msk [vmem:[#allocation2 + $0x2f0] sm:$0xff] %vm1954, %v1883
          %2050 = vst.msk [vmem:[#allocation2 + $0x2f8] sm:$0xff] %vm1954, %v1885
          %2051 = vst.msk [vmem:[#allocation2 + $0x300] sm:$0xff] %vm1954, %v1887
          %2052 = vst.msk [vmem:[#allocation2 + $0x308] sm:$0xff] %vm1954, %v1889
          %2053 = vst.msk [vmem:[#allocation2 + $0x310] sm:$0xff] %vm1954, %v1891
          %2054 = vst.msk [vmem:[#allocation2 + $0x318] sm:$0xff] %vm1954, %v1893
          %2055 = vst.msk [vmem:[#allocation2 + $0x320] sm:$0xff] %vm1954, %v1895
          %2056 = vst.msk [vmem:[#allocation2 + $0x328] sm:$0xff] %vm1954, %v1897
          %2057 = vst.msk [vmem:[#allocation2 + $0x330] sm:$0xff] %vm1954, %v1899
          %2058 = vst.msk [vmem:[#allocation2 + $0x338] sm:$0xff] %vm1954, %v1901
          %2059 = vst.msk [vmem:[#allocation2 + $0x340] sm:$0xff] %vm1954, %v1903
          %2060 = vst.msk [vmem:[#allocation2 + $0x348] sm:$0xff] %vm1954, %v1905
          %2061 = vst.msk [vmem:[#allocation2 + $0x350] sm:$0xff] %vm1954, %v1907
          %2062 = vst.msk [vmem:[#allocation2 + $0x358] sm:$0xff] %vm1954, %v1909
          %2063 = vst.msk [vmem:[#allocation2 + $0x360] sm:$0xff] %vm1954, %v1911
          %2064 = vst.msk [vmem:[#allocation2 + $0x368] sm:$0xff] %vm1954, %v1913
          %2065 = vst.msk [vmem:[#allocation2 + $0x370] sm:$0xff] %vm1954, %v1915
          %2066 = vst.msk [vmem:[#allocation2 + $0x378] sm:$0xff] %vm1954, %v1917
          %2067 = vst.msk [vmem:[#allocation2 + $0x380] sm:$0xff] %vm1954, %v1919
          %2068 = vst.msk [vmem:[#allocation2 + $0x388] sm:$0xff] %vm1954, %v1921
          %2069 = vst.msk [vmem:[#allocation2 + $0x390] sm:$0xff] %vm1954, %v1923
          %2070 = vst.msk [vmem:[#allocation2 + $0x398] sm:$0xff] %vm1954, %v1925
          %2071 = vst.msk [vmem:[#allocation2 + $0x3a0] sm:$0xff] %vm1954, %v1927
          %2072 = vst.msk [vmem:[#allocation2 + $0x3a8] sm:$0xff] %vm1954, %v1929
          %2073 = vst.msk [vmem:[#allocation2 + $0x3b0] sm:$0xff] %vm1954, %v1931
          %2074 = vst.msk [vmem:[#allocation2 + $0x3b8] sm:$0xff] %vm1954, %v1933
          %2075 = vst.msk [vmem:[#allocation2 + $0x3c0] sm:$0xff] %vm1954, %v1935
          %2076 = vst.msk [vmem:[#allocation2 + $0x3c8] sm:$0xff] %vm1954, %v1937
          %2077 = vst.msk [vmem:[#allocation2 + $0x3d0] sm:$0xff] %vm1954, %v1939
          %2078 = vst.msk [vmem:[#allocation2 + $0x3d8] sm:$0xff] %vm1954, %v1941
          %2079 = vst.msk [vmem:[#allocation2 + $0x3e0] sm:$0xff] %vm1954, %v1943
          %2080 = vst.msk [vmem:[#allocation2 + $0x3e8] sm:$0xff] %vm1954, %v1945
          %2081 = vst.msk [vmem:[#allocation2 + $0x3f0] sm:$0xff] %vm1954, %v1947
          %2082 = vst.msk [vmem:[#allocation2 + $0x3f8] sm:$0xff] %vm1954, %v1949
        $region56: #{tpu_custom_call.1} parent=43 // pred_fallthru
          _
        %p2083 = scmp.gt.s32.totalorder %s28, 0
        // Predicated region
        $region57: #{tpu_custom_call.1} parent=43 // pred_check
          %p2084 = pneg %p2083
        $region58: #{tpu_custom_call.1} parent=43 // pred_check_branch
          %2086 = sbr.rel (%p2084) target = $region60
        $region59: #{tpu_custom_call.1} parent=43 // pred_region
          %v2087 = vld [vmem:[#allocation2] sm:$0xff]
          %v2088 = vld [vmem:[#allocation2 + $0x8] sm:$0xff]
          %v2089 = vld [vmem:[#allocation2 + $0x10] sm:$0xff]
          %v2090 = vld [vmem:[#allocation2 + $0x18] sm:$0xff]
          %v2091 = vld [vmem:[#allocation2 + $0x20] sm:$0xff]
          %v2092 = vld [vmem:[#allocation2 + $0x28] sm:$0xff]
          %v2093 = vld [vmem:[#allocation2 + $0x30] sm:$0xff]
          %v2094 = vld [vmem:[#allocation2 + $0x38] sm:$0xff]
          %v2095 = vld [vmem:[#allocation2 + $0x40] sm:$0xff]
          %v2096 = vld [vmem:[#allocation2 + $0x48] sm:$0xff]
          %v2097 = vld [vmem:[#allocation2 + $0x50] sm:$0xff]
          %v2098 = vld [vmem:[#allocation2 + $0x58] sm:$0xff]
          %v2099 = vld [vmem:[#allocation2 + $0x60] sm:$0xff]
          %v2100 = vld [vmem:[#allocation2 + $0x68] sm:$0xff]
          %v2101 = vld [vmem:[#allocation2 + $0x70] sm:$0xff]
          %v2102 = vld [vmem:[#allocation2 + $0x78] sm:$0xff]
          %v2103 = vld [vmem:[#allocation2 + $0x80] sm:$0xff]
          %v2104 = vld [vmem:[#allocation2 + $0x88] sm:$0xff]
          %v2105 = vld [vmem:[#allocation2 + $0x90] sm:$0xff]
          %v2106 = vld [vmem:[#allocation2 + $0x98] sm:$0xff]
          %v2107 = vld [vmem:[#allocation2 + $0xa0] sm:$0xff]
          %v2108 = vld [vmem:[#allocation2 + $0xa8] sm:$0xff]
          %v2109 = vld [vmem:[#allocation2 + $0xb0] sm:$0xff]
          %v2110 = vld [vmem:[#allocation2 + $0xb8] sm:$0xff]
          %v2111 = vld [vmem:[#allocation2 + $0xc0] sm:$0xff]
          %v2112 = vld [vmem:[#allocation2 + $0xc8] sm:$0xff]
          %v2113 = vld [vmem:[#allocation2 + $0xd0] sm:$0xff]
          %v2114 = vld [vmem:[#allocation2 + $0xd8] sm:$0xff]
          %v2115 = vld [vmem:[#allocation2 + $0xe0] sm:$0xff]
          %v2116 = vld [vmem:[#allocation2 + $0xe8] sm:$0xff]
          %v2117 = vld [vmem:[#allocation2 + $0xf0] sm:$0xff]
          %v2118 = vld [vmem:[#allocation2 + $0xf8] sm:$0xff]
          %v2119 = vld [vmem:[#allocation2 + $0x100] sm:$0xff]
          %v2120 = vld [vmem:[#allocation2 + $0x108] sm:$0xff]
          %v2121 = vld [vmem:[#allocation2 + $0x110] sm:$0xff]
          %v2122 = vld [vmem:[#allocation2 + $0x118] sm:$0xff]
          %v2123 = vld [vmem:[#allocation2 + $0x120] sm:$0xff]
          %v2124 = vld [vmem:[#allocation2 + $0x128] sm:$0xff]
          %v2125 = vld [vmem:[#allocation2 + $0x130] sm:$0xff]
          %v2126 = vld [vmem:[#allocation2 + $0x138] sm:$0xff]
          %v2127 = vld [vmem:[#allocation2 + $0x140] sm:$0xff]
          %v2128 = vld [vmem:[#allocation2 + $0x148] sm:$0xff]
          %v2129 = vld [vmem:[#allocation2 + $0x150] sm:$0xff]
          %v2130 = vld [vmem:[#allocation2 + $0x158] sm:$0xff]
          %v2131 = vld [vmem:[#allocation2 + $0x160] sm:$0xff]
          %v2132 = vld [vmem:[#allocation2 + $0x168] sm:$0xff]
          %v2133 = vld [vmem:[#allocation2 + $0x170] sm:$0xff]
          %v2134 = vld [vmem:[#allocation2 + $0x178] sm:$0xff]
          %v2135 = vld [vmem:[#allocation2 + $0x180] sm:$0xff]
          %v2136 = vld [vmem:[#allocation2 + $0x188] sm:$0xff]
          %v2137 = vld [vmem:[#allocation2 + $0x190] sm:$0xff]
          %v2138 = vld [vmem:[#allocation2 + $0x198] sm:$0xff]
          %v2139 = vld [vmem:[#allocation2 + $0x1a0] sm:$0xff]
          %v2140 = vld [vmem:[#allocation2 + $0x1a8] sm:$0xff]
          %v2141 = vld [vmem:[#allocation2 + $0x1b0] sm:$0xff]
          %v2142 = vld [vmem:[#allocation2 + $0x1b8] sm:$0xff]
          %v2143 = vld [vmem:[#allocation2 + $0x1c0] sm:$0xff]
          %v2144 = vld [vmem:[#allocation2 + $0x1c8] sm:$0xff]
          %v2145 = vld [vmem:[#allocation2 + $0x1d0] sm:$0xff]
          %v2146 = vld [vmem:[#allocation2 + $0x1d8] sm:$0xff]
          %v2147 = vld [vmem:[#allocation2 + $0x1e0] sm:$0xff]
          %v2148 = vld [vmem:[#allocation2 + $0x1e8] sm:$0xff]
          %v2149 = vld [vmem:[#allocation2 + $0x1f0] sm:$0xff]
          %v2150 = vld [vmem:[#allocation2 + $0x1f8] sm:$0xff]
          %v2151 = vld [vmem:[#allocation2 + $0x200] sm:$0xff]
          %v2152 = vld [vmem:[#allocation2 + $0x208] sm:$0xff]
          %v2153 = vld [vmem:[#allocation2 + $0x210] sm:$0xff]
          %v2154 = vld [vmem:[#allocation2 + $0x218] sm:$0xff]
          %v2155 = vld [vmem:[#allocation2 + $0x220] sm:$0xff]
          %v2156 = vld [vmem:[#allocation2 + $0x228] sm:$0xff]
          %v2157 = vld [vmem:[#allocation2 + $0x230] sm:$0xff]
          %v2158 = vld [vmem:[#allocation2 + $0x238] sm:$0xff]
          %v2159 = vld [vmem:[#allocation2 + $0x240] sm:$0xff]
          %v2160 = vld [vmem:[#allocation2 + $0x248] sm:$0xff]
          %v2161 = vld [vmem:[#allocation2 + $0x250] sm:$0xff]
          %v2162 = vld [vmem:[#allocation2 + $0x258] sm:$0xff]
          %v2163 = vld [vmem:[#allocation2 + $0x260] sm:$0xff]
          %v2164 = vld [vmem:[#allocation2 + $0x268] sm:$0xff]
          %v2165 = vld [vmem:[#allocation2 + $0x270] sm:$0xff]
          %v2166 = vld [vmem:[#allocation2 + $0x278] sm:$0xff]
          %v2167 = vld [vmem:[#allocation2 + $0x280] sm:$0xff]
          %v2168 = vld [vmem:[#allocation2 + $0x288] sm:$0xff]
          %v2169 = vld [vmem:[#allocation2 + $0x290] sm:$0xff]
          %v2170 = vld [vmem:[#allocation2 + $0x298] sm:$0xff]
          %v2171 = vld [vmem:[#allocation2 + $0x2a0] sm:$0xff]
          %v2172 = vld [vmem:[#allocation2 + $0x2a8] sm:$0xff]
          %v2173 = vld [vmem:[#allocation2 + $0x2b0] sm:$0xff]
          %v2174 = vld [vmem:[#allocation2 + $0x2b8] sm:$0xff]
          %v2175 = vld [vmem:[#allocation2 + $0x2c0] sm:$0xff]
          %v2176 = vld [vmem:[#allocation2 + $0x2c8] sm:$0xff]
          %v2177 = vld [vmem:[#allocation2 + $0x2d0] sm:$0xff]
          %v2178 = vld [vmem:[#allocation2 + $0x2d8] sm:$0xff]
          %v2179 = vld [vmem:[#allocation2 + $0x2e0] sm:$0xff]
          %v2180 = vld [vmem:[#allocation2 + $0x2e8] sm:$0xff]
          %v2181 = vld [vmem:[#allocation2 + $0x2f0] sm:$0xff]
          %v2182 = vld [vmem:[#allocation2 + $0x2f8] sm:$0xff]
          %v2183 = vld [vmem:[#allocation2 + $0x300] sm:$0xff]
          %v2184 = vld [vmem:[#allocation2 + $0x308] sm:$0xff]
          %v2185 = vld [vmem:[#allocation2 + $0x310] sm:$0xff]
          %v2186 = vld [vmem:[#allocation2 + $0x318] sm:$0xff]
          %v2187 = vld [vmem:[#allocation2 + $0x320] sm:$0xff]
          %v2188 = vld [vmem:[#allocation2 + $0x328] sm:$0xff]
          %v2189 = vld [vmem:[#allocation2 + $0x330] sm:$0xff]
          %v2190 = vld [vmem:[#allocation2 + $0x338] sm:$0xff]
          %v2191 = vld [vmem:[#allocation2 + $0x340] sm:$0xff]
          %v2192 = vld [vmem:[#allocation2 + $0x348] sm:$0xff]
          %v2193 = vld [vmem:[#allocation2 + $0x350] sm:$0xff]
          %v2194 = vld [vmem:[#allocation2 + $0x358] sm:$0xff]
          %v2195 = vld [vmem:[#allocation2 + $0x360] sm:$0xff]
          %v2196 = vld [vmem:[#allocation2 + $0x368] sm:$0xff]
          %v2197 = vld [vmem:[#allocation2 + $0x370] sm:$0xff]
          %v2198 = vld [vmem:[#allocation2 + $0x378] sm:$0xff]
          %v2199 = vld [vmem:[#allocation2 + $0x380] sm:$0xff]
          %v2200 = vld [vmem:[#allocation2 + $0x388] sm:$0xff]
          %v2201 = vld [vmem:[#allocation2 + $0x390] sm:$0xff]
          %v2202 = vld [vmem:[#allocation2 + $0x398] sm:$0xff]
          %v2203 = vld [vmem:[#allocation2 + $0x3a0] sm:$0xff]
          %v2204 = vld [vmem:[#allocation2 + $0x3a8] sm:$0xff]
          %v2205 = vld [vmem:[#allocation2 + $0x3b0] sm:$0xff]
          %v2206 = vld [vmem:[#allocation2 + $0x3b8] sm:$0xff]
          %v2207 = vld [vmem:[#allocation2 + $0x3c0] sm:$0xff]
          %v2208 = vld [vmem:[#allocation2 + $0x3c8] sm:$0xff]
          %v2209 = vld [vmem:[#allocation2 + $0x3d0] sm:$0xff]
          %v2210 = vld [vmem:[#allocation2 + $0x3d8] sm:$0xff]
          %v2211 = vld [vmem:[#allocation2 + $0x3e0] sm:$0xff]
          %v2212 = vld [vmem:[#allocation2 + $0x3e8] sm:$0xff]
          %v2213 = vld [vmem:[#allocation2 + $0x3f0] sm:$0xff]
          %v2214 = vld [vmem:[#allocation2 + $0x3f8] sm:$0xff]
          %v2215 = vmax.f32 %v2087, %v1695
          %v2216 = vmax.f32 %v2088, %v1697
          %v2217 = vmax.f32 %v2089, %v1699
          %v2218 = vmax.f32 %v2090, %v1701
          %v2219 = vmax.f32 %v2091, %v1703
          %v2220 = vmax.f32 %v2092, %v1705
          %v2221 = vmax.f32 %v2093, %v1707
          %v2222 = vmax.f32 %v2094, %v1709
          %v2223 = vmax.f32 %v2095, %v1711
          %v2224 = vmax.f32 %v2096, %v1713
          %v2225 = vmax.f32 %v2097, %v1715
          %v2226 = vmax.f32 %v2098, %v1717
          %v2227 = vmax.f32 %v2099, %v1719
          %v2228 = vmax.f32 %v2100, %v1721
          %v2229 = vmax.f32 %v2101, %v1723
          %v2230 = vmax.f32 %v2102, %v1725
          %v2231 = vmax.f32 %v2103, %v1727
          %v2232 = vmax.f32 %v2104, %v1729
          %v2233 = vmax.f32 %v2105, %v1731
          %v2234 = vmax.f32 %v2106, %v1733
          %v2235 = vmax.f32 %v2107, %v1735
          %v2236 = vmax.f32 %v2108, %v1737
          %v2237 = vmax.f32 %v2109, %v1739
          %v2238 = vmax.f32 %v2110, %v1741
          %v2239 = vmax.f32 %v2111, %v1743
          %v2240 = vmax.f32 %v2112, %v1745
          %v2241 = vmax.f32 %v2113, %v1747
          %v2242 = vmax.f32 %v2114, %v1749
          %v2243 = vmax.f32 %v2115, %v1751
          %v2244 = vmax.f32 %v2116, %v1753
          %v2245 = vmax.f32 %v2117, %v1755
          %v2246 = vmax.f32 %v2118, %v1757
          %v2247 = vmax.f32 %v2119, %v1759
          %v2248 = vmax.f32 %v2120, %v1761
          %v2249 = vmax.f32 %v2121, %v1763
          %v2250 = vmax.f32 %v2122, %v1765
          %v2251 = vmax.f32 %v2123, %v1767
          %v2252 = vmax.f32 %v2124, %v1769
          %v2253 = vmax.f32 %v2125, %v1771
          %v2254 = vmax.f32 %v2126, %v1773
          %v2255 = vmax.f32 %v2127, %v1775
          %v2256 = vmax.f32 %v2128, %v1777
          %v2257 = vmax.f32 %v2129, %v1779
          %v2258 = vmax.f32 %v2130, %v1781
          %v2259 = vmax.f32 %v2131, %v1783
          %v2260 = vmax.f32 %v2132, %v1785
          %v2261 = vmax.f32 %v2133, %v1787
          %v2262 = vmax.f32 %v2134, %v1789
          %v2263 = vmax.f32 %v2135, %v1791
          %v2264 = vmax.f32 %v2136, %v1793
          %v2265 = vmax.f32 %v2137, %v1795
          %v2266 = vmax.f32 %v2138, %v1797
          %v2267 = vmax.f32 %v2139, %v1799
          %v2268 = vmax.f32 %v2140, %v1801
          %v2269 = vmax.f32 %v2141, %v1803
          %v2270 = vmax.f32 %v2142, %v1805
          %v2271 = vmax.f32 %v2143, %v1807
          %v2272 = vmax.f32 %v2144, %v1809
          %v2273 = vmax.f32 %v2145, %v1811
          %v2274 = vmax.f32 %v2146, %v1813
          %v2275 = vmax.f32 %v2147, %v1815
          %v2276 = vmax.f32 %v2148, %v1817
          %v2277 = vmax.f32 %v2149, %v1819
          %v2278 = vmax.f32 %v2150, %v1821
          %v2279 = vmax.f32 %v2151, %v1823
          %v2280 = vmax.f32 %v2152, %v1825
          %v2281 = vmax.f32 %v2153, %v1827
          %v2282 = vmax.f32 %v2154, %v1829
          %v2283 = vmax.f32 %v2155, %v1831
          %v2284 = vmax.f32 %v2156, %v1833
          %v2285 = vmax.f32 %v2157, %v1835
          %v2286 = vmax.f32 %v2158, %v1837
          %v2287 = vmax.f32 %v2159, %v1839
          %v2288 = vmax.f32 %v2160, %v1841
          %v2289 = vmax.f32 %v2161, %v1843
          %v2290 = vmax.f32 %v2162, %v1845
          %v2291 = vmax.f32 %v2163, %v1847
          %v2292 = vmax.f32 %v2164, %v1849
          %v2293 = vmax.f32 %v2165, %v1851
          %v2294 = vmax.f32 %v2166, %v1853
          %v2295 = vmax.f32 %v2167, %v1855
          %v2296 = vmax.f32 %v2168, %v1857
          %v2297 = vmax.f32 %v2169, %v1859
          %v2298 = vmax.f32 %v2170, %v1861
          %v2299 = vmax.f32 %v2171, %v1863
          %v2300 = vmax.f32 %v2172, %v1865
          %v2301 = vmax.f32 %v2173, %v1867
          %v2302 = vmax.f32 %v2174, %v1869
          %v2303 = vmax.f32 %v2175, %v1871
          %v2304 = vmax.f32 %v2176, %v1873
          %v2305 = vmax.f32 %v2177, %v1875
          %v2306 = vmax.f32 %v2178, %v1877
          %v2307 = vmax.f32 %v2179, %v1879
          %v2308 = vmax.f32 %v2180, %v1881
          %v2309 = vmax.f32 %v2181, %v1883
          %v2310 = vmax.f32 %v2182, %v1885
          %v2311 = vmax.f32 %v2183, %v1887
          %v2312 = vmax.f32 %v2184, %v1889
          %v2313 = vmax.f32 %v2185, %v1891
          %v2314 = vmax.f32 %v2186, %v1893
          %v2315 = vmax.f32 %v2187, %v1895
          %v2316 = vmax.f32 %v2188, %v1897
          %v2317 = vmax.f32 %v2189, %v1899
          %v2318 = vmax.f32 %v2190, %v1901
          %v2319 = vmax.f32 %v2191, %v1903
          %v2320 = vmax.f32 %v2192, %v1905
          %v2321 = vmax.f32 %v2193, %v1907
          %v2322 = vmax.f32 %v2194, %v1909
          %v2323 = vmax.f32 %v2195, %v1911
          %v2324 = vmax.f32 %v2196, %v1913
          %v2325 = vmax.f32 %v2197, %v1915
          %v2326 = vmax.f32 %v2198, %v1917
          %v2327 = vmax.f32 %v2199, %v1919
          %v2328 = vmax.f32 %v2200, %v1921
          %v2329 = vmax.f32 %v2201, %v1923
          %v2330 = vmax.f32 %v2202, %v1925
          %v2331 = vmax.f32 %v2203, %v1927
          %v2332 = vmax.f32 %v2204, %v1929
          %v2333 = vmax.f32 %v2205, %v1931
          %v2334 = vmax.f32 %v2206, %v1933
          %v2335 = vmax.f32 %v2207, %v1935
          %v2336 = vmax.f32 %v2208, %v1937
          %v2337 = vmax.f32 %v2209, %v1939
          %v2338 = vmax.f32 %v2210, %v1941
          %v2339 = vmax.f32 %v2211, %v1943
          %v2340 = vmax.f32 %v2212, %v1945
          %v2341 = vmax.f32 %v2213, %v1947
          %v2342 = vmax.f32 %v2214, %v1949
          %vm2343 = vcmask 7168
          %2344 = vst.msk [vmem:[#allocation2] sm:$0xff] %vm2343, %v2215
          %2345 = vst.msk [vmem:[#allocation2 + $0x8] sm:$0xff] %vm2343, %v2216
          %2346 = vst.msk [vmem:[#allocation2 + $0x10] sm:$0xff] %vm2343, %v2217
          %2347 = vst.msk [vmem:[#allocation2 + $0x18] sm:$0xff] %vm2343, %v2218
          %2348 = vst.msk [vmem:[#allocation2 + $0x20] sm:$0xff] %vm2343, %v2219
          %2349 = vst.msk [vmem:[#allocation2 + $0x28] sm:$0xff] %vm2343, %v2220
          %2350 = vst.msk [vmem:[#allocation2 + $0x30] sm:$0xff] %vm2343, %v2221
          %2351 = vst.msk [vmem:[#allocation2 + $0x38] sm:$0xff] %vm2343, %v2222
          %2352 = vst.msk [vmem:[#allocation2 + $0x40] sm:$0xff] %vm2343, %v2223
          %2353 = vst.msk [vmem:[#allocation2 + $0x48] sm:$0xff] %vm2343, %v2224
          %2354 = vst.msk [vmem:[#allocation2 + $0x50] sm:$0xff] %vm2343, %v2225
          %2355 = vst.msk [vmem:[#allocation2 + $0x58] sm:$0xff] %vm2343, %v2226
          %2356 = vst.msk [vmem:[#allocation2 + $0x60] sm:$0xff] %vm2343, %v2227
          %2357 = vst.msk [vmem:[#allocation2 + $0x68] sm:$0xff] %vm2343, %v2228
          %2358 = vst.msk [vmem:[#allocation2 + $0x70] sm:$0xff] %vm2343, %v2229
          %2359 = vst.msk [vmem:[#allocation2 + $0x78] sm:$0xff] %vm2343, %v2230
          %2360 = vst.msk [vmem:[#allocation2 + $0x80] sm:$0xff] %vm2343, %v2231
          %2361 = vst.msk [vmem:[#allocation2 + $0x88] sm:$0xff] %vm2343, %v2232
          %2362 = vst.msk [vmem:[#allocation2 + $0x90] sm:$0xff] %vm2343, %v2233
          %2363 = vst.msk [vmem:[#allocation2 + $0x98] sm:$0xff] %vm2343, %v2234
          %2364 = vst.msk [vmem:[#allocation2 + $0xa0] sm:$0xff] %vm2343, %v2235
          %2365 = vst.msk [vmem:[#allocation2 + $0xa8] sm:$0xff] %vm2343, %v2236
          %2366 = vst.msk [vmem:[#allocation2 + $0xb0] sm:$0xff] %vm2343, %v2237
          %2367 = vst.msk [vmem:[#allocation2 + $0xb8] sm:$0xff] %vm2343, %v2238
          %2368 = vst.msk [vmem:[#allocation2 + $0xc0] sm:$0xff] %vm2343, %v2239
          %2369 = vst.msk [vmem:[#allocation2 + $0xc8] sm:$0xff] %vm2343, %v2240
          %2370 = vst.msk [vmem:[#allocation2 + $0xd0] sm:$0xff] %vm2343, %v2241
          %2371 = vst.msk [vmem:[#allocation2 + $0xd8] sm:$0xff] %vm2343, %v2242
          %2372 = vst.msk [vmem:[#allocation2 + $0xe0] sm:$0xff] %vm2343, %v2243
          %2373 = vst.msk [vmem:[#allocation2 + $0xe8] sm:$0xff] %vm2343, %v2244
          %2374 = vst.msk [vmem:[#allocation2 + $0xf0] sm:$0xff] %vm2343, %v2245
          %2375 = vst.msk [vmem:[#allocation2 + $0xf8] sm:$0xff] %vm2343, %v2246
          %2376 = vst.msk [vmem:[#allocation2 + $0x100] sm:$0xff] %vm2343, %v2247
          %2377 = vst.msk [vmem:[#allocation2 + $0x108] sm:$0xff] %vm2343, %v2248
          %2378 = vst.msk [vmem:[#allocation2 + $0x110] sm:$0xff] %vm2343, %v2249
          %2379 = vst.msk [vmem:[#allocation2 + $0x118] sm:$0xff] %vm2343, %v2250
          %2380 = vst.msk [vmem:[#allocation2 + $0x120] sm:$0xff] %vm2343, %v2251
          %2381 = vst.msk [vmem:[#allocation2 + $0x128] sm:$0xff] %vm2343, %v2252
          %2382 = vst.msk [vmem:[#allocation2 + $0x130] sm:$0xff] %vm2343, %v2253
          %2383 = vst.msk [vmem:[#allocation2 + $0x138] sm:$0xff] %vm2343, %v2254
          %2384 = vst.msk [vmem:[#allocation2 + $0x140] sm:$0xff] %vm2343, %v2255
          %2385 = vst.msk [vmem:[#allocation2 + $0x148] sm:$0xff] %vm2343, %v2256
          %2386 = vst.msk [vmem:[#allocation2 + $0x150] sm:$0xff] %vm2343, %v2257
          %2387 = vst.msk [vmem:[#allocation2 + $0x158] sm:$0xff] %vm2343, %v2258
          %2388 = vst.msk [vmem:[#allocation2 + $0x160] sm:$0xff] %vm2343, %v2259
          %2389 = vst.msk [vmem:[#allocation2 + $0x168] sm:$0xff] %vm2343, %v2260
          %2390 = vst.msk [vmem:[#allocation2 + $0x170] sm:$0xff] %vm2343, %v2261
          %2391 = vst.msk [vmem:[#allocation2 + $0x178] sm:$0xff] %vm2343, %v2262
          %2392 = vst.msk [vmem:[#allocation2 + $0x180] sm:$0xff] %vm2343, %v2263
          %2393 = vst.msk [vmem:[#allocation2 + $0x188] sm:$0xff] %vm2343, %v2264
          %2394 = vst.msk [vmem:[#allocation2 + $0x190] sm:$0xff] %vm2343, %v2265
          %2395 = vst.msk [vmem:[#allocation2 + $0x198] sm:$0xff] %vm2343, %v2266
          %2396 = vst.msk [vmem:[#allocation2 + $0x1a0] sm:$0xff] %vm2343, %v2267
          %2397 = vst.msk [vmem:[#allocation2 + $0x1a8] sm:$0xff] %vm2343, %v2268
          %2398 = vst.msk [vmem:[#allocation2 + $0x1b0] sm:$0xff] %vm2343, %v2269
          %2399 = vst.msk [vmem:[#allocation2 + $0x1b8] sm:$0xff] %vm2343, %v2270
          %2400 = vst.msk [vmem:[#allocation2 + $0x1c0] sm:$0xff] %vm2343, %v2271
          %2401 = vst.msk [vmem:[#allocation2 + $0x1c8] sm:$0xff] %vm2343, %v2272
          %2402 = vst.msk [vmem:[#allocation2 + $0x1d0] sm:$0xff] %vm2343, %v2273
          %2403 = vst.msk [vmem:[#allocation2 + $0x1d8] sm:$0xff] %vm2343, %v2274
          %2404 = vst.msk [vmem:[#allocation2 + $0x1e0] sm:$0xff] %vm2343, %v2275
          %2405 = vst.msk [vmem:[#allocation2 + $0x1e8] sm:$0xff] %vm2343, %v2276
          %2406 = vst.msk [vmem:[#allocation2 + $0x1f0] sm:$0xff] %vm2343, %v2277
          %2407 = vst.msk [vmem:[#allocation2 + $0x1f8] sm:$0xff] %vm2343, %v2278
          %2408 = vst.msk [vmem:[#allocation2 + $0x200] sm:$0xff] %vm2343, %v2279
          %2409 = vst.msk [vmem:[#allocation2 + $0x208] sm:$0xff] %vm2343, %v2280
          %2410 = vst.msk [vmem:[#allocation2 + $0x210] sm:$0xff] %vm2343, %v2281
          %2411 = vst.msk [vmem:[#allocation2 + $0x218] sm:$0xff] %vm2343, %v2282
          %2412 = vst.msk [vmem:[#allocation2 + $0x220] sm:$0xff] %vm2343, %v2283
          %2413 = vst.msk [vmem:[#allocation2 + $0x228] sm:$0xff] %vm2343, %v2284
          %2414 = vst.msk [vmem:[#allocation2 + $0x230] sm:$0xff] %vm2343, %v2285
          %2415 = vst.msk [vmem:[#allocation2 + $0x238] sm:$0xff] %vm2343, %v2286
          %2416 = vst.msk [vmem:[#allocation2 + $0x240] sm:$0xff] %vm2343, %v2287
          %2417 = vst.msk [vmem:[#allocation2 + $0x248] sm:$0xff] %vm2343, %v2288
          %2418 = vst.msk [vmem:[#allocation2 + $0x250] sm:$0xff] %vm2343, %v2289
          %2419 = vst.msk [vmem:[#allocation2 + $0x258] sm:$0xff] %vm2343, %v2290
          %2420 = vst.msk [vmem:[#allocation2 + $0x260] sm:$0xff] %vm2343, %v2291
          %2421 = vst.msk [vmem:[#allocation2 + $0x268] sm:$0xff] %vm2343, %v2292
          %2422 = vst.msk [vmem:[#allocation2 + $0x270] sm:$0xff] %vm2343, %v2293
          %2423 = vst.msk [vmem:[#allocation2 + $0x278] sm:$0xff] %vm2343, %v2294
          %2424 = vst.msk [vmem:[#allocation2 + $0x280] sm:$0xff] %vm2343, %v2295
          %2425 = vst.msk [vmem:[#allocation2 + $0x288] sm:$0xff] %vm2343, %v2296
          %2426 = vst.msk [vmem:[#allocation2 + $0x290] sm:$0xff] %vm2343, %v2297
          %2427 = vst.msk [vmem:[#allocation2 + $0x298] sm:$0xff] %vm2343, %v2298
          %2428 = vst.msk [vmem:[#allocation2 + $0x2a0] sm:$0xff] %vm2343, %v2299
          %2429 = vst.msk [vmem:[#allocation2 + $0x2a8] sm:$0xff] %vm2343, %v2300
          %2430 = vst.msk [vmem:[#allocation2 + $0x2b0] sm:$0xff] %vm2343, %v2301
          %2431 = vst.msk [vmem:[#allocation2 + $0x2b8] sm:$0xff] %vm2343, %v2302
          %2432 = vst.msk [vmem:[#allocation2 + $0x2c0] sm:$0xff] %vm2343, %v2303
          %2433 = vst.msk [vmem:[#allocation2 + $0x2c8] sm:$0xff] %vm2343, %v2304
          %2434 = vst.msk [vmem:[#allocation2 + $0x2d0] sm:$0xff] %vm2343, %v2305
          %2435 = vst.msk [vmem:[#allocation2 + $0x2d8] sm:$0xff] %vm2343, %v2306
          %2436 = vst.msk [vmem:[#allocation2 + $0x2e0] sm:$0xff] %vm2343, %v2307
          %2437 = vst.msk [vmem:[#allocation2 + $0x2e8] sm:$0xff] %vm2343, %v2308
          %2438 = vst.msk [vmem:[#allocation2 + $0x2f0] sm:$0xff] %vm2343, %v2309
          %2439 = vst.msk [vmem:[#allocation2 + $0x2f8] sm:$0xff] %vm2343, %v2310
          %2440 = vst.msk [vmem:[#allocation2 + $0x300] sm:$0xff] %vm2343, %v2311
          %2441 = vst.msk [vmem:[#allocation2 + $0x308] sm:$0xff] %vm2343, %v2312
          %2442 = vst.msk [vmem:[#allocation2 + $0x310] sm:$0xff] %vm2343, %v2313
          %2443 = vst.msk [vmem:[#allocation2 + $0x318] sm:$0xff] %vm2343, %v2314
          %2444 = vst.msk [vmem:[#allocation2 + $0x320] sm:$0xff] %vm2343, %v2315
          %2445 = vst.msk [vmem:[#allocation2 + $0x328] sm:$0xff] %vm2343, %v2316
          %2446 = vst.msk [vmem:[#allocation2 + $0x330] sm:$0xff] %vm2343, %v2317
          %2447 = vst.msk [vmem:[#allocation2 + $0x338] sm:$0xff] %vm2343, %v2318
          %2448 = vst.msk [vmem:[#allocation2 + $0x340] sm:$0xff] %vm2343, %v2319
          %2449 = vst.msk [vmem:[#allocation2 + $0x348] sm:$0xff] %vm2343, %v2320
          %2450 = vst.msk [vmem:[#allocation2 + $0x350] sm:$0xff] %vm2343, %v2321
          %2451 = vst.msk [vmem:[#allocation2 + $0x358] sm:$0xff] %vm2343, %v2322
          %2452 = vst.msk [vmem:[#allocation2 + $0x360] sm:$0xff] %vm2343, %v2323
          %2453 = vst.msk [vmem:[#allocation2 + $0x368] sm:$0xff] %vm2343, %v2324
          %2454 = vst.msk [vmem:[#allocation2 + $0x370] sm:$0xff] %vm2343, %v2325
          %2455 = vst.msk [vmem:[#allocation2 + $0x378] sm:$0xff] %vm2343, %v2326
          %2456 = vst.msk [vmem:[#allocation2 + $0x380] sm:$0xff] %vm2343, %v2327
          %2457 = vst.msk [vmem:[#allocation2 + $0x388] sm:$0xff] %vm2343, %v2328
          %2458 = vst.msk [vmem:[#allocation2 + $0x390] sm:$0xff] %vm2343, %v2329
          %2459 = vst.msk [vmem:[#allocation2 + $0x398] sm:$0xff] %vm2343, %v2330
          %2460 = vst.msk [vmem:[#allocation2 + $0x3a0] sm:$0xff] %vm2343, %v2331
          %2461 = vst.msk [vmem:[#allocation2 + $0x3a8] sm:$0xff] %vm2343, %v2332
          %2462 = vst.msk [vmem:[#allocation2 + $0x3b0] sm:$0xff] %vm2343, %v2333
          %2463 = vst.msk [vmem:[#allocation2 + $0x3b8] sm:$0xff] %vm2343, %v2334
          %2464 = vst.msk [vmem:[#allocation2 + $0x3c0] sm:$0xff] %vm2343, %v2335
          %2465 = vst.msk [vmem:[#allocation2 + $0x3c8] sm:$0xff] %vm2343, %v2336
          %2466 = vst.msk [vmem:[#allocation2 + $0x3d0] sm:$0xff] %vm2343, %v2337
          %2467 = vst.msk [vmem:[#allocation2 + $0x3d8] sm:$0xff] %vm2343, %v2338
          %2468 = vst.msk [vmem:[#allocation2 + $0x3e0] sm:$0xff] %vm2343, %v2339
          %2469 = vst.msk [vmem:[#allocation2 + $0x3e8] sm:$0xff] %vm2343, %v2340
          %2470 = vst.msk [vmem:[#allocation2 + $0x3f0] sm:$0xff] %vm2343, %v2341
          %2471 = vst.msk [vmem:[#allocation2 + $0x3f8] sm:$0xff] %vm2343, %v2342
        $region60: #{tpu_custom_call.1} parent=43 // pred_fallthru
          _
        %p2472 = scmp.eq.s32.totalorder %s28, 1
        // Predicated region
        $region61: #{tpu_custom_call.1} parent=43 // pred_check
          %p2473 = pneg %p2472
        $region62: #{tpu_custom_call.1} parent=43 // pred_check_branch
          %2475 = sbr.rel (%p2473) target = $region64
        $region63: #{tpu_custom_call.1} parent=43 // pred_region
          %v2476 = vld [vmem:[#allocation2] sm:$0xff]
          %v2477 = vld [vmem:[#allocation2 + $0x8] sm:$0xff]
          %v2478 = vld [vmem:[#allocation2 + $0x10] sm:$0xff]
          %v2479 = vld [vmem:[#allocation2 + $0x18] sm:$0xff]
          %v2480 = vld [vmem:[#allocation2 + $0x20] sm:$0xff]
          %v2481 = vld [vmem:[#allocation2 + $0x28] sm:$0xff]
          %v2482 = vld [vmem:[#allocation2 + $0x30] sm:$0xff]
          %v2483 = vld [vmem:[#allocation2 + $0x38] sm:$0xff]
          %v2484 = vld [vmem:[#allocation2 + $0x40] sm:$0xff]
          %v2485 = vld [vmem:[#allocation2 + $0x48] sm:$0xff]
          %v2486 = vld [vmem:[#allocation2 + $0x50] sm:$0xff]
          %v2487 = vld [vmem:[#allocation2 + $0x58] sm:$0xff]
          %v2488 = vld [vmem:[#allocation2 + $0x60] sm:$0xff]
          %v2489 = vld [vmem:[#allocation2 + $0x68] sm:$0xff]
          %v2490 = vld [vmem:[#allocation2 + $0x70] sm:$0xff]
          %v2491 = vld [vmem:[#allocation2 + $0x78] sm:$0xff]
          %v2492 = vld [vmem:[#allocation2 + $0x80] sm:$0xff]
          %v2493 = vld [vmem:[#allocation2 + $0x88] sm:$0xff]
          %v2494 = vld [vmem:[#allocation2 + $0x90] sm:$0xff]
          %v2495 = vld [vmem:[#allocation2 + $0x98] sm:$0xff]
          %v2496 = vld [vmem:[#allocation2 + $0xa0] sm:$0xff]
          %v2497 = vld [vmem:[#allocation2 + $0xa8] sm:$0xff]
          %v2498 = vld [vmem:[#allocation2 + $0xb0] sm:$0xff]
          %v2499 = vld [vmem:[#allocation2 + $0xb8] sm:$0xff]
          %v2500 = vld [vmem:[#allocation2 + $0xc0] sm:$0xff]
          %v2501 = vld [vmem:[#allocation2 + $0xc8] sm:$0xff]
          %v2502 = vld [vmem:[#allocation2 + $0xd0] sm:$0xff]
          %v2503 = vld [vmem:[#allocation2 + $0xd8] sm:$0xff]
          %v2504 = vld [vmem:[#allocation2 + $0xe0] sm:$0xff]
          %v2505 = vld [vmem:[#allocation2 + $0xe8] sm:$0xff]
          %v2506 = vld [vmem:[#allocation2 + $0xf0] sm:$0xff]
          %v2507 = vld [vmem:[#allocation2 + $0xf8] sm:$0xff]
          %v2508 = vld [vmem:[#allocation2 + $0x100] sm:$0xff]
          %v2509 = vld [vmem:[#allocation2 + $0x108] sm:$0xff]
          %v2510 = vld [vmem:[#allocation2 + $0x110] sm:$0xff]
          %v2511 = vld [vmem:[#allocation2 + $0x118] sm:$0xff]
          %v2512 = vld [vmem:[#allocation2 + $0x120] sm:$0xff]
          %v2513 = vld [vmem:[#allocation2 + $0x128] sm:$0xff]
          %v2514 = vld [vmem:[#allocation2 + $0x130] sm:$0xff]
          %v2515 = vld [vmem:[#allocation2 + $0x138] sm:$0xff]
          %v2516 = vld [vmem:[#allocation2 + $0x140] sm:$0xff]
          %v2517 = vld [vmem:[#allocation2 + $0x148] sm:$0xff]
          %v2518 = vld [vmem:[#allocation2 + $0x150] sm:$0xff]
          %v2519 = vld [vmem:[#allocation2 + $0x158] sm:$0xff]
          %v2520 = vld [vmem:[#allocation2 + $0x160] sm:$0xff]
          %v2521 = vld [vmem:[#allocation2 + $0x168] sm:$0xff]
          %v2522 = vld [vmem:[#allocation2 + $0x170] sm:$0xff]
          %v2523 = vld [vmem:[#allocation2 + $0x178] sm:$0xff]
          %v2524 = vld [vmem:[#allocation2 + $0x180] sm:$0xff]
          %v2525 = vld [vmem:[#allocation2 + $0x188] sm:$0xff]
          %v2526 = vld [vmem:[#allocation2 + $0x190] sm:$0xff]
          %v2527 = vld [vmem:[#allocation2 + $0x198] sm:$0xff]
          %v2528 = vld [vmem:[#allocation2 + $0x1a0] sm:$0xff]
          %v2529 = vld [vmem:[#allocation2 + $0x1a8] sm:$0xff]
          %v2530 = vld [vmem:[#allocation2 + $0x1b0] sm:$0xff]
          %v2531 = vld [vmem:[#allocation2 + $0x1b8] sm:$0xff]
          %v2532 = vld [vmem:[#allocation2 + $0x1c0] sm:$0xff]
          %v2533 = vld [vmem:[#allocation2 + $0x1c8] sm:$0xff]
          %v2534 = vld [vmem:[#allocation2 + $0x1d0] sm:$0xff]
          %v2535 = vld [vmem:[#allocation2 + $0x1d8] sm:$0xff]
          %v2536 = vld [vmem:[#allocation2 + $0x1e0] sm:$0xff]
          %v2537 = vld [vmem:[#allocation2 + $0x1e8] sm:$0xff]
          %v2538 = vld [vmem:[#allocation2 + $0x1f0] sm:$0xff]
          %v2539 = vld [vmem:[#allocation2 + $0x1f8] sm:$0xff]
          %v2540 = vld [vmem:[#allocation2 + $0x200] sm:$0xff]
          %v2541 = vld [vmem:[#allocation2 + $0x208] sm:$0xff]
          %v2542 = vld [vmem:[#allocation2 + $0x210] sm:$0xff]
          %v2543 = vld [vmem:[#allocation2 + $0x218] sm:$0xff]
          %v2544 = vld [vmem:[#allocation2 + $0x220] sm:$0xff]
          %v2545 = vld [vmem:[#allocation2 + $0x228] sm:$0xff]
          %v2546 = vld [vmem:[#allocation2 + $0x230] sm:$0xff]
          %v2547 = vld [vmem:[#allocation2 + $0x238] sm:$0xff]
          %v2548 = vld [vmem:[#allocation2 + $0x240] sm:$0xff]
          %v2549 = vld [vmem:[#allocation2 + $0x248] sm:$0xff]
          %v2550 = vld [vmem:[#allocation2 + $0x250] sm:$0xff]
          %v2551 = vld [vmem:[#allocation2 + $0x258] sm:$0xff]
          %v2552 = vld [vmem:[#allocation2 + $0x260] sm:$0xff]
          %v2553 = vld [vmem:[#allocation2 + $0x268] sm:$0xff]
          %v2554 = vld [vmem:[#allocation2 + $0x270] sm:$0xff]
          %v2555 = vld [vmem:[#allocation2 + $0x278] sm:$0xff]
          %v2556 = vld [vmem:[#allocation2 + $0x280] sm:$0xff]
          %v2557 = vld [vmem:[#allocation2 + $0x288] sm:$0xff]
          %v2558 = vld [vmem:[#allocation2 + $0x290] sm:$0xff]
          %v2559 = vld [vmem:[#allocation2 + $0x298] sm:$0xff]
          %v2560 = vld [vmem:[#allocation2 + $0x2a0] sm:$0xff]
          %v2561 = vld [vmem:[#allocation2 + $0x2a8] sm:$0xff]
          %v2562 = vld [vmem:[#allocation2 + $0x2b0] sm:$0xff]
          %v2563 = vld [vmem:[#allocation2 + $0x2b8] sm:$0xff]
          %v2564 = vld [vmem:[#allocation2 + $0x2c0] sm:$0xff]
          %v2565 = vld [vmem:[#allocation2 + $0x2c8] sm:$0xff]
          %v2566 = vld [vmem:[#allocation2 + $0x2d0] sm:$0xff]
          %v2567 = vld [vmem:[#allocation2 + $0x2d8] sm:$0xff]
          %v2568 = vld [vmem:[#allocation2 + $0x2e0] sm:$0xff]
          %v2569 = vld [vmem:[#allocation2 + $0x2e8] sm:$0xff]
          %v2570 = vld [vmem:[#allocation2 + $0x2f0] sm:$0xff]
          %v2571 = vld [vmem:[#allocation2 + $0x2f8] sm:$0xff]
          %v2572 = vld [vmem:[#allocation2 + $0x300] sm:$0xff]
          %v2573 = vld [vmem:[#allocation2 + $0x308] sm:$0xff]
          %v2574 = vld [vmem:[#allocation2 + $0x310] sm:$0xff]
          %v2575 = vld [vmem:[#allocation2 + $0x318] sm:$0xff]
          %v2576 = vld [vmem:[#allocation2 + $0x320] sm:$0xff]
          %v2577 = vld [vmem:[#allocation2 + $0x328] sm:$0xff]
          %v2578 = vld [vmem:[#allocation2 + $0x330] sm:$0xff]
          %v2579 = vld [vmem:[#allocation2 + $0x338] sm:$0xff]
          %v2580 = vld [vmem:[#allocation2 + $0x340] sm:$0xff]
          %v2581 = vld [vmem:[#allocation2 + $0x348] sm:$0xff]
          %v2582 = vld [vmem:[#allocation2 + $0x350] sm:$0xff]
          %v2583 = vld [vmem:[#allocation2 + $0x358] sm:$0xff]
          %v2584 = vld [vmem:[#allocation2 + $0x360] sm:$0xff]
          %v2585 = vld [vmem:[#allocation2 + $0x368] sm:$0xff]
          %v2586 = vld [vmem:[#allocation2 + $0x370] sm:$0xff]
          %v2587 = vld [vmem:[#allocation2 + $0x378] sm:$0xff]
          %v2588 = vld [vmem:[#allocation2 + $0x380] sm:$0xff]
          %v2589 = vld [vmem:[#allocation2 + $0x388] sm:$0xff]
          %v2590 = vld [vmem:[#allocation2 + $0x390] sm:$0xff]
          %v2591 = vld [vmem:[#allocation2 + $0x398] sm:$0xff]
          %v2592 = vld [vmem:[#allocation2 + $0x3a0] sm:$0xff]
          %v2593 = vld [vmem:[#allocation2 + $0x3a8] sm:$0xff]
          %v2594 = vld [vmem:[#allocation2 + $0x3b0] sm:$0xff]
          %v2595 = vld [vmem:[#allocation2 + $0x3b8] sm:$0xff]
          %v2596 = vld [vmem:[#allocation2 + $0x3c0] sm:$0xff]
          %v2597 = vld [vmem:[#allocation2 + $0x3c8] sm:$0xff]
          %v2598 = vld [vmem:[#allocation2 + $0x3d0] sm:$0xff]
          %v2599 = vld [vmem:[#allocation2 + $0x3d8] sm:$0xff]
          %v2600 = vld [vmem:[#allocation2 + $0x3e0] sm:$0xff]
          %v2601 = vld [vmem:[#allocation2 + $0x3e8] sm:$0xff]
          %v2602 = vld [vmem:[#allocation2 + $0x3f0] sm:$0xff]
          %v2603 = vld [vmem:[#allocation2 + $0x3f8] sm:$0xff]
          %vm2604 = vcmask 7168
          %2605 = vst.msk [vmem:[%s328] sm:$0xff] %vm2604, %v2476
          %2606 = vst.msk [vmem:[%s328 + $0x8] sm:$0xff] %vm2604, %v2477
          %2607 = vst.msk [vmem:[%s328 + $0x10] sm:$0xff] %vm2604, %v2478
          %2608 = vst.msk [vmem:[%s328 + $0x18] sm:$0xff] %vm2604, %v2479
          %2609 = vst.msk [vmem:[%s328 + $0x20] sm:$0xff] %vm2604, %v2480
          %2610 = vst.msk [vmem:[%s328 + $0x28] sm:$0xff] %vm2604, %v2481
          %2611 = vst.msk [vmem:[%s328 + $0x30] sm:$0xff] %vm2604, %v2482
          %2612 = vst.msk [vmem:[%s328 + $0x38] sm:$0xff] %vm2604, %v2483
          %2613 = vst.msk [vmem:[%s328 + $0x40] sm:$0xff] %vm2604, %v2484
          %2614 = vst.msk [vmem:[%s328 + $0x48] sm:$0xff] %vm2604, %v2485
          %2615 = vst.msk [vmem:[%s328 + $0x50] sm:$0xff] %vm2604, %v2486
          %2616 = vst.msk [vmem:[%s328 + $0x58] sm:$0xff] %vm2604, %v2487
          %2617 = vst.msk [vmem:[%s328 + $0x60] sm:$0xff] %vm2604, %v2488
          %2618 = vst.msk [vmem:[%s328 + $0x68] sm:$0xff] %vm2604, %v2489
          %2619 = vst.msk [vmem:[%s328 + $0x70] sm:$0xff] %vm2604, %v2490
          %2620 = vst.msk [vmem:[%s328 + $0x78] sm:$0xff] %vm2604, %v2491
          %2621 = vst.msk [vmem:[%s328 + $0x80] sm:$0xff] %vm2604, %v2492
          %2622 = vst.msk [vmem:[%s328 + $0x88] sm:$0xff] %vm2604, %v2493
          %2623 = vst.msk [vmem:[%s328 + $0x90] sm:$0xff] %vm2604, %v2494
          %2624 = vst.msk [vmem:[%s328 + $0x98] sm:$0xff] %vm2604, %v2495
          %2625 = vst.msk [vmem:[%s328 + $0xa0] sm:$0xff] %vm2604, %v2496
          %2626 = vst.msk [vmem:[%s328 + $0xa8] sm:$0xff] %vm2604, %v2497
          %2627 = vst.msk [vmem:[%s328 + $0xb0] sm:$0xff] %vm2604, %v2498
          %2628 = vst.msk [vmem:[%s328 + $0xb8] sm:$0xff] %vm2604, %v2499
          %2629 = vst.msk [vmem:[%s328 + $0xc0] sm:$0xff] %vm2604, %v2500
          %2630 = vst.msk [vmem:[%s328 + $0xc8] sm:$0xff] %vm2604, %v2501
          %2631 = vst.msk [vmem:[%s328 + $0xd0] sm:$0xff] %vm2604, %v2502
          %2632 = vst.msk [vmem:[%s328 + $0xd8] sm:$0xff] %vm2604, %v2503
          %2633 = vst.msk [vmem:[%s328 + $0xe0] sm:$0xff] %vm2604, %v2504
          %2634 = vst.msk [vmem:[%s328 + $0xe8] sm:$0xff] %vm2604, %v2505
          %2635 = vst.msk [vmem:[%s328 + $0xf0] sm:$0xff] %vm2604, %v2506
          %2636 = vst.msk [vmem:[%s328 + $0xf8] sm:$0xff] %vm2604, %v2507
          %2637 = vst.msk [vmem:[%s328 + $0x100] sm:$0xff] %vm2604, %v2508
          %2638 = vst.msk [vmem:[%s328 + $0x108] sm:$0xff] %vm2604, %v2509
          %2639 = vst.msk [vmem:[%s328 + $0x110] sm:$0xff] %vm2604, %v2510
          %2640 = vst.msk [vmem:[%s328 + $0x118] sm:$0xff] %vm2604, %v2511
          %2641 = vst.msk [vmem:[%s328 + $0x120] sm:$0xff] %vm2604, %v2512
          %2642 = vst.msk [vmem:[%s328 + $0x128] sm:$0xff] %vm2604, %v2513
          %2643 = vst.msk [vmem:[%s328 + $0x130] sm:$0xff] %vm2604, %v2514
          %2644 = vst.msk [vmem:[%s328 + $0x138] sm:$0xff] %vm2604, %v2515
          %2645 = vst.msk [vmem:[%s328 + $0x140] sm:$0xff] %vm2604, %v2516
          %2646 = vst.msk [vmem:[%s328 + $0x148] sm:$0xff] %vm2604, %v2517
          %2647 = vst.msk [vmem:[%s328 + $0x150] sm:$0xff] %vm2604, %v2518
          %2648 = vst.msk [vmem:[%s328 + $0x158] sm:$0xff] %vm2604, %v2519
          %2649 = vst.msk [vmem:[%s328 + $0x160] sm:$0xff] %vm2604, %v2520
          %2650 = vst.msk [vmem:[%s328 + $0x168] sm:$0xff] %vm2604, %v2521
          %2651 = vst.msk [vmem:[%s328 + $0x170] sm:$0xff] %vm2604, %v2522
          %2652 = vst.msk [vmem:[%s328 + $0x178] sm:$0xff] %vm2604, %v2523
          %2653 = vst.msk [vmem:[%s328 + $0x180] sm:$0xff] %vm2604, %v2524
          %2654 = vst.msk [vmem:[%s328 + $0x188] sm:$0xff] %vm2604, %v2525
          %2655 = vst.msk [vmem:[%s328 + $0x190] sm:$0xff] %vm2604, %v2526
          %2656 = vst.msk [vmem:[%s328 + $0x198] sm:$0xff] %vm2604, %v2527
          %2657 = vst.msk [vmem:[%s328 + $0x1a0] sm:$0xff] %vm2604, %v2528
          %2658 = vst.msk [vmem:[%s328 + $0x1a8] sm:$0xff] %vm2604, %v2529
          %2659 = vst.msk [vmem:[%s328 + $0x1b0] sm:$0xff] %vm2604, %v2530
          %2660 = vst.msk [vmem:[%s328 + $0x1b8] sm:$0xff] %vm2604, %v2531
          %2661 = vst.msk [vmem:[%s328 + $0x1c0] sm:$0xff] %vm2604, %v2532
          %2662 = vst.msk [vmem:[%s328 + $0x1c8] sm:$0xff] %vm2604, %v2533
          %2663 = vst.msk [vmem:[%s328 + $0x1d0] sm:$0xff] %vm2604, %v2534
          %2664 = vst.msk [vmem:[%s328 + $0x1d8] sm:$0xff] %vm2604, %v2535
          %2665 = vst.msk [vmem:[%s328 + $0x1e0] sm:$0xff] %vm2604, %v2536
          %2666 = vst.msk [vmem:[%s328 + $0x1e8] sm:$0xff] %vm2604, %v2537
          %2667 = vst.msk [vmem:[%s328 + $0x1f0] sm:$0xff] %vm2604, %v2538
          %2668 = vst.msk [vmem:[%s328 + $0x1f8] sm:$0xff] %vm2604, %v2539
          %2669 = vst.msk [vmem:[%s328 + $0x200] sm:$0xff] %vm2604, %v2540
          %2670 = vst.msk [vmem:[%s328 + $0x208] sm:$0xff] %vm2604, %v2541
          %2671 = vst.msk [vmem:[%s328 + $0x210] sm:$0xff] %vm2604, %v2542
          %2672 = vst.msk [vmem:[%s328 + $0x218] sm:$0xff] %vm2604, %v2543
          %2673 = vst.msk [vmem:[%s328 + $0x220] sm:$0xff] %vm2604, %v2544
          %2674 = vst.msk [vmem:[%s328 + $0x228] sm:$0xff] %vm2604, %v2545
          %2675 = vst.msk [vmem:[%s328 + $0x230] sm:$0xff] %vm2604, %v2546
          %2676 = vst.msk [vmem:[%s328 + $0x238] sm:$0xff] %vm2604, %v2547
          %2677 = vst.msk [vmem:[%s328 + $0x240] sm:$0xff] %vm2604, %v2548
          %2678 = vst.msk [vmem:[%s328 + $0x248] sm:$0xff] %vm2604, %v2549
          %2679 = vst.msk [vmem:[%s328 + $0x250] sm:$0xff] %vm2604, %v2550
          %2680 = vst.msk [vmem:[%s328 + $0x258] sm:$0xff] %vm2604, %v2551
          %2681 = vst.msk [vmem:[%s328 + $0x260] sm:$0xff] %vm2604, %v2552
          %2682 = vst.msk [vmem:[%s328 + $0x268] sm:$0xff] %vm2604, %v2553
          %2683 = vst.msk [vmem:[%s328 + $0x270] sm:$0xff] %vm2604, %v2554
          %2684 = vst.msk [vmem:[%s328 + $0x278] sm:$0xff] %vm2604, %v2555
          %2685 = vst.msk [vmem:[%s328 + $0x280] sm:$0xff] %vm2604, %v2556
          %2686 = vst.msk [vmem:[%s328 + $0x288] sm:$0xff] %vm2604, %v2557
          %2687 = vst.msk [vmem:[%s328 + $0x290] sm:$0xff] %vm2604, %v2558
          %2688 = vst.msk [vmem:[%s328 + $0x298] sm:$0xff] %vm2604, %v2559
          %2689 = vst.msk [vmem:[%s328 + $0x2a0] sm:$0xff] %vm2604, %v2560
          %2690 = vst.msk [vmem:[%s328 + $0x2a8] sm:$0xff] %vm2604, %v2561
          %2691 = vst.msk [vmem:[%s328 + $0x2b0] sm:$0xff] %vm2604, %v2562
          %2692 = vst.msk [vmem:[%s328 + $0x2b8] sm:$0xff] %vm2604, %v2563
          %2693 = vst.msk [vmem:[%s328 + $0x2c0] sm:$0xff] %vm2604, %v2564
          %2694 = vst.msk [vmem:[%s328 + $0x2c8] sm:$0xff] %vm2604, %v2565
          %2695 = vst.msk [vmem:[%s328 + $0x2d0] sm:$0xff] %vm2604, %v2566
          %2696 = vst.msk [vmem:[%s328 + $0x2d8] sm:$0xff] %vm2604, %v2567
          %2697 = vst.msk [vmem:[%s328 + $0x2e0] sm:$0xff] %vm2604, %v2568
          %2698 = vst.msk [vmem:[%s328 + $0x2e8] sm:$0xff] %vm2604, %v2569
          %2699 = vst.msk [vmem:[%s328 + $0x2f0] sm:$0xff] %vm2604, %v2570
          %2700 = vst.msk [vmem:[%s328 + $0x2f8] sm:$0xff] %vm2604, %v2571
          %2701 = vst.msk [vmem:[%s328 + $0x300] sm:$0xff] %vm2604, %v2572
          %2702 = vst.msk [vmem:[%s328 + $0x308] sm:$0xff] %vm2604, %v2573
          %2703 = vst.msk [vmem:[%s328 + $0x310] sm:$0xff] %vm2604, %v2574
          %2704 = vst.msk [vmem:[%s328 + $0x318] sm:$0xff] %vm2604, %v2575
          %2705 = vst.msk [vmem:[%s328 + $0x320] sm:$0xff] %vm2604, %v2576
          %2706 = vst.msk [vmem:[%s328 + $0x328] sm:$0xff] %vm2604, %v2577
          %2707 = vst.msk [vmem:[%s328 + $0x330] sm:$0xff] %vm2604, %v2578
          %2708 = vst.msk [vmem:[%s328 + $0x338] sm:$0xff] %vm2604, %v2579
          %2709 = vst.msk [vmem:[%s328 + $0x340] sm:$0xff] %vm2604, %v2580
          %2710 = vst.msk [vmem:[%s328 + $0x348] sm:$0xff] %vm2604, %v2581
          %2711 = vst.msk [vmem:[%s328 + $0x350] sm:$0xff] %vm2604, %v2582
          %2712 = vst.msk [vmem:[%s328 + $0x358] sm:$0xff] %vm2604, %v2583
          %2713 = vst.msk [vmem:[%s328 + $0x360] sm:$0xff] %vm2604, %v2584
          %2714 = vst.msk [vmem:[%s328 + $0x368] sm:$0xff] %vm2604, %v2585
          %2715 = vst.msk [vmem:[%s328 + $0x370] sm:$0xff] %vm2604, %v2586
          %2716 = vst.msk [vmem:[%s328 + $0x378] sm:$0xff] %vm2604, %v2587
          %2717 = vst.msk [vmem:[%s328 + $0x380] sm:$0xff] %vm2604, %v2588
          %2718 = vst.msk [vmem:[%s328 + $0x388] sm:$0xff] %vm2604, %v2589
          %2719 = vst.msk [vmem:[%s328 + $0x390] sm:$0xff] %vm2604, %v2590
          %2720 = vst.msk [vmem:[%s328 + $0x398] sm:$0xff] %vm2604, %v2591
          %2721 = vst.msk [vmem:[%s328 + $0x3a0] sm:$0xff] %vm2604, %v2592
          %2722 = vst.msk [vmem:[%s328 + $0x3a8] sm:$0xff] %vm2604, %v2593
          %2723 = vst.msk [vmem:[%s328 + $0x3b0] sm:$0xff] %vm2604, %v2594
          %2724 = vst.msk [vmem:[%s328 + $0x3b8] sm:$0xff] %vm2604, %v2595
          %2725 = vst.msk [vmem:[%s328 + $0x3c0] sm:$0xff] %vm2604, %v2596
          %2726 = vst.msk [vmem:[%s328 + $0x3c8] sm:$0xff] %vm2604, %v2597
          %2727 = vst.msk [vmem:[%s328 + $0x3d0] sm:$0xff] %vm2604, %v2598
          %2728 = vst.msk [vmem:[%s328 + $0x3d8] sm:$0xff] %vm2604, %v2599
          %2729 = vst.msk [vmem:[%s328 + $0x3e0] sm:$0xff] %vm2604, %v2600
          %2730 = vst.msk [vmem:[%s328 + $0x3e8] sm:$0xff] %vm2604, %v2601
          %2731 = vst.msk [vmem:[%s328 + $0x3f0] sm:$0xff] %vm2604, %v2602
          %2732 = vst.msk [vmem:[%s328 + $0x3f8] sm:$0xff] %vm2604, %v2603
        $region64: #{tpu_custom_call.1} parent=43 // pred_fallthru
          _
        %p2733 = scmp.lt.s32.totalorder %s26, 1
        %s2734 = scalar_select %p2733, %s26, 1
        %p2735 = scmp.lt.s32.totalorder %s27, 1
        %s2736 = scalar_select %p2735, %s27, 1
        %s2737 = smul.addr %s2736, 128
        %s2738 = smul.addr %s2734, 256
        %s2739 = sadd.s32 %s2737, %s2738
        %s2740 = smul.addr %s2739, 8
        %s2741 = scalar_lea.vmem %s6, %s2740
        // Predicated region
        $region65: #{tpu_custom_call.1} parent=43 // pred_check
          %p2742 = pneg %p197
        $region66: #{tpu_custom_call.1} parent=43 // pred_check_branch
          %2744 = sbr.rel (%p2742) target = $region68
        $region67: #{tpu_custom_call.1} parent=43 // pred_region
          _
        $region68: #{tpu_custom_call.1} parent=43 // pred_fallthru
          _
      $region44: #{tpu_custom_call.1} parent=5 // pred_fallthru
        _
      %p2745 = scmp.le.s32.totalorder 2, %s16
      // Predicated region
      $region69: #{tpu_custom_call.1} parent=5 // pred_check
        %p2746 = pneg %p2745
      $region70: #{tpu_custom_call.1} parent=5 // pred_check_branch
        %2748 = sbr.rel (%p2746) target = $region72
      $region71: #{tpu_custom_call.1} parent=5 // pred_region
        %s2749 = ssub.s32 %s16, 2
        // Predicated region
        $region73: #{tpu_custom_call.1} parent=71 // pred_check
          %p2750 = pneg %p203
        $region74: #{tpu_custom_call.1} parent=71 // pred_check_branch
          %2752 = sbr.rel (%p2750) target = $region76
        $region75: #{tpu_custom_call.1} parent=71 // pred_region
          %p2753 = scmp.lt.s32.totalorder %s29, 1
          %s2754 = scalar_select %p2753, %s29, 1
          %p2755 = scmp.lt.s32.totalorder %s30, 1
          %s2756 = scalar_select %p2755, %s30, 1
          %s2757 = smul.addr %s2756, 128
          %s2758 = smul.addr %s2754, 256
          %s2759 = sadd.s32 %s2757, %s2758
          %s2760 = smul.addr %s2759, 8
          %s2761 = scalar_lea.vmem %s6, %s2760
        $region76: #{tpu_custom_call.1} parent=71 // pred_fallthru
          _
      $region72: #{tpu_custom_call.1} parent=5 // pred_fallthru
        _
    $region6: #{tpu_custom_call.1} parent=1 // loop_footer
      %s20 = sadd.s32 1, %s16
    $region7: #{tpu_custom_call.1} parent=1 // loop_footer_branch
      %15 = sbr.rel target = $region3
    $region8: #{tpu_custom_call.1} parent=1 // loop_exit
      _
    %2762 = vsyncpa [#allocation4], 1
    %s2763 = scalar_lea.sflag [#allocation4], 1
    %2764 = vsyncpa %s2763, 1
    %2765 = vsyncpa [#allocation6], 1

</llo_original>
